<compile_context>
chip_gen: v7x
topology: tpu7x:2x2x1
jax: 0.10.0
libtpu: 0.0.40
codegen_flags: <defaults>
</compile_context>

<pallas_src>
import math
import functools

import jax
import jax.numpy as jnp
from jax import lax
from jax.experimental import pallas as pl
from jax.experimental.pallas import tpu as pltpu


# ----------------------------- config ---------------------------------------

class Config:
    vocab_size = 64
    context_len = 16
    embd_dim = 32
    num_heads = 4
    num_layers = 2
    bias = True


_BF16 = jnp.bfloat16


# --------------------------- math helpers ------------------------------------

def _layernorm(x, w, b, eps=1e-5):
    # F.layer_norm semantics: biased variance, eps inside sqrt. All f32.
    mu = jnp.mean(x, axis=-1, keepdims=True)
    var = jnp.mean(jnp.square(x - mu), axis=-1, keepdims=True)
    return (x - mu) * lax.rsqrt(var + eps) * w + b


def _gelu_exact(x):
    # torch.nn.GELU() default = exact erf formulation.
    return 0.5 * x * (1.0 + lax.erf(x * (1.0 / math.sqrt(2.0))))


# ------------------------ fused full-model kernel -----------------------------

def _gpt_fused_kernel(num_layers, num_heads,
                      x_ref,                                   # (B, T, C)  f32
                      ln1w_ref, ln1b_ref,                      # (L, 1, C)  f32
                      wqkv_ref, bqkv_ref,                      # (L, C, 3C) bf16 / (L,1,3C) f32
                      wo_ref, bo_ref,                          # (L, C, C)  bf16 / (L,1,C)  f32
                      ln2w_ref, ln2b_ref,                      # (L, 1, C)  f32
                      wup_ref, bup_ref,                        # (L, C, 4C) bf16 / (L,1,4C) f32
                      wpr_ref, bpr_ref,                        # (L, 4C, C) bf16 / (L,1,C)  f32
                      lnfw_ref, lnfb_ref,                      # (1, C)     f32
                      wlm_ref,                                 # (C, Vp)    bf16 (tied, padded)
                      out_ref):                                # (B, Vp)    f32
    x = x_ref[...]                                  # (B, T, C) float32
    B, T, C = x.shape
    H = num_heads
    D = C // H

    # Causal mask: built once per kernel invocation, shared by all layers/heads.
    row = lax.broadcasted_iota(jnp.int32, (T, T), 0)
    col = lax.broadcasted_iota(jnp.int32, (T, T), 1)
    causal = (col <= row)[None, :, :]               # (1, T, T) -> bcast over B*H

    for l in range(num_layers):                     # static unroll (L is small)
        # ---------------- attention branch ----------------
        h = _layernorm(x, ln1w_ref[l], ln1b_ref[l])             # (B, T, C) f32
        h2d = h.reshape(B * T, C)
        # fused QKV; attention scale pre-folded into Q columns of wqkv/bqkv
        qkv = jnp.dot(h2d.astype(_BF16), wqkv_ref[l],
                      preferred_element_type=jnp.float32) + bqkv_ref[l]  # (B*T, 3C)

        q = qkv[:, 0 * C:1 * C].reshape(B, T, H, D)
        k = qkv[:, 1 * C:2 * C].reshape(B, T, H, D)
        v = qkv[:, 2 * C:3 * C].reshape(B, T, H, D)
        # (B, T, H, D) -> (B*H, T, D): one leading-batch axis for the MXU.
        qh = q.transpose(0, 2, 1, 3).reshape(B * H, T, D)
        kh = k.transpose(0, 2, 1, 3).reshape(B * H, T, D)
        vh = v.transpose(0, 2, 1, 3).reshape(B * H, T, D)

        s = jnp.einsum("ntd,nsd->nts",
                       qh.astype(_BF16), kh.astype(_BF16),
                       preferred_element_type=jnp.float32)       # (B*H, T, T)
        s = jnp.where(causal, s, -jnp.inf)
        s = s - jnp.max(s, axis=-1, keepdims=True)
        p = jnp.exp(s)
        p = p * pl.reciprocal(jnp.sum(p, axis=-1, keepdims=True), approx=True)

        yh = jnp.einsum("nts,nsd->ntd",
                        p.astype(_BF16), vh.astype(_BF16),
                        preferred_element_type=jnp.float32)      # (B*H, T, D)
        y = yh.reshape(B, H, T, D).transpose(0, 2, 1, 3).reshape(B * T, C)

        attn_out = jnp.dot(y.astype(_BF16), wo_ref[l],
                           preferred_element_type=jnp.float32) + bo_ref[l]
        x = x + attn_out.reshape(B, T, C)

        # ---------------- MLP branch ----------------
        h2 = _layernorm(x, ln2w_ref[l], ln2b_ref[l]).reshape(B * T, C)
        up = jnp.dot(h2.astype(_BF16), wup_ref[l],
                     preferred_element_type=jnp.float32) + bup_ref[l]
        up = _gelu_exact(up)
        mlp_out = jnp.dot(up.astype(_BF16), wpr_ref[l],
                          preferred_element_type=jnp.float32) + bpr_ref[l]
        x = x + mlp_out.reshape(B, T, C)

    # ------------- final LayerNorm + tied lm_head (last token only) -----------
    x_last = x[:, T - 1, :]                                      # (B, C)
    hf = _layernorm(x_last, lnfw_ref[...], lnfb_ref[...])
    # lane-major padded (C, Vp) weight -> single lane-dense (B, Vp) store
    logits = jnp.dot(hf.astype(_BF16), wlm_ref[...],
                     preferred_element_type=jnp.float32)         # (B, Vp)
    out_ref[...] = logits


def gpt_fused_call(x, kp, cfg):
    B, T, C = x.shape
    Vp = kp["w_lm"].shape[1]
    weight_args = (
        kp["ln1_w"], kp["ln1_b"],
        kp["wqkv"], kp["bqkv"],
        kp["wo"], kp["bo"],
        kp["ln2_w"], kp["ln2_b"],
        kp["wup"], kp["bup"],
        kp["wpr"], kp["bpr"],
        kp["lnf_w"], kp["lnf_b"],
        kp["w_lm"],
    )
    n_in = 1 + len(weight_args)
    kernel = functools.partial(_gpt_fused_kernel, cfg.num_layers, cfg.num_heads)
    logits_pad = pl.pallas_call(
        kernel,
        out_shape=jax.ShapeDtypeStruct((B, Vp), jnp.float32),
        # grid=() : one kernel step does the whole batch; everything VMEM-resident.
        in_specs=[pl.BlockSpec(memory_space=pltpu.MemorySpace.VMEM)
                  for _ in range(n_in)],
        out_specs=pl.BlockSpec(memory_space=pltpu.MemorySpace.VMEM),
    )(x, *weight_args)
    # slice off padded vocab columns, restore (B, 1, V) like PyTorch inference path
    return logits_pad[:, :cfg.vocab_size][:, None, :]


# ----------------------------- parameters ------------------------------------

def init_params(key, cfg):
    std = 0.02
    proj_std = 0.02 / math.sqrt(2 * cfg.num_layers)
    C, V, Lctx, L = cfg.embd_dim, cfg.vocab_size, cfg.context_len, cfg.num_layers
    ks = jax.random.split(key, 6)

    def nrm(k, shape, s):
        return (s * jax.random.normal(k, shape)).astype(jnp.float32)

    return {
        "wte": nrm(ks[0], (V, C), std),            # tied with lm_head
        "wpe": nrm(ks[1], (Lctx, C), std),
        "ln_f_w": jnp.ones((1, C), jnp.float32),
        "ln_f_b": jnp.zeros((1, C), jnp.float32),
        # per-layer weights stacked along leading L axis
        "ln1_w": jnp.ones((L, 1, C), jnp.float32),
        "ln1_b": jnp.zeros((L, 1, C), jnp.float32),
        "wqkv":  nrm(ks[2], (L, C, 3 * C), std),        # fused Q|K|V
        "bqkv":  jnp.zeros((L, 1, 3 * C), jnp.float32),
        "wo":    nrm(ks[3], (L, C, C), proj_std),       # output_proj (scaled init)
        "bo":    jnp.zeros((L, 1, C), jnp.float32),
        "ln2_w": jnp.ones((L, 1, C), jnp.float32),
        "ln2_b": jnp.zeros((L, 1, C), jnp.float32),
        "wup":   nrm(ks[4], (L, C, 4 * C), std),
        "bup":   jnp.zeros((L, 1, 4 * C), jnp.float32),
        "wpr":   nrm(ks[5], (L, 4 * C, C), proj_std),   # mlp_proj (scaled init)
        "bpr":   jnp.zeros((L, 1, C), jnp.float32),
    }


def prepare_kernel_params(params, cfg):
    """One-time host-side weight prep: bf16 matmul weights, attention scale
    folded into Q columns, tied lm_head transposed + padded to 128 lanes."""
    C, V, H = cfg.embd_dim, cfg.vocab_size, cfg.num_heads
    D = C // H
    Vp = max(128, ((V + 127) // 128) * 128)
    scale = 1.0 / math.sqrt(D)

    qcol = jnp.concatenate(
        [jnp.full((C,), scale, jnp.float32), jnp.ones((2 * C,), jnp.float32)])
    wqkv = (params["wqkv"] * qcol[None, None, :]).astype(_BF16)
    bqkv = params["bqkv"] * qcol[None, None, :]          # bias stays f32

    w_pad = jnp.zeros((Vp, C), jnp.float32).at[:V, :].set(params["wte"])
    w_lm = jnp.transpose(w_pad).astype(_BF16)            # (C, Vp), lane-major

    return {
        "ln1_w": params["ln1_w"], "ln1_b": params["ln1_b"],
        "wqkv": wqkv, "bqkv": bqkv,
        "wo": params["wo"].astype(_BF16), "bo": params["bo"],
        "ln2_w": params["ln2_w"], "ln2_b": params["ln2_b"],
        "wup": params["wup"].astype(_BF16), "bup": params["bup"],
        "wpr": params["wpr"].astype(_BF16), "bpr": params["bpr"],
        "lnf_w": params["ln_f_w"], "lnf_b": params["ln_f_b"],
        "w_lm": w_lm,
    }


# ------------------------------- forward -------------------------------------

def gpt_forward(idx, params, kparams, cfg):
    B, T = idx.shape
    assert T <= cfg.context_len
    # embedding gathers are glue (plain JAX)
    tok_emb = jnp.take(params["wte"], idx, axis=0)              # (B, T, C)
    pos_emb = params["wpe"][:T]                                 # (T, C)
    x = (tok_emb + pos_emb[None, :, :]).astype(jnp.float32)
    logits = gpt_fused_call(x, kparams, cfg)                    # (B, 1, V)
    return logits, None                                         # inference path


# ------------------------- pure-JAX references --------------------------------

def _ref_forward_matched(idx, params, kp, cfg):
    """Reference that uses exactly the prepared (bf16, pre-scaled, padded)
    kernel weights — mirrors kernel math (exact softmax division)."""
    B, T = idx.shape
    C, H, L = cfg.embd_dim, cfg.num_heads, cfg.num_layers
    D = C // H

    def mm(a, b):
        return jnp.matmul(a.astype(_BF16), b, preferred_element_type=jnp.float32)

    x = (jnp.take(params["wte"], idx, axis=0)
         + params["wpe"][:T][None]).astype(jnp.float32)
    mask = jnp.tril(jnp.ones((T, T), bool))

    for l in range(L):
        h = _layernorm(x, kp["ln1_w"][l], kp["ln1_b"][l])
        qkv = mm(h, kp["wqkv"][l]) + kp["bqkv"][l]              # (B, T, 3C)
        q = qkv[..., :C].reshape(B, T, H, D).transpose(0, 2, 1, 3)
        k = qkv[..., C:2 * C].reshape(B, T, H, D).transpose(0, 2, 1, 3)
        v = qkv[..., 2 * C:].reshape(B, T, H, D).transpose(0, 2, 1, 3)
        s = jnp.einsum("bhtd,bhsd->bhts", q.astype(_BF16), k.astype(_BF16),
                       preferred_element_type=jnp.float32)      # scale pre-folded
        s = jnp.where(mask, s, -jnp.inf)
        p = jax.nn.softmax(s, axis=-1)
        y = jnp.einsum("bhts,bhsd->bhtd", p.astype(_BF16), v.astype(_BF16),
                       preferred_element_type=jnp.float32)
        y = y.transpose(0, 2, 1, 3).reshape(B, T, C)
        x = x + (mm(y, kp["wo"][l]) + kp["bo"][l])
        h2 = _layernorm(x, kp["ln2_w"][l], kp["ln2_b"][l])
        up = _gelu_exact(mm(h2, kp["wup"][l]) + kp["bup"][l])
        x = x + (mm(up, kp["wpr"][l]) + kp["bpr"][l])

    xf = _layernorm(x[:, -1, :], kp["lnf_w"], kp["lnf_b"])
    logits = jnp.matmul(xf.astype(_BF16), kp["w_lm"],
                        preferred_element_type=jnp.float32)
    return logits[:, :cfg.vocab_size][:, None, :]


def _ref_forward_f32(idx, params, cfg):
    """Full-f32 reference following the PyTorch module semantics exactly."""
    B, T = idx.shape
    C, H, L = cfg.embd_dim, cfg.num_heads, cfg.num_layers
    D = C // H
    scale = 1.0 / math.sqrt(D)

    x = (jnp.take(params["wte"], idx, axis=0)
         + params["wpe"][:T][None]).astype(jnp.float32)
    mask = jnp.tril(jnp.ones((T, T), bool))

    for l in range(L):
        h = _layernorm(x, params["ln1_w"][l], params["ln1_b"][l])
        qkv = jnp.matmul(h, params["wqkv"][l]) + params["bqkv"][l]
        q, k, v = qkv[..., :C], qkv[..., C:2 * C], qkv[..., 2 * C:]
        q = q.reshape(B, T, H, D).transpose(0, 2, 1, 3)
        k = k.reshape(B, T, H, D).transpose(0, 2, 1, 3)
        v = v.reshape(B, T, H, D).transpose(0, 2, 1, 3)
        s = jnp.einsum("bhtd,bhsd->bhts", q, k) * scale
        s = jnp.where(mask, s, -jnp.inf)
        p = jax.nn.softmax(s, axis=-1)
        y = jnp.einsum("bhts,bhsd->bhtd", p, v)
        y = y.transpose(0, 2, 1, 3).reshape(B, T, C)
        x = x + (jnp.matmul(y, params["wo"][l]) + params["bo"][l])
        h2 = _layernorm(x, params["ln2_w"][l], params["ln2_b"][l])
        up = _gelu_exact(jnp.matmul(h2, params["wup"][l]) + params["bup"][l])
        x = x + (jnp.matmul(up, params["wpr"][l]) + params["bpr"][l])

    xf = _layernorm(x[:, -1, :], params["ln_f_w"], params["ln_f_b"])
    logits = jnp.einsum("bc,vc->bv", xf, params["wte"])
    return logits[:, None, :]


# --------------------------------- main ---------------------------------------

if __name__ == "__main__":
    cfg = Config()
    B, T = 2, 8

    root = jax.random.PRNGKey(0)
    k_params, k_idx = jax.random.split(root)
    params = init_params(k_params, cfg)
    kparams = prepare_kernel_params(params, cfg)
    idx = jax.random.randint(k_idx, (B, T), 0, cfg.vocab_size, dtype=jnp.int32)

    logits, loss = gpt_forward(idx, params, kparams, cfg)
    logits = jax.block_until_ready(logits)
    assert logits.shape == (B, 1, cfg.vocab_size)
    assert loss is None

    # strict check vs a reference using the same prepared bf16 weights
    ref_m = jax.block_until_ready(_ref_forward_matched(idx, params, kparams, cfg))
    assert jnp.allclose(logits, ref_m, atol=5e-3, rtol=5e-3), \
        "mismatch vs bf16-matched reference"

    # sanity check vs the full-f32 reference (loose tolerance for bf16 MXU ops)
    ref_f32 = jax.block_until_ready(_ref_forward_f32(idx, params, cfg))
    assert jnp.allclose(logits, ref_f32, atol=3e-2, rtol=3e-2), \
        "mismatch vs f32 reference"

    print("KERNEL_OK")
</pallas_src>

<mosaic_0001>
module attributes {stable_mosaic.version = 11 : i64} {
  func.func @_gpt_fused_kernel(%arg0: memref<2x8x32xf32, #tpu.memory_space<vmem>>, %arg1: memref<2x1x32xf32, #tpu.memory_space<vmem>>, %arg2: memref<2x1x32xf32, #tpu.memory_space<vmem>>, %arg3: memref<2x32x96xbf16, #tpu.memory_space<vmem>>, %arg4: memref<2x1x96xf32, #tpu.memory_space<vmem>>, %arg5: memref<2x32x32xbf16, #tpu.memory_space<vmem>>, %arg6: memref<2x1x32xf32, #tpu.memory_space<vmem>>, %arg7: memref<2x1x32xf32, #tpu.memory_space<vmem>>, %arg8: memref<2x1x32xf32, #tpu.memory_space<vmem>>, %arg9: memref<2x32x128xbf16, #tpu.memory_space<vmem>>, %arg10: memref<2x1x128xf32, #tpu.memory_space<vmem>>, %arg11: memref<2x128x32xbf16, #tpu.memory_space<vmem>>, %arg12: memref<2x1x32xf32, #tpu.memory_space<vmem>>, %arg13: memref<1x32xf32, #tpu.memory_space<vmem>>, %arg14: memref<1x32xf32, #tpu.memory_space<vmem>>, %arg15: memref<32x128xbf16, #tpu.memory_space<vmem>>, %arg16: memref<2x128xf32, #tpu.memory_space<vmem>>) attributes {dimension_semantics = [], scalar_prefetch = 0 : i64, scratch_operands = 0 : i64, tpu.core_type = #tpu.core_type<tc>} {
    %c0 = arith.constant 0 : index
    %c0_0 = arith.constant 0 : index
    %c0_1 = arith.constant 0 : index
    %0 = vector.load %arg0[%c0, %c0_0, %c0_1] : memref<2x8x32xf32, #tpu.memory_space<vmem>>, vector<2x8x32xf32>
    %1 = tpu.iota {dimensions = array<i32: 0>} : vector<8x8xi32>
    %2 = tpu.iota {dimensions = array<i32: 1>} : vector<8x8xi32>
    %3 = arith.cmpi sle, %2, %1 : vector<8x8xi32>
    %4 = vector.shape_cast %3 : vector<8x8xi1> to vector<1x8x8xi1>
    %c0_2 = arith.constant 0 : index
    %c0_3 = arith.constant 0 : index
    %c0_4 = arith.constant 0 : index
    %5 = vector.load %arg1[%c0_2, %c0_3, %c0_4] : memref<2x1x32xf32, #tpu.memory_space<vmem>>, vector<1x1x32xf32>
    %6 = vector.shape_cast %5 : vector<1x1x32xf32> to vector<1x32xf32>
    %c0_5 = arith.constant 0 : index
    %c0_6 = arith.constant 0 : index
    %c0_7 = arith.constant 0 : index
    %7 = vector.load %arg2[%c0_5, %c0_6, %c0_7] : memref<2x1x32xf32, #tpu.memory_space<vmem>>, vector<1x1x32xf32>
    %8 = vector.shape_cast %7 : vector<1x1x32xf32> to vector<1x32xf32>
    %cst = arith.constant dense<0.000000e+00> : vector<2x8xf32>
    %9 = vector.multi_reduction <add>, %0, %cst [2] : vector<2x8x32xf32> to vector<2x8xf32>
    %10 = vector.shape_cast %9 : vector<2x8xf32> to vector<2x8x1xf32>
    %cst_8 = arith.constant 3.200000e+01 : f32
    %11 = vector.broadcast %cst_8 : f32 to vector<2x8x1xf32>
    %12 = arith.divf %10, %11 : vector<2x8x1xf32>
    %13 = vector.broadcast %12 : vector<2x8x1xf32> to vector<2x8x32xf32>
    %14 = arith.subf %0, %13 : vector<2x8x32xf32>
    %15 = arith.mulf %14, %14 : vector<2x8x32xf32>
    %cst_9 = arith.constant dense<0.000000e+00> : vector<2x8xf32>
    %16 = vector.multi_reduction <add>, %15, %cst_9 [2] : vector<2x8x32xf32> to vector<2x8xf32>
    %17 = vector.shape_cast %16 : vector<2x8xf32> to vector<2x8x1xf32>
    %cst_10 = arith.constant 3.200000e+01 : f32
    %18 = vector.broadcast %cst_10 : f32 to vector<2x8x1xf32>
    %19 = arith.divf %17, %18 : vector<2x8x1xf32>
    %20 = vector.broadcast %12 : vector<2x8x1xf32> to vector<2x8x32xf32>
    %21 = arith.subf %0, %20 : vector<2x8x32xf32>
    %cst_11 = arith.constant 9.99999974E-6 : f32
    %22 = vector.broadcast %cst_11 : f32 to vector<2x8x1xf32>
    %23 = arith.addf %19, %22 : vector<2x8x1xf32>
    %24 = math.rsqrt %23 : vector<2x8x1xf32>
    %25 = vector.broadcast %24 : vector<2x8x1xf32> to vector<2x8x32xf32>
    %26 = arith.mulf %21, %25 : vector<2x8x32xf32>
    %27 = vector.shape_cast %6 : vector<1x32xf32> to vector<1x1x32xf32>
    %28 = vector.broadcast %27 : vector<1x1x32xf32> to vector<2x8x32xf32>
    %29 = arith.mulf %26, %28 : vector<2x8x32xf32>
    %30 = vector.shape_cast %8 : vector<1x32xf32> to vector<1x1x32xf32>
    %31 = vector.broadcast %30 : vector<1x1x32xf32> to vector<2x8x32xf32>
    %32 = arith.addf %29, %31 : vector<2x8x32xf32>
    %33 = vector.shape_cast %32 : vector<2x8x32xf32> to vector<16x32xf32>
    %34 = arith.truncf %33 : vector<16x32xf32> to vector<16x32xbf16>
    %c0_12 = arith.constant 0 : index
    %c0_13 = arith.constant 0 : index
    %c0_14 = arith.constant 0 : index
    %35 = vector.load %arg3[%c0_12, %c0_13, %c0_14] : memref<2x32x96xbf16, #tpu.memory_space<vmem>>, vector<1x32x96xbf16>
    %36 = vector.shape_cast %35 : vector<1x32x96xbf16> to vector<32x96xbf16>
    %cst_15 = arith.constant dense<0.000000e+00> : vector<16x96xf32>
    %37 = tpu.matmul %34, %36, %cst_15 {dimension_numbers = #tpu.dot_dimension_numbers<[1], [0], [0], [1], [0, 0, 1, 1], [], []>} : vector<16x32xbf16>, vector<32x96xbf16>, vector<16x96xf32> -> vector<16x96xf32>
    %c0_16 = arith.constant 0 : index
    %c0_17 = arith.constant 0 : index
    %c0_18 = arith.constant 0 : index
    %38 = vector.load %arg4[%c0_16, %c0_17, %c0_18] : memref<2x1x96xf32, #tpu.memory_space<vmem>>, vector<1x1x96xf32>
    %39 = vector.shape_cast %38 : vector<1x1x96xf32> to vector<1x96xf32>
    %40 = vector.broadcast %39 : vector<1x96xf32> to vector<16x96xf32>
    %41 = arith.addf %37, %40 : vector<16x96xf32>
    %42 = vector.extract_strided_slice %41 {offsets = [0, 0], sizes = [16, 32], strides = [1, 1]} : vector<16x96xf32> to vector<16x32xf32>
    %43 = vector.shape_cast %42 : vector<16x32xf32> to vector<2x8x4x8xf32>
    %44 = vector.extract_strided_slice %41 {offsets = [0, 32], sizes = [16, 32], strides = [1, 1]} : vector<16x96xf32> to vector<16x32xf32>
    %45 = vector.shape_cast %44 : vector<16x32xf32> to vector<2x8x4x8xf32>
    %46 = vector.extract_strided_slice %41 {offsets = [0, 64], sizes = [16, 32], strides = [1, 1]} : vector<16x96xf32> to vector<16x32xf32>
    %47 = vector.shape_cast %46 : vector<16x32xf32> to vector<2x8x4x8xf32>
    %48 = tpu.transpose %43, [0, 2, 1, 3] : vector<2x8x4x8xf32> -> vector<2x4x8x8xf32>
    %49 = vector.shape_cast %48 : vector<2x4x8x8xf32> to vector<8x8x8xf32>
    %50 = tpu.transpose %45, [0, 2, 1, 3] : vector<2x8x4x8xf32> -> vector<2x4x8x8xf32>
    %51 = vector.shape_cast %50 : vector<2x4x8x8xf32> to vector<8x8x8xf32>
    %52 = tpu.transpose %47, [0, 2, 1, 3] : vector<2x8x4x8xf32> -> vector<2x4x8x8xf32>
    %53 = vector.shape_cast %52 : vector<2x4x8x8xf32> to vector<8x8x8xf32>
    %54 = arith.truncf %49 : vector<8x8x8xf32> to vector<8x8x8xbf16>
    %55 = arith.truncf %51 : vector<8x8x8xf32> to vector<8x8x8xbf16>
    "tpu.trace_start"() <{level = 10 : i32, message = "ntd,nsd->nts"}> : () -> ()
    %cst_19 = arith.constant dense<0.000000e+00> : vector<8x8x8xf32>
    %56 = tpu.matmul %54, %55, %cst_19 {dimension_numbers = #tpu.dot_dimension_numbers<[2], [2], [1], [1], [0, 0, 0, 1, 1, 1], [0], [0]>} : vector<8x8x8xbf16>, vector<8x8x8xbf16>, vector<8x8x8xf32> -> vector<8x8x8xf32>
    %cst_20 = arith.constant 0xFF800000 : f32
    "tpu.trace_stop"() : () -> ()
    %57 = vector.shape_cast %4 : vector<1x8x8xi1> to vector<1x8x8xi1>
    %58 = vector.broadcast %57 : vector<1x8x8xi1> to vector<8x8x8xi1>
    %59 = vector.broadcast %cst_20 : f32 to vector<8x8x8xf32>
    %60 = arith.select %58, %56, %59 : vector<8x8x8xi1>, vector<8x8x8xf32>
    %cst_21 = arith.constant dense<0xFF800000> : vector<8x8xf32>
    %61 = vector.multi_reduction <maximumf>, %60, %cst_21 [2] : vector<8x8x8xf32> to vector<8x8xf32>
    %62 = vector.shape_cast %61 : vector<8x8xf32> to vector<8x8x1xf32>
    %63 = vector.broadcast %62 : vector<8x8x1xf32> to vector<8x8x8xf32>
    %64 = arith.subf %60, %63 : vector<8x8x8xf32>
    %65 = math.exp %64 : vector<8x8x8xf32>
    %cst_22 = arith.constant dense<0.000000e+00> : vector<8x8xf32>
    %66 = vector.multi_reduction <add>, %65, %cst_22 [2] : vector<8x8x8xf32> to vector<8x8xf32>
    %67 = vector.shape_cast %66 : vector<8x8xf32> to vector<8x8x1xf32>
    %68 = tpu.reciprocal %67 {approx = true} : vector<8x8x1xf32> -> vector<8x8x1xf32>
    %69 = vector.broadcast %68 : vector<8x8x1xf32> to vector<8x8x8xf32>
    %70 = arith.mulf %65, %69 : vector<8x8x8xf32>
    %71 = arith.truncf %70 : vector<8x8x8xf32> to vector<8x8x8xbf16>
    %72 = arith.truncf %53 : vector<8x8x8xf32> to vector<8x8x8xbf16>
    "tpu.trace_start"() <{level = 10 : i32, message = "nts,nsd->ntd"}> : () -> ()
    %cst_23 = arith.constant dense<0.000000e+00> : vector<8x8x8xf32>
    %73 = tpu.matmul %71, %72, %cst_23 {dimension_numbers = #tpu.dot_dimension_numbers<[2], [1], [1], [2], [0, 0, 0, 1, 1, 2], [0], [0]>} : vector<8x8x8xbf16>, vector<8x8x8xbf16>, vector<8x8x8xf32> -> vector<8x8x8xf32>
    "tpu.trace_stop"() : () -> ()
    %74 = vector.shape_cast %73 : vector<8x8x8xf32> to vector<2x4x8x8xf32>
    %75 = tpu.transpose %74, [0, 2, 1, 3] : vector<2x4x8x8xf32> -> vector<2x8x4x8xf32>
    %76 = vector.shape_cast %75 : vector<2x8x4x8xf32> to vector<16x32xf32>
    %77 = arith.truncf %76 : vector<16x32xf32> to vector<16x32xbf16>
    %c0_24 = arith.constant 0 : index
    %c0_25 = arith.constant 0 : index
    %c0_26 = arith.constant 0 : index
    %78 = vector.load %arg5[%c0_24, %c0_25, %c0_26] : memref<2x32x32xbf16, #tpu.memory_space<vmem>>, vector<1x32x32xbf16>
    %79 = vector.shape_cast %78 : vector<1x32x32xbf16> to vector<32x32xbf16>
    %cst_27 = arith.constant dense<0.000000e+00> : vector<16x32xf32>
    %80 = tpu.matmul %77, %79, %cst_27 {dimension_numbers = #tpu.dot_dimension_numbers<[1], [0], [0], [1], [0, 0, 1, 1], [], []>} : vector<16x32xbf16>, vector<32x32xbf16>, vector<16x32xf32> -> vector<16x32xf32>
    %c0_28 = arith.constant 0 : index
    %c0_29 = arith.constant 0 : index
    %c0_30 = arith.constant 0 : index
    %81 = vector.load %arg6[%c0_28, %c0_29, %c0_30] : memref<2x1x32xf32, #tpu.memory_space<vmem>>, vector<1x1x32xf32>
    %82 = vector.shape_cast %81 : vector<1x1x32xf32> to vector<1x32xf32>
    %83 = vector.broadcast %82 : vector<1x32xf32> to vector<16x32xf32>
    %84 = arith.addf %80, %83 : vector<16x32xf32>
    %85 = vector.shape_cast %84 : vector<16x32xf32> to vector<2x8x32xf32>
    %86 = arith.addf %0, %85 : vector<2x8x32xf32>
    %c0_31 = arith.constant 0 : index
    %c0_32 = arith.constant 0 : index
    %c0_33 = arith.constant 0 : index
    %87 = vector.load %arg7[%c0_31, %c0_32, %c0_33] : memref<2x1x32xf32, #tpu.memory_space<vmem>>, vector<1x1x32xf32>
    %88 = vector.shape_cast %87 : vector<1x1x32xf32> to vector<1x32xf32>
    %c0_34 = arith.constant 0 : index
    %c0_35 = arith.constant 0 : index
    %c0_36 = arith.constant 0 : index
    %89 = vector.load %arg8[%c0_34, %c0_35, %c0_36] : memref<2x1x32xf32, #tpu.memory_space<vmem>>, vector<1x1x32xf32>
    %90 = vector.shape_cast %89 : vector<1x1x32xf32> to vector<1x32xf32>
    %cst_37 = arith.constant dense<0.000000e+00> : vector<2x8xf32>
    %91 = vector.multi_reduction <add>, %86, %cst_37 [2] : vector<2x8x32xf32> to vector<2x8xf32>
    %92 = vector.shape_cast %91 : vector<2x8xf32> to vector<2x8x1xf32>
    %cst_38 = arith.constant 3.200000e+01 : f32
    %93 = vector.broadcast %cst_38 : f32 to vector<2x8x1xf32>
    %94 = arith.divf %92, %93 : vector<2x8x1xf32>
    %95 = vector.broadcast %94 : vector<2x8x1xf32> to vector<2x8x32xf32>
    %96 = arith.subf %86, %95 : vector<2x8x32xf32>
    %97 = arith.mulf %96, %96 : vector<2x8x32xf32>
    %cst_39 = arith.constant dense<0.000000e+00> : vector<2x8xf32>
    %98 = vector.multi_reduction <add>, %97, %cst_39 [2] : vector<2x8x32xf32> to vector<2x8xf32>
    %99 = vector.shape_cast %98 : vector<2x8xf32> to vector<2x8x1xf32>
    %cst_40 = arith.constant 3.200000e+01 : f32
    %100 = vector.broadcast %cst_40 : f32 to vector<2x8x1xf32>
    %101 = arith.divf %99, %100 : vector<2x8x1xf32>
    %102 = vector.broadcast %94 : vector<2x8x1xf32> to vector<2x8x32xf32>
    %103 = arith.subf %86, %102 : vector<2x8x32xf32>
    %cst_41 = arith.constant 9.99999974E-6 : f32
    %104 = vector.broadcast %cst_41 : f32 to vector<2x8x1xf32>
    %105 = arith.addf %101, %104 : vector<2x8x1xf32>
    %106 = math.rsqrt %105 : vector<2x8x1xf32>
    %107 = vector.broadcast %106 : vector<2x8x1xf32> to vector<2x8x32xf32>
    %108 = arith.mulf %103, %107 : vector<2x8x32xf32>
    %109 = vector.shape_cast %88 : vector<1x32xf32> to vector<1x1x32xf32>
    %110 = vector.broadcast %109 : vector<1x1x32xf32> to vector<2x8x32xf32>
    %111 = arith.mulf %108, %110 : vector<2x8x32xf32>
    %112 = vector.shape_cast %90 : vector<1x32xf32> to vector<1x1x32xf32>
    %113 = vector.broadcast %112 : vector<1x1x32xf32> to vector<2x8x32xf32>
    %114 = arith.addf %111, %113 : vector<2x8x32xf32>
    %115 = vector.shape_cast %114 : vector<2x8x32xf32> to vector<16x32xf32>
    %116 = arith.truncf %115 : vector<16x32xf32> to vector<16x32xbf16>
    %c0_42 = arith.constant 0 : index
    %c0_43 = arith.constant 0 : index
    %c0_44 = arith.constant 0 : index
    %117 = vector.load %arg9[%c0_42, %c0_43, %c0_44] : memref<2x32x128xbf16, #tpu.memory_space<vmem>>, vector<1x32x128xbf16>
    %118 = vector.shape_cast %117 : vector<1x32x128xbf16> to vector<32x128xbf16>
    %cst_45 = arith.constant dense<0.000000e+00> : vector<16x128xf32>
    %119 = tpu.matmul %116, %118, %cst_45 {dimension_numbers = #tpu.dot_dimension_numbers<[1], [0], [0], [1], [0, 0, 1, 1], [], []>} : vector<16x32xbf16>, vector<32x128xbf16>, vector<16x128xf32> -> vector<16x128xf32>
    %c0_46 = arith.constant 0 : index
    %c0_47 = arith.constant 0 : index
    %c0_48 = arith.constant 0 : index
    %120 = vector.load %arg10[%c0_46, %c0_47, %c0_48] : memref<2x1x128xf32, #tpu.memory_space<vmem>>, vector<1x1x128xf32>
    %121 = vector.shape_cast %120 : vector<1x1x128xf32> to vector<1x128xf32>
    %122 = vector.broadcast %121 : vector<1x128xf32> to vector<16x128xf32>
    %123 = arith.addf %119, %122 : vector<16x128xf32>
    %cst_49 = arith.constant 5.000000e-01 : f32
    %124 = vector.broadcast %cst_49 : f32 to vector<16x128xf32>
    %125 = arith.mulf %124, %123 : vector<16x128xf32>
    %cst_50 = arith.constant 0.707106769 : f32
    %126 = vector.broadcast %cst_50 : f32 to vector<16x128xf32>
    %127 = arith.mulf %123, %126 : vector<16x128xf32>
    %128 = math.erf %127 : vector<16x128xf32>
    %cst_51 = arith.constant 1.000000e+00 : f32
    %129 = vector.broadcast %cst_51 : f32 to vector<16x128xf32>
    %130 = arith.addf %129, %128 : vector<16x128xf32>
    %131 = arith.mulf %125, %130 : vector<16x128xf32>
    %132 = arith.truncf %131 : vector<16x128xf32> to vector<16x128xbf16>
    %c0_52 = arith.constant 0 : index
    %c0_53 = arith.constant 0 : index
    %c0_54 = arith.constant 0 : index
    %133 = vector.load %arg11[%c0_52, %c0_53, %c0_54] : memref<2x128x32xbf16, #tpu.memory_space<vmem>>, vector<1x128x32xbf16>
    %134 = vector.shape_cast %133 : vector<1x128x32xbf16> to vector<128x32xbf16>
    %cst_55 = arith.constant dense<0.000000e+00> : vector<16x32xf32>
    %135 = tpu.matmul %132, %134, %cst_55 {dimension_numbers = #tpu.dot_dimension_numbers<[1], [0], [0], [1], [0, 0, 1, 1], [], []>} : vector<16x128xbf16>, vector<128x32xbf16>, vector<16x32xf32> -> vector<16x32xf32>
    %c0_56 = arith.constant 0 : index
    %c0_57 = arith.constant 0 : index
    %c0_58 = arith.constant 0 : index
    %136 = vector.load %arg12[%c0_56, %c0_57, %c0_58] : memref<2x1x32xf32, #tpu.memory_space<vmem>>, vector<1x1x32xf32>
    %137 = vector.shape_cast %136 : vector<1x1x32xf32> to vector<1x32xf32>
    %138 = vector.broadcast %137 : vector<1x32xf32> to vector<16x32xf32>
    %139 = arith.addf %135, %138 : vector<16x32xf32>
    %140 = vector.shape_cast %139 : vector<16x32xf32> to vector<2x8x32xf32>
    %141 = arith.addf %86, %140 : vector<2x8x32xf32>
    %c1 = arith.constant 1 : index
    %c0_59 = arith.constant 0 : index
    %c0_60 = arith.constant 0 : index
    %142 = vector.load %arg1[%c1, %c0_59, %c0_60] : memref<2x1x32xf32, #tpu.memory_space<vmem>>, vector<1x1x32xf32>
    %143 = vector.shape_cast %142 : vector<1x1x32xf32> to vector<1x32xf32>
    %c1_61 = arith.constant 1 : index
    %c0_62 = arith.constant 0 : index
    %c0_63 = arith.constant 0 : index
    %144 = vector.load %arg2[%c1_61, %c0_62, %c0_63] : memref<2x1x32xf32, #tpu.memory_space<vmem>>, vector<1x1x32xf32>
    %145 = vector.shape_cast %144 : vector<1x1x32xf32> to vector<1x32xf32>
    %cst_64 = arith.constant dense<0.000000e+00> : vector<2x8xf32>
    %146 = vector.multi_reduction <add>, %141, %cst_64 [2] : vector<2x8x32xf32> to vector<2x8xf32>
    %147 = vector.shape_cast %146 : vector<2x8xf32> to vector<2x8x1xf32>
    %cst_65 = arith.constant 3.200000e+01 : f32
    %148 = vector.broadcast %cst_65 : f32 to vector<2x8x1xf32>
    %149 = arith.divf %147, %148 : vector<2x8x1xf32>
    %150 = vector.broadcast %149 : vector<2x8x1xf32> to vector<2x8x32xf32>
    %151 = arith.subf %141, %150 : vector<2x8x32xf32>
    %152 = arith.mulf %151, %151 : vector<2x8x32xf32>
    %cst_66 = arith.constant dense<0.000000e+00> : vector<2x8xf32>
    %153 = vector.multi_reduction <add>, %152, %cst_66 [2] : vector<2x8x32xf32> to vector<2x8xf32>
    %154 = vector.shape_cast %153 : vector<2x8xf32> to vector<2x8x1xf32>
    %cst_67 = arith.constant 3.200000e+01 : f32
    %155 = vector.broadcast %cst_67 : f32 to vector<2x8x1xf32>
    %156 = arith.divf %154, %155 : vector<2x8x1xf32>
    %157 = vector.broadcast %149 : vector<2x8x1xf32> to vector<2x8x32xf32>
    %158 = arith.subf %141, %157 : vector<2x8x32xf32>
    %cst_68 = arith.constant 9.99999974E-6 : f32
    %159 = vector.broadcast %cst_68 : f32 to vector<2x8x1xf32>
    %160 = arith.addf %156, %159 : vector<2x8x1xf32>
    %161 = math.rsqrt %160 : vector<2x8x1xf32>
    %162 = vector.broadcast %161 : vector<2x8x1xf32> to vector<2x8x32xf32>
    %163 = arith.mulf %158, %162 : vector<2x8x32xf32>
    %164 = vector.shape_cast %143 : vector<1x32xf32> to vector<1x1x32xf32>
    %165 = vector.broadcast %164 : vector<1x1x32xf32> to vector<2x8x32xf32>
    %166 = arith.mulf %163, %165 : vector<2x8x32xf32>
    %167 = vector.shape_cast %145 : vector<1x32xf32> to vector<1x1x32xf32>
    %168 = vector.broadcast %167 : vector<1x1x32xf32> to vector<2x8x32xf32>
    %169 = arith.addf %166, %168 : vector<2x8x32xf32>
    %170 = vector.shape_cast %169 : vector<2x8x32xf32> to vector<16x32xf32>
    %171 = arith.truncf %170 : vector<16x32xf32> to vector<16x32xbf16>
    %c1_69 = arith.constant 1 : index
    %c0_70 = arith.constant 0 : index
    %c0_71 = arith.constant 0 : index
    %172 = vector.load %arg3[%c1_69, %c0_70, %c0_71] : memref<2x32x96xbf16, #tpu.memory_space<vmem>>, vector<1x32x96xbf16>
    %173 = vector.shape_cast %172 : vector<1x32x96xbf16> to vector<32x96xbf16>
    %cst_72 = arith.constant dense<0.000000e+00> : vector<16x96xf32>
    %174 = tpu.matmul %171, %173, %cst_72 {dimension_numbers = #tpu.dot_dimension_numbers<[1], [0], [0], [1], [0, 0, 1, 1], [], []>} : vector<16x32xbf16>, vector<32x96xbf16>, vector<16x96xf32> -> vector<16x96xf32>
    %c1_73 = arith.constant 1 : index
    %c0_74 = arith.constant 0 : index
    %c0_75 = arith.constant 0 : index
    %175 = vector.load %arg4[%c1_73, %c0_74, %c0_75] : memref<2x1x96xf32, #tpu.memory_space<vmem>>, vector<1x1x96xf32>
    %176 = vector.shape_cast %175 : vector<1x1x96xf32> to vector<1x96xf32>
    %177 = vector.broadcast %176 : vector<1x96xf32> to vector<16x96xf32>
    %178 = arith.addf %174, %177 : vector<16x96xf32>
    %179 = vector.extract_strided_slice %178 {offsets = [0, 0], sizes = [16, 32], strides = [1, 1]} : vector<16x96xf32> to vector<16x32xf32>
    %180 = vector.shape_cast %179 : vector<16x32xf32> to vector<2x8x4x8xf32>
    %181 = vector.extract_strided_slice %178 {offsets = [0, 32], sizes = [16, 32], strides = [1, 1]} : vector<16x96xf32> to vector<16x32xf32>
    %182 = vector.shape_cast %181 : vector<16x32xf32> to vector<2x8x4x8xf32>
    %183 = vector.extract_strided_slice %178 {offsets = [0, 64], sizes = [16, 32], strides = [1, 1]} : vector<16x96xf32> to vector<16x32xf32>
    %184 = vector.shape_cast %183 : vector<16x32xf32> to vector<2x8x4x8xf32>
    %185 = tpu.transpose %180, [0, 2, 1, 3] : vector<2x8x4x8xf32> -> vector<2x4x8x8xf32>
    %186 = vector.shape_cast %185 : vector<2x4x8x8xf32> to vector<8x8x8xf32>
    %187 = tpu.transpose %182, [0, 2, 1, 3] : vector<2x8x4x8xf32> -> vector<2x4x8x8xf32>
    %188 = vector.shape_cast %187 : vector<2x4x8x8xf32> to vector<8x8x8xf32>
    %189 = tpu.transpose %184, [0, 2, 1, 3] : vector<2x8x4x8xf32> -> vector<2x4x8x8xf32>
    %190 = vector.shape_cast %189 : vector<2x4x8x8xf32> to vector<8x8x8xf32>
    %191 = arith.truncf %186 : vector<8x8x8xf32> to vector<8x8x8xbf16>
    %192 = arith.truncf %188 : vector<8x8x8xf32> to vector<8x8x8xbf16>
    "tpu.trace_start"() <{level = 10 : i32, message = "ntd,nsd->nts"}> : () -> ()
    %cst_76 = arith.constant dense<0.000000e+00> : vector<8x8x8xf32>
    %193 = tpu.matmul %191, %192, %cst_76 {dimension_numbers = #tpu.dot_dimension_numbers<[2], [2], [1], [1], [0, 0, 0, 1, 1, 1], [0], [0]>} : vector<8x8x8xbf16>, vector<8x8x8xbf16>, vector<8x8x8xf32> -> vector<8x8x8xf32>
    %cst_77 = arith.constant 0xFF800000 : f32
    "tpu.trace_stop"() : () -> ()
    %194 = vector.shape_cast %4 : vector<1x8x8xi1> to vector<1x8x8xi1>
    %195 = vector.broadcast %194 : vector<1x8x8xi1> to vector<8x8x8xi1>
    %196 = vector.broadcast %cst_77 : f32 to vector<8x8x8xf32>
    %197 = arith.select %195, %193, %196 : vector<8x8x8xi1>, vector<8x8x8xf32>
    %cst_78 = arith.constant dense<0xFF800000> : vector<8x8xf32>
    %198 = vector.multi_reduction <maximumf>, %197, %cst_78 [2] : vector<8x8x8xf32> to vector<8x8xf32>
    %199 = vector.shape_cast %198 : vector<8x8xf32> to vector<8x8x1xf32>
    %200 = vector.broadcast %199 : vector<8x8x1xf32> to vector<8x8x8xf32>
    %201 = arith.subf %197, %200 : vector<8x8x8xf32>
    %202 = math.exp %201 : vector<8x8x8xf32>
    %cst_79 = arith.constant dense<0.000000e+00> : vector<8x8xf32>
    %203 = vector.multi_reduction <add>, %202, %cst_79 [2] : vector<8x8x8xf32> to vector<8x8xf32>
    %204 = vector.shape_cast %203 : vector<8x8xf32> to vector<8x8x1xf32>
    %205 = tpu.reciprocal %204 {approx = true} : vector<8x8x1xf32> -> vector<8x8x1xf32>
    %206 = vector.broadcast %205 : vector<8x8x1xf32> to vector<8x8x8xf32>
    %207 = arith.mulf %202, %206 : vector<8x8x8xf32>
    %208 = arith.truncf %207 : vector<8x8x8xf32> to vector<8x8x8xbf16>
    %209 = arith.truncf %190 : vector<8x8x8xf32> to vector<8x8x8xbf16>
    "tpu.trace_start"() <{level = 10 : i32, message = "nts,nsd->ntd"}> : () -> ()
    %cst_80 = arith.constant dense<0.000000e+00> : vector<8x8x8xf32>
    %210 = tpu.matmul %208, %209, %cst_80 {dimension_numbers = #tpu.dot_dimension_numbers<[2], [1], [1], [2], [0, 0, 0, 1, 1, 2], [0], [0]>} : vector<8x8x8xbf16>, vector<8x8x8xbf16>, vector<8x8x8xf32> -> vector<8x8x8xf32>
    "tpu.trace_stop"() : () -> ()
    %211 = vector.shape_cast %210 : vector<8x8x8xf32> to vector<2x4x8x8xf32>
    %212 = tpu.transpose %211, [0, 2, 1, 3] : vector<2x4x8x8xf32> -> vector<2x8x4x8xf32>
    %213 = vector.shape_cast %212 : vector<2x8x4x8xf32> to vector<16x32xf32>
    %214 = arith.truncf %213 : vector<16x32xf32> to vector<16x32xbf16>
    %c1_81 = arith.constant 1 : index
    %c0_82 = arith.constant 0 : index
    %c0_83 = arith.constant 0 : index
    %215 = vector.load %arg5[%c1_81, %c0_82, %c0_83] : memref<2x32x32xbf16, #tpu.memory_space<vmem>>, vector<1x32x32xbf16>
    %216 = vector.shape_cast %215 : vector<1x32x32xbf16> to vector<32x32xbf16>
    %cst_84 = arith.constant dense<0.000000e+00> : vector<16x32xf32>
    %217 = tpu.matmul %214, %216, %cst_84 {dimension_numbers = #tpu.dot_dimension_numbers<[1], [0], [0], [1], [0, 0, 1, 1], [], []>} : vector<16x32xbf16>, vector<32x32xbf16>, vector<16x32xf32> -> vector<16x32xf32>
    %c1_85 = arith.constant 1 : index
    %c0_86 = arith.constant 0 : index
    %c0_87 = arith.constant 0 : index
    %218 = vector.load %arg6[%c1_85, %c0_86, %c0_87] : memref<2x1x32xf32, #tpu.memory_space<vmem>>, vector<1x1x32xf32>
    %219 = vector.shape_cast %218 : vector<1x1x32xf32> to vector<1x32xf32>
    %220 = vector.broadcast %219 : vector<1x32xf32> to vector<16x32xf32>
    %221 = arith.addf %217, %220 : vector<16x32xf32>
    %222 = vector.shape_cast %221 : vector<16x32xf32> to vector<2x8x32xf32>
    %223 = arith.addf %141, %222 : vector<2x8x32xf32>
    %c1_88 = arith.constant 1 : index
    %c0_89 = arith.constant 0 : index
    %c0_90 = arith.constant 0 : index
    %224 = vector.load %arg7[%c1_88, %c0_89, %c0_90] : memref<2x1x32xf32, #tpu.memory_space<vmem>>, vector<1x1x32xf32>
    %225 = vector.shape_cast %224 : vector<1x1x32xf32> to vector<1x32xf32>
    %c1_91 = arith.constant 1 : index
    %c0_92 = arith.constant 0 : index
    %c0_93 = arith.constant 0 : index
    %226 = vector.load %arg8[%c1_91, %c0_92, %c0_93] : memref<2x1x32xf32, #tpu.memory_space<vmem>>, vector<1x1x32xf32>
    %227 = vector.shape_cast %226 : vector<1x1x32xf32> to vector<1x32xf32>
    %cst_94 = arith.constant dense<0.000000e+00> : vector<2x8xf32>
    %228 = vector.multi_reduction <add>, %223, %cst_94 [2] : vector<2x8x32xf32> to vector<2x8xf32>
    %229 = vector.shape_cast %228 : vector<2x8xf32> to vector<2x8x1xf32>
    %cst_95 = arith.constant 3.200000e+01 : f32
    %230 = vector.broadcast %cst_95 : f32 to vector<2x8x1xf32>
    %231 = arith.divf %229, %230 : vector<2x8x1xf32>
    %232 = vector.broadcast %231 : vector<2x8x1xf32> to vector<2x8x32xf32>
    %233 = arith.subf %223, %232 : vector<2x8x32xf32>
    %234 = arith.mulf %233, %233 : vector<2x8x32xf32>
    %cst_96 = arith.constant dense<0.000000e+00> : vector<2x8xf32>
    %235 = vector.multi_reduction <add>, %234, %cst_96 [2] : vector<2x8x32xf32> to vector<2x8xf32>
    %236 = vector.shape_cast %235 : vector<2x8xf32> to vector<2x8x1xf32>
    %cst_97 = arith.constant 3.200000e+01 : f32
    %237 = vector.broadcast %cst_97 : f32 to vector<2x8x1xf32>
    %238 = arith.divf %236, %237 : vector<2x8x1xf32>
    %239 = vector.broadcast %231 : vector<2x8x1xf32> to vector<2x8x32xf32>
    %240 = arith.subf %223, %239 : vector<2x8x32xf32>
    %cst_98 = arith.constant 9.99999974E-6 : f32
    %241 = vector.broadcast %cst_98 : f32 to vector<2x8x1xf32>
    %242 = arith.addf %238, %241 : vector<2x8x1xf32>
    %243 = math.rsqrt %242 : vector<2x8x1xf32>
    %244 = vector.broadcast %243 : vector<2x8x1xf32> to vector<2x8x32xf32>
    %245 = arith.mulf %240, %244 : vector<2x8x32xf32>
    %246 = vector.shape_cast %225 : vector<1x32xf32> to vector<1x1x32xf32>
    %247 = vector.broadcast %246 : vector<1x1x32xf32> to vector<2x8x32xf32>
    %248 = arith.mulf %245, %247 : vector<2x8x32xf32>
    %249 = vector.shape_cast %227 : vector<1x32xf32> to vector<1x1x32xf32>
    %250 = vector.broadcast %249 : vector<1x1x32xf32> to vector<2x8x32xf32>
    %251 = arith.addf %248, %250 : vector<2x8x32xf32>
    %252 = vector.shape_cast %251 : vector<2x8x32xf32> to vector<16x32xf32>
    %253 = arith.truncf %252 : vector<16x32xf32> to vector<16x32xbf16>
    %c1_99 = arith.constant 1 : index
    %c0_100 = arith.constant 0 : index
    %c0_101 = arith.constant 0 : index
    %254 = vector.load %arg9[%c1_99, %c0_100, %c0_101] : memref<2x32x128xbf16, #tpu.memory_space<vmem>>, vector<1x32x128xbf16>
    %255 = vector.shape_cast %254 : vector<1x32x128xbf16> to vector<32x128xbf16>
    %cst_102 = arith.constant dense<0.000000e+00> : vector<16x128xf32>
    %256 = tpu.matmul %253, %255, %cst_102 {dimension_numbers = #tpu.dot_dimension_numbers<[1], [0], [0], [1], [0, 0, 1, 1], [], []>} : vector<16x32xbf16>, vector<32x128xbf16>, vector<16x128xf32> -> vector<16x128xf32>
    %c1_103 = arith.constant 1 : index
    %c0_104 = arith.constant 0 : index
    %c0_105 = arith.constant 0 : index
    %257 = vector.load %arg10[%c1_103, %c0_104, %c0_105] : memref<2x1x128xf32, #tpu.memory_space<vmem>>, vector<1x1x128xf32>
    %258 = vector.shape_cast %257 : vector<1x1x128xf32> to vector<1x128xf32>
    %259 = vector.broadcast %258 : vector<1x128xf32> to vector<16x128xf32>
    %260 = arith.addf %256, %259 : vector<16x128xf32>
    %cst_106 = arith.constant 5.000000e-01 : f32
    %261 = vector.broadcast %cst_106 : f32 to vector<16x128xf32>
    %262 = arith.mulf %261, %260 : vector<16x128xf32>
    %cst_107 = arith.constant 0.707106769 : f32
    %263 = vector.broadcast %cst_107 : f32 to vector<16x128xf32>
    %264 = arith.mulf %260, %263 : vector<16x128xf32>
    %265 = math.erf %264 : vector<16x128xf32>
    %cst_108 = arith.constant 1.000000e+00 : f32
    %266 = vector.broadcast %cst_108 : f32 to vector<16x128xf32>
    %267 = arith.addf %266, %265 : vector<16x128xf32>
    %268 = arith.mulf %262, %267 : vector<16x128xf32>
    %269 = arith.truncf %268 : vector<16x128xf32> to vector<16x128xbf16>
    %c1_109 = arith.constant 1 : index
    %c0_110 = arith.constant 0 : index
    %c0_111 = arith.constant 0 : index
    %270 = vector.load %arg11[%c1_109, %c0_110, %c0_111] : memref<2x128x32xbf16, #tpu.memory_space<vmem>>, vector<1x128x32xbf16>
    %271 = vector.shape_cast %270 : vector<1x128x32xbf16> to vector<128x32xbf16>
    %cst_112 = arith.constant dense<0.000000e+00> : vector<16x32xf32>
    %272 = tpu.matmul %269, %271, %cst_112 {dimension_numbers = #tpu.dot_dimension_numbers<[1], [0], [0], [1], [0, 0, 1, 1], [], []>} : vector<16x128xbf16>, vector<128x32xbf16>, vector<16x32xf32> -> vector<16x32xf32>
    %c1_113 = arith.constant 1 : index
    %c0_114 = arith.constant 0 : index
    %c0_115 = arith.constant 0 : index
    %273 = vector.load %arg12[%c1_113, %c0_114, %c0_115] : memref<2x1x32xf32, #tpu.memory_space<vmem>>, vector<1x1x32xf32>
    %274 = vector.shape_cast %273 : vector<1x1x32xf32> to vector<1x32xf32>
    %275 = vector.broadcast %274 : vector<1x32xf32> to vector<16x32xf32>
    %276 = arith.addf %272, %275 : vector<16x32xf32>
    %277 = vector.shape_cast %276 : vector<16x32xf32> to vector<2x8x32xf32>
    %278 = arith.addf %223, %277 : vector<2x8x32xf32>
    %279 = vector.extract_strided_slice %278 {offsets = [0, 7, 0], sizes = [2, 1, 32], strides = [1, 1, 1]} : vector<2x8x32xf32> to vector<2x1x32xf32>
    %280 = vector.shape_cast %279 : vector<2x1x32xf32> to vector<2x32xf32>
    %c0_116 = arith.constant 0 : index
    %c0_117 = arith.constant 0 : index
    %281 = vector.load %arg13[%c0_116, %c0_117] : memref<1x32xf32, #tpu.memory_space<vmem>>, vector<1x32xf32>
    %c0_118 = arith.constant 0 : index
    %c0_119 = arith.constant 0 : index
    %282 = vector.load %arg14[%c0_118, %c0_119] : memref<1x32xf32, #tpu.memory_space<vmem>>, vector<1x32xf32>
    %cst_120 = arith.constant dense<0.000000e+00> : vector<2xf32>
    %283 = vector.multi_reduction <add>, %280, %cst_120 [1] : vector<2x32xf32> to vector<2xf32>
    %284 = vector.shape_cast %283 : vector<2xf32> to vector<2x1xf32>
    %cst_121 = arith.constant 3.200000e+01 : f32
    %285 = vector.broadcast %cst_121 : f32 to vector<2x1xf32>
    %286 = arith.divf %284, %285 : vector<2x1xf32>
    %287 = vector.broadcast %286 : vector<2x1xf32> to vector<2x32xf32>
    %288 = arith.subf %280, %287 : vector<2x32xf32>
    %289 = arith.mulf %288, %288 : vector<2x32xf32>
    %cst_122 = arith.constant dense<0.000000e+00> : vector<2xf32>
    %290 = vector.multi_reduction <add>, %289, %cst_122 [1] : vector<2x32xf32> to vector<2xf32>
    %291 = vector.shape_cast %290 : vector<2xf32> to vector<2x1xf32>
    %cst_123 = arith.constant 3.200000e+01 : f32
    %292 = vector.broadcast %cst_123 : f32 to vector<2x1xf32>
    %293 = arith.divf %291, %292 : vector<2x1xf32>
    %294 = vector.broadcast %286 : vector<2x1xf32> to vector<2x32xf32>
    %295 = arith.subf %280, %294 : vector<2x32xf32>
    %cst_124 = arith.constant 9.99999974E-6 : f32
    %296 = vector.broadcast %cst_124 : f32 to vector<2x1xf32>
    %297 = arith.addf %293, %296 : vector<2x1xf32>
    %298 = math.rsqrt %297 : vector<2x1xf32>
    %299 = vector.broadcast %298 : vector<2x1xf32> to vector<2x32xf32>
    %300 = arith.mulf %295, %299 : vector<2x32xf32>
    %301 = vector.broadcast %281 : vector<1x32xf32> to vector<2x32xf32>
    %302 = arith.mulf %300, %301 : vector<2x32xf32>
    %303 = vector.broadcast %282 : vector<1x32xf32> to vector<2x32xf32>
    %304 = arith.addf %302, %303 : vector<2x32xf32>
    %305 = arith.truncf %304 : vector<2x32xf32> to vector<2x32xbf16>
    %c0_125 = arith.constant 0 : index
    %c0_126 = arith.constant 0 : index
    %306 = vector.load %arg15[%c0_125, %c0_126] : memref<32x128xbf16, #tpu.memory_space<vmem>>, vector<32x128xbf16>
    %cst_127 = arith.constant dense<0.000000e+00> : vector<2x128xf32>
    %307 = tpu.matmul %305, %306, %cst_127 {dimension_numbers = #tpu.dot_dimension_numbers<[1], [0], [0], [1], [0, 0, 1, 1], [], []>} : vector<2x32xbf16>, vector<32x128xbf16>, vector<2x128xf32> -> vector<2x128xf32>
    %c0_128 = arith.constant 0 : index
    %c0_129 = arith.constant 0 : index
    %308 = vector.load %arg16[%c0_128, %c0_129] : memref<2x128xf32, #tpu.memory_space<vmem>>, vector<2x128xf32>
    tpu.vector_store %arg16[%c0_128, %c0_129], %307 {strides = array<i32>} : memref<2x128xf32, #tpu.memory_space<vmem>>, vector<2x128xf32>,
    return
  }
}

</mosaic_0001>

<llo_original>
// kernel: tpu_custom_call.1
$region0: #{tpu_custom_call.1}
  #allocation0 [shape = 'u32[]', space=smem, size = 0x4, offset = 0x4, fixed_abs, tag = 'smem constant byte address 0x4 - core index']
  #allocation1 [shape = 'u32[144,128]{1,0:T(1,128)}', space=vmem, size = 0x12000, scoped, tag = 'internal scratch']
  %s0 = inlined_call_operand.vmem [shape: f32[2,8,32], index: 0, kind: input, shape index: {}]
  %s1 = inlined_call_operand.vmem [shape: f32[2,1,32], index: 1, kind: input, shape index: {}]
  %s2 = inlined_call_operand.vmem [shape: f32[2,1,32], index: 2, kind: input, shape index: {}]
  %s3 = inlined_call_operand.vmem [shape: bf16[2,32,96], index: 3, kind: input, shape index: {}]
  %s4 = inlined_call_operand.vmem [shape: f32[2,1,96], index: 4, kind: input, shape index: {}]
  %s5 = inlined_call_operand.vmem [shape: bf16[2,32,32], index: 5, kind: input, shape index: {}]
  %s6 = inlined_call_operand.vmem [shape: f32[2,1,32], index: 6, kind: input, shape index: {}]
  %s7 = inlined_call_operand.vmem [shape: f32[2,1,32], index: 7, kind: input, shape index: {}]
  %s8 = inlined_call_operand.vmem [shape: f32[2,1,32], index: 8, kind: input, shape index: {}]
  %s9 = inlined_call_operand.vmem [shape: bf16[2,32,128], index: 9, kind: input, shape index: {}]
  %s10 = inlined_call_operand.vmem [shape: f32[2,1,128], index: 10, kind: input, shape index: {}]
  %s11 = inlined_call_operand.vmem [shape: bf16[2,128,32], index: 11, kind: input, shape index: {}]
  %s12 = inlined_call_operand.vmem [shape: f32[2,1,32], index: 12, kind: input, shape index: {}]
  %s13 = inlined_call_operand.vmem [shape: f32[1,32], index: 13, kind: input, shape index: {}]
  %s14 = inlined_call_operand.vmem [shape: f32[1,32], index: 14, kind: input, shape index: {}]
  %s15 = inlined_call_operand.vmem [shape: bf16[32,128], index: 15, kind: input, shape index: {}]
  %s16 = inlined_call_operand.hbm [shape: f32[2,128], index: 16, kind: output, shape index: {}]
  %s17 = sld [smem:[#allocation0]]
  $region74: #{tpu_custom_call.1} parent=0
    _
  %s19 = ssub.s32 1, %s17
  %s20 = scalar_select 0, %s19, %s17
  $region1: #{tpu_custom_call.1} parent=0
    #allocation2 [shape = 'u8[1024]{0}', space=vmem, size = 0x400, scoped, tag = 'output window, operand 0, single buffered']
    #allocation3 [shape = 's32[1]{0}', space=sflag, size = 0x4, scoped, tag = 'scoped memory for tpu_custom_call.1']
    %21 = vsyncpa [#allocation3], 0
    // Predicated region
    $region2: #{tpu_custom_call.1} parent=1 // pred_check
      _
    $region3: #{tpu_custom_call.1} parent=1 // pred_check_branch
      %23 = sbr.rel (0) target = $region5
    $region4: #{tpu_custom_call.1} parent=1 // pred_region
      _
    $region5: #{tpu_custom_call.1} parent=1 // pred_fallthru
      _
    // Predicated region
    $region6: #{tpu_custom_call.1} parent=1 // pred_check
      _
    $region7: #{tpu_custom_call.1} parent=1 // pred_check_branch
      %25 = sbr.rel (0) target = $region9
    $region8: #{tpu_custom_call.1} parent=1 // pred_region
      _
    $region9: #{tpu_custom_call.1} parent=1 // pred_fallthru
      _
    // Predicated region
    $region10: #{tpu_custom_call.1} parent=1 // pred_check
      _
    $region11: #{tpu_custom_call.1} parent=1 // pred_check_branch
      %27 = sbr.rel (0) target = $region13
    $region12: #{tpu_custom_call.1} parent=1 // pred_region
      _
    $region13: #{tpu_custom_call.1} parent=1 // pred_fallthru
      _
    // Predicated region
    $region14: #{tpu_custom_call.1} parent=1 // pred_check
      _
    $region15: #{tpu_custom_call.1} parent=1 // pred_check_branch
      %29 = sbr.rel (0) target = $region17
    $region16: #{tpu_custom_call.1} parent=1 // pred_region
      _
    $region17: #{tpu_custom_call.1} parent=1 // pred_fallthru
      _
    // Predicated region
    $region18: #{tpu_custom_call.1} parent=1 // pred_check
      _
    $region19: #{tpu_custom_call.1} parent=1 // pred_check_branch
      %31 = sbr.rel (0) target = $region21
    $region20: #{tpu_custom_call.1} parent=1 // pred_region
      _
    $region21: #{tpu_custom_call.1} parent=1 // pred_fallthru
      _
    // Predicated region
    $region22: #{tpu_custom_call.1} parent=1 // pred_check
      _
    $region23: #{tpu_custom_call.1} parent=1 // pred_check_branch
      %33 = sbr.rel (0) target = $region25
    $region24: #{tpu_custom_call.1} parent=1 // pred_region
      _
    $region25: #{tpu_custom_call.1} parent=1 // pred_fallthru
      _
    // Predicated region
    $region26: #{tpu_custom_call.1} parent=1 // pred_check
      _
    $region27: #{tpu_custom_call.1} parent=1 // pred_check_branch
      %35 = sbr.rel (0) target = $region29
    $region28: #{tpu_custom_call.1} parent=1 // pred_region
      _
    $region29: #{tpu_custom_call.1} parent=1 // pred_fallthru
      _
    // Predicated region
    $region30: #{tpu_custom_call.1} parent=1 // pred_check
      _
    $region31: #{tpu_custom_call.1} parent=1 // pred_check_branch
      %37 = sbr.rel (0) target = $region33
    $region32: #{tpu_custom_call.1} parent=1 // pred_region
      _
    $region33: #{tpu_custom_call.1} parent=1 // pred_fallthru
      _
    // Predicated region
    $region34: #{tpu_custom_call.1} parent=1 // pred_check
      _
    $region35: #{tpu_custom_call.1} parent=1 // pred_check_branch
      %39 = sbr.rel (0) target = $region37
    $region36: #{tpu_custom_call.1} parent=1 // pred_region
      _
    $region37: #{tpu_custom_call.1} parent=1 // pred_fallthru
      _
    // Predicated region
    $region38: #{tpu_custom_call.1} parent=1 // pred_check
      _
    $region39: #{tpu_custom_call.1} parent=1 // pred_check_branch
      %41 = sbr.rel (0) target = $region41
    $region40: #{tpu_custom_call.1} parent=1 // pred_region
      _
    $region41: #{tpu_custom_call.1} parent=1 // pred_fallthru
      _
    // Predicated region
    $region42: #{tpu_custom_call.1} parent=1 // pred_check
      _
    $region43: #{tpu_custom_call.1} parent=1 // pred_check_branch
      %43 = sbr.rel (0) target = $region45
    $region44: #{tpu_custom_call.1} parent=1 // pred_region
      _
    $region45: #{tpu_custom_call.1} parent=1 // pred_fallthru
      _
    // Predicated region
    $region46: #{tpu_custom_call.1} parent=1 // pred_check
      _
    $region47: #{tpu_custom_call.1} parent=1 // pred_check_branch
      %45 = sbr.rel (0) target = $region49
    $region48: #{tpu_custom_call.1} parent=1 // pred_region
      _
    $region49: #{tpu_custom_call.1} parent=1 // pred_fallthru
      _
    // Predicated region
    $region50: #{tpu_custom_call.1} parent=1 // pred_check
      _
    $region51: #{tpu_custom_call.1} parent=1 // pred_check_branch
      %47 = sbr.rel (0) target = $region53
    $region52: #{tpu_custom_call.1} parent=1 // pred_region
      _
    $region53: #{tpu_custom_call.1} parent=1 // pred_fallthru
      _
    // Predicated region
    $region54: #{tpu_custom_call.1} parent=1 // pred_check
      _
    $region55: #{tpu_custom_call.1} parent=1 // pred_check_branch
      %49 = sbr.rel (0) target = $region57
    $region56: #{tpu_custom_call.1} parent=1 // pred_region
      _
    $region57: #{tpu_custom_call.1} parent=1 // pred_fallthru
      _
    // Predicated region
    $region58: #{tpu_custom_call.1} parent=1 // pred_check
      _
    $region59: #{tpu_custom_call.1} parent=1 // pred_check_branch
      %51 = sbr.rel (0) target = $region61
    $region60: #{tpu_custom_call.1} parent=1 // pred_region
      _
    $region61: #{tpu_custom_call.1} parent=1 // pred_fallthru
      _
    // Predicated region
    $region62: #{tpu_custom_call.1} parent=1 // pred_check
      _
    $region63: #{tpu_custom_call.1} parent=1 // pred_check_branch
      %53 = sbr.rel (0) target = $region65
    $region64: #{tpu_custom_call.1} parent=1 // pred_region
      _
    $region65: #{tpu_custom_call.1} parent=1 // pred_fallthru
      _
    %v55 = vld [vmem:[%s0] sm:$0xff]
    %v56 = vld [vmem:[%s0 + $0x8] sm:$0xff]
    %v57 = vlaneseq
    %v58 = vshrl.u32 %v57, 7
    %v59 = vlaneseq
    %v60 = vand.u32 %v59, 127
    %vm61 = vcmp.le.s32.totalorder %v60, %v58
    %v62 = vld [vmem:[%s1] sm:$0x1]
    %v63 = vld [vmem:[%s2] sm:$0x1]
    %vm64 = vcmask 261120
    %v65 = vsel %vm64, %v55, 0.0
    %66 = vadd.xlane.f32.xlu0 %v65
    %v67 = vpop.xlane.xlu0 %66
    %v68 = vsel %vm64, %v56, 0.0
    %69 = vadd.xlane.f32.xlu0 %v68
    %v70 = vpop.xlane.xlu0 %69
    %v71 = vrcp.pop 32.0
    %v72 = vmul.f32 %v67, %v71
    %v73 = vmul.f32 %v70, %v71
    %v74 = vsub.f32 %v55, %v72
    %v75 = vsub.f32 %v56, %v73
    %v76 = vmul.f32 %v74, %v74
    %v77 = vmul.f32 %v75, %v75
    %v78 = vsel %vm64, %v76, 0.0
    %79 = vadd.xlane.f32.xlu0 %v78
    %v80 = vpop.xlane.xlu0 %79
    %v81 = vsel %vm64, %v77, 0.0
    %82 = vadd.xlane.f32.xlu0 %v81
    %v83 = vpop.xlane.xlu0 %82
    %v84 = vmul.f32 %v80, %v71
    %v85 = vmul.f32 %v83, %v71
    %v86 = vadd.f32 %v84, 1e-05
    %v87 = vadd.f32 %v85, 1e-05
    %v88 = vrsqrt.pop %v86
    %v89 = vrsqrt.pop %v87
    %v90 = vmul.f32 %v74, %v88
    %v91 = vmul.f32 %v75, %v89
    %v93 = vlaneseq
    %v94 = vshrl.u32 %v93, 7
    %v95 = vsub.s32 0, %v94
    %v96 = vrot.slane %v62, %v95
    %v98 = vmul.f32 %v90, %v96
    %v99 = vmul.f32 %v91, %v96
    %v101 = vlaneseq
    %v102 = vshrl.u32 %v101, 7
    %v103 = vsub.s32 0, %v102
    %v104 = vrot.slane %v63, %v103
    %v106 = vadd.f32 %v98, %v104
    %v107 = vadd.f32 %v99, %v104
    %v108 = vpack.c.bf16 %v107, %v106
    %v109 = vld [vmem:[%s3] sm:$0xf]
    %v110 = vld [vmem:[%s3 + $0x4] sm:$0xf]
    %v111 = vld [vmem:[%s3 + $0x8] sm:$0xf]
    %v112 = vld [vmem:[%s3 + $0xc] sm:$0xf]
    %v113 = vld [vmem:[%s4] sm:$0x1]
    %v115 = vlaneseq
    %v116 = vshrl.u32 %v115, 7
    %v117 = vsub.s32 0, %v116
    %v118 = vrot.slane %v113, %v117
    %v124 = vunpack.c.l.b16 %v109
    %v125 = vunpack.c.l.b16 %v110
    %v126 = vunpack.c.l.b16 %v111
    %v127 = vunpack.c.l.b16 %v112
    %v128 = vpack.c.b16 %v125, %v124
    %v129 = vpack.c.b16 %v127, %v126
    %v133 = vsel %vm64, %v108, 0
    %135 = vmatprep.subr.bf16.mxu0 0
    %136 = vmatpush1.bf16.msra.mxu0 %v128
    %137 = vmatprep.subr.bf16.mxu0 0
    %138 = vmatpush1.bf16.msra.mxu0 %v129
    %139 = vmatprep.subr.bf16.mxu0 0
    %140 = vmatpush1.bf16.msra.mxu0 0
    %141 = vmatprep.subr.bf16.mxu0 0
    %142 = vmatpush1.bf16.msra.mxu0 0
    %143 = vmatprep.subr.bf16.mxu0 0
    %144 = vmatpush1.bf16.msra.mxu0 0
    %145 = vmatprep.subr.bf16.mxu0 0
    %146 = vmatpush1.bf16.msra.mxu0 0
    %147 = vmatprep.subr.bf16.mxu0 0
    %148 = vmatpush1.bf16.msra.mxu0 0
    %149 = vmatprep.subr.bf16.mxu0 0
    %150 = vmatpush1.bf16.msra.mxu0 0
    %151 = vmatprep.subr.bf16.mxu0 0
    %152 = vmatpush1.bf16.msra.mxu0 0
    %153 = vmatprep.subr.bf16.mxu0 0
    %154 = vmatpush1.bf16.msra.mxu0 0
    %155 = vmatprep.subr.bf16.mxu0 0
    %156 = vmatpush1.bf16.msra.mxu0 0
    %157 = vmatprep.subr.bf16.mxu0 0
    %158 = vmatpush1.bf16.msra.mxu0 0
    %159 = vmatprep.subr.bf16.mxu0 0
    %160 = vmatpush1.bf16.msra.mxu0 0
    %161 = vmatprep.subr.bf16.mxu0 0
    %162 = vmatpush1.bf16.msra.mxu0 0
    %163 = vmatprep.subr.bf16.mxu0 0
    %164 = vmatpush1.bf16.msra.mxu0 0
    %165 = vmatprep.subr.bf16.mxu0 0
    %166 = vmatpush1.bf16.msra.mxu0 0
    %167 = vmatprep.mubr.bf16.mxu0 0
    %168 = vmatmul.mubr.bf16.gmra.mrb[0].mxu0 %v133
    %v169 = vpop.f32.mrb[0].mxu0
    %v170 = vadd.f32 %v118, %v169
    %v171 = vpop.f32.mrb[0].mxu0
    %v172 = vpop.f32.mrb[0].mxu0
    %v173 = vadd.f32 %v118, %v172
    %v174 = vpop.f32.mrb[0].mxu0
    %175 = vdwg.mxu0
    %178 = vrot.lane.b32.xlu0 %v170, 120
    %v179 = vpop.permute.xlu0 %178
    %180 = vrot.lane.b32.xlu0 %v173, 120
    %v181 = vpop.permute.xlu0 %180
    %184 = vrot.lane.b32.xlu0 %v170, 112
    %v185 = vpop.permute.xlu0 %184
    %186 = vrot.lane.b32.xlu0 %v173, 112
    %v187 = vpop.permute.xlu0 %186
    %190 = vrot.lane.b32.xlu0 %v170, 104
    %v191 = vpop.permute.xlu0 %190
    %192 = vrot.lane.b32.xlu0 %v173, 104
    %v193 = vpop.permute.xlu0 %192
    %v196 = vcombine.low %v170, %v185
    %v197 = vcombine.high %v170, %v185
    %v199 = vunpack.c.l.s4 1983009808
    %v200 = vunpack.c.0.s8 %v199
    %v201 = vlaneseq
    %v202 = vshrl.u32 %v201, 7
    %v203 = vsub.s32 %v200, %v202
    %v204 = vrot.slane %v196, %v203
    %v206 = vunpack.c.l.s4 1983009808
    %v207 = vunpack.c.0.s8 %v206
    %v208 = vlaneseq
    %v209 = vshrl.u32 %v208, 7
    %v210 = vsub.s32 %v207, %v209
    %v211 = vrot.slane %v197, %v210
    %v212 = vcombine.low %v179, %v191
    %v213 = vcombine.high %v179, %v191
    %v215 = vunpack.c.l.s4 1983009808
    %v216 = vunpack.c.0.s8 %v215
    %v217 = vlaneseq
    %v218 = vshrl.u32 %v217, 7
    %v219 = vsub.s32 %v216, %v218
    %v220 = vrot.slane %v212, %v219
    %v222 = vunpack.c.l.s4 1983009808
    %v223 = vunpack.c.0.s8 %v222
    %v224 = vlaneseq
    %v225 = vshrl.u32 %v224, 7
    %v226 = vsub.s32 %v223, %v225
    %v227 = vrot.slane %v213, %v226
    %v228 = vcombine.low %v204, %v220
    %v229 = vcombine.high %v204, %v220
    %v231 = vunpack.c.l.s4 1934713408
    %v232 = vunpack.c.0.s8 %v231
    %v233 = vlaneseq
    %v234 = vshrl.u32 %v233, 7
    %v235 = vsub.s32 %v232, %v234
    %v236 = vrot.slane %v228, %v235
    %v238 = vunpack.c.l.s4 1934713408
    %v239 = vunpack.c.0.s8 %v238
    %v240 = vlaneseq
    %v241 = vshrl.u32 %v240, 7
    %v242 = vsub.s32 %v239, %v241
    %v243 = vrot.slane %v229, %v242
    %v244 = vcombine.low %v211, %v227
    %v245 = vcombine.high %v211, %v227
    %v247 = vunpack.c.l.s4 1934713408
    %v248 = vunpack.c.0.s8 %v247
    %v249 = vlaneseq
    %v250 = vshrl.u32 %v249, 7
    %v251 = vsub.s32 %v248, %v250
    %v252 = vrot.slane %v244, %v251
    %v254 = vunpack.c.l.s4 1934713408
    %v255 = vunpack.c.0.s8 %v254
    %v256 = vlaneseq
    %v257 = vshrl.u32 %v256, 7
    %v258 = vsub.s32 %v255, %v257
    %v259 = vrot.slane %v245, %v258
    %v260 = vcombine.high %v236, 0.0
    %v261 = vcombine.high %v243, 0.0
    %v262 = vcombine.high %v252, 0.0
    %v263 = vcombine.high %v259, 0.0
    %v264 = vcombine.low %v173, %v187
    %v265 = vcombine.high %v173, %v187
    %v267 = vunpack.c.l.s4 1983009808
    %v268 = vunpack.c.0.s8 %v267
    %v269 = vlaneseq
    %v270 = vshrl.u32 %v269, 7
    %v271 = vsub.s32 %v268, %v270
    %v272 = vrot.slane %v264, %v271
    %v274 = vunpack.c.l.s4 1983009808
    %v275 = vunpack.c.0.s8 %v274
    %v276 = vlaneseq
    %v277 = vshrl.u32 %v276, 7
    %v278 = vsub.s32 %v275, %v277
    %v279 = vrot.slane %v265, %v278
    %v280 = vcombine.low %v181, %v193
    %v281 = vcombine.high %v181, %v193
    %v283 = vunpack.c.l.s4 1983009808
    %v284 = vunpack.c.0.s8 %v283
    %v285 = vlaneseq
    %v286 = vshrl.u32 %v285, 7
    %v287 = vsub.s32 %v284, %v286
    %v288 = vrot.slane %v280, %v287
    %v290 = vunpack.c.l.s4 1983009808
    %v291 = vunpack.c.0.s8 %v290
    %v292 = vlaneseq
    %v293 = vshrl.u32 %v292, 7
    %v294 = vsub.s32 %v291, %v293
    %v295 = vrot.slane %v281, %v294
    %v296 = vcombine.low %v272, %v288
    %v297 = vcombine.high %v272, %v288
    %v299 = vunpack.c.l.s4 1934713408
    %v300 = vunpack.c.0.s8 %v299
    %v301 = vlaneseq
    %v302 = vshrl.u32 %v301, 7
    %v303 = vsub.s32 %v300, %v302
    %v304 = vrot.slane %v296, %v303
    %v306 = vunpack.c.l.s4 1934713408
    %v307 = vunpack.c.0.s8 %v306
    %v308 = vlaneseq
    %v309 = vshrl.u32 %v308, 7
    %v310 = vsub.s32 %v307, %v309
    %v311 = vrot.slane %v297, %v310
    %v312 = vcombine.low %v279, %v295
    %v313 = vcombine.high %v279, %v295
    %v315 = vunpack.c.l.s4 1934713408
    %v316 = vunpack.c.0.s8 %v315
    %v317 = vlaneseq
    %v318 = vshrl.u32 %v317, 7
    %v319 = vsub.s32 %v316, %v318
    %v320 = vrot.slane %v312, %v319
    %v322 = vunpack.c.l.s4 1934713408
    %v323 = vunpack.c.0.s8 %v322
    %v324 = vlaneseq
    %v325 = vshrl.u32 %v324, 7
    %v326 = vsub.s32 %v323, %v325
    %v327 = vrot.slane %v313, %v326
    %v328 = vcombine.high %v304, 0.0
    %v329 = vcombine.high %v311, 0.0
    %v330 = vcombine.high %v320, 0.0
    %v331 = vcombine.high %v327, 0.0
    %332 = vrot.lane.b32.xlu0 %v170, 96
    %v333 = vpop.permute.xlu0 %332
    %334 = vrot.lane.b32.xlu0 %v173, 96
    %v335 = vpop.permute.xlu0 %334
    %336 = vrot.lane.b32.xlu0 %v179, 96
    %v337 = vpop.permute.xlu0 %336
    %338 = vrot.lane.b32.xlu0 %v181, 96
    %v339 = vpop.permute.xlu0 %338
    %340 = vrot.lane.b32.xlu0 %v185, 96
    %v341 = vpop.permute.xlu0 %340
    %342 = vrot.lane.b32.xlu0 %v187, 96
    %v343 = vpop.permute.xlu0 %342
    %344 = vrot.lane.b32.xlu0 %v191, 96
    %v345 = vpop.permute.xlu0 %344
    %346 = vrot.lane.b32.xlu0 %v193, 96
    %v347 = vpop.permute.xlu0 %346
    %v356 = vcombine.low %v333, %v341
    %v357 = vcombine.high %v333, %v341
    %v359 = vunpack.c.l.s4 1983009808
    %v360 = vunpack.c.0.s8 %v359
    %v361 = vlaneseq
    %v362 = vshrl.u32 %v361, 7
    %v363 = vsub.s32 %v360, %v362
    %v364 = vrot.slane %v356, %v363
    %v366 = vunpack.c.l.s4 1983009808
    %v367 = vunpack.c.0.s8 %v366
    %v368 = vlaneseq
    %v369 = vshrl.u32 %v368, 7
    %v370 = vsub.s32 %v367, %v369
    %v371 = vrot.slane %v357, %v370
    %v372 = vcombine.low %v337, %v345
    %v373 = vcombine.high %v337, %v345
    %v375 = vunpack.c.l.s4 1983009808
    %v376 = vunpack.c.0.s8 %v375
    %v377 = vlaneseq
    %v378 = vshrl.u32 %v377, 7
    %v379 = vsub.s32 %v376, %v378
    %v380 = vrot.slane %v372, %v379
    %v382 = vunpack.c.l.s4 1983009808
    %v383 = vunpack.c.0.s8 %v382
    %v384 = vlaneseq
    %v385 = vshrl.u32 %v384, 7
    %v386 = vsub.s32 %v383, %v385
    %v387 = vrot.slane %v373, %v386
    %v388 = vcombine.low %v364, %v380
    %v389 = vcombine.high %v364, %v380
    %v391 = vunpack.c.l.s4 1934713408
    %v392 = vunpack.c.0.s8 %v391
    %v393 = vlaneseq
    %v394 = vshrl.u32 %v393, 7
    %v395 = vsub.s32 %v392, %v394
    %v396 = vrot.slane %v388, %v395
    %v398 = vunpack.c.l.s4 1934713408
    %v399 = vunpack.c.0.s8 %v398
    %v400 = vlaneseq
    %v401 = vshrl.u32 %v400, 7
    %v402 = vsub.s32 %v399, %v401
    %v403 = vrot.slane %v389, %v402
    %v404 = vcombine.low %v371, %v387
    %v405 = vcombine.high %v371, %v387
    %v407 = vunpack.c.l.s4 1934713408
    %v408 = vunpack.c.0.s8 %v407
    %v409 = vlaneseq
    %v410 = vshrl.u32 %v409, 7
    %v411 = vsub.s32 %v408, %v410
    %v412 = vrot.slane %v404, %v411
    %v414 = vunpack.c.l.s4 1934713408
    %v415 = vunpack.c.0.s8 %v414
    %v416 = vlaneseq
    %v417 = vshrl.u32 %v416, 7
    %v418 = vsub.s32 %v415, %v417
    %v419 = vrot.slane %v405, %v418
    %v420 = vcombine.high %v396, 0.0
    %v421 = vcombine.high %v403, 0.0
    %v422 = vcombine.high %v412, 0.0
    %v423 = vcombine.high %v419, 0.0
    %v424 = vcombine.low %v335, %v343
    %v425 = vcombine.high %v335, %v343
    %v427 = vunpack.c.l.s4 1983009808
    %v428 = vunpack.c.0.s8 %v427
    %v429 = vlaneseq
    %v430 = vshrl.u32 %v429, 7
    %v431 = vsub.s32 %v428, %v430
    %v432 = vrot.slane %v424, %v431
    %v434 = vunpack.c.l.s4 1983009808
    %v435 = vunpack.c.0.s8 %v434
    %v436 = vlaneseq
    %v437 = vshrl.u32 %v436, 7
    %v438 = vsub.s32 %v435, %v437
    %v439 = vrot.slane %v425, %v438
    %v440 = vcombine.low %v339, %v347
    %v441 = vcombine.high %v339, %v347
    %v443 = vunpack.c.l.s4 1983009808
    %v444 = vunpack.c.0.s8 %v443
    %v445 = vlaneseq
    %v446 = vshrl.u32 %v445, 7
    %v447 = vsub.s32 %v444, %v446
    %v448 = vrot.slane %v440, %v447
    %v450 = vunpack.c.l.s4 1983009808
    %v451 = vunpack.c.0.s8 %v450
    %v452 = vlaneseq
    %v453 = vshrl.u32 %v452, 7
    %v454 = vsub.s32 %v451, %v453
    %v455 = vrot.slane %v441, %v454
    %v456 = vcombine.low %v432, %v448
    %v457 = vcombine.high %v432, %v448
    %v459 = vunpack.c.l.s4 1934713408
    %v460 = vunpack.c.0.s8 %v459
    %v461 = vlaneseq
    %v462 = vshrl.u32 %v461, 7
    %v463 = vsub.s32 %v460, %v462
    %v464 = vrot.slane %v456, %v463
    %v466 = vunpack.c.l.s4 1934713408
    %v467 = vunpack.c.0.s8 %v466
    %v468 = vlaneseq
    %v469 = vshrl.u32 %v468, 7
    %v470 = vsub.s32 %v467, %v469
    %v471 = vrot.slane %v457, %v470
    %v472 = vcombine.low %v439, %v455
    %v473 = vcombine.high %v439, %v455
    %v475 = vunpack.c.l.s4 1934713408
    %v476 = vunpack.c.0.s8 %v475
    %v477 = vlaneseq
    %v478 = vshrl.u32 %v477, 7
    %v479 = vsub.s32 %v476, %v478
    %v480 = vrot.slane %v472, %v479
    %v482 = vunpack.c.l.s4 1934713408
    %v483 = vunpack.c.0.s8 %v482
    %v484 = vlaneseq
    %v485 = vshrl.u32 %v484, 7
    %v486 = vsub.s32 %v483, %v485
    %v487 = vrot.slane %v473, %v486
    %v488 = vcombine.high %v464, 0.0
    %v489 = vcombine.high %v471, 0.0
    %v490 = vcombine.high %v480, 0.0
    %v491 = vcombine.high %v487, 0.0
    %492 = vrot.lane.b32.xlu0 %v170, 64
    %v493 = vpop.permute.xlu0 %492
    %494 = vrot.lane.b32.xlu0 %v173, 64
    %v495 = vpop.permute.xlu0 %494
    %496 = vrot.lane.b32.xlu0 %v179, 64
    %v497 = vpop.permute.xlu0 %496
    %498 = vrot.lane.b32.xlu0 %v181, 64
    %v499 = vpop.permute.xlu0 %498
    %500 = vrot.lane.b32.xlu0 %v185, 64
    %v501 = vpop.permute.xlu0 %500
    %502 = vrot.lane.b32.xlu0 %v187, 64
    %v503 = vpop.permute.xlu0 %502
    %504 = vrot.lane.b32.xlu0 %v191, 64
    %v505 = vpop.permute.xlu0 %504
    %506 = vrot.lane.b32.xlu0 %v193, 64
    %v507 = vpop.permute.xlu0 %506
    %v516 = vcombine.low %v493, %v501
    %v517 = vcombine.high %v493, %v501
    %v519 = vunpack.c.l.s4 1983009808
    %v520 = vunpack.c.0.s8 %v519
    %v521 = vlaneseq
    %v522 = vshrl.u32 %v521, 7
    %v523 = vsub.s32 %v520, %v522
    %v524 = vrot.slane %v516, %v523
    %v526 = vunpack.c.l.s4 1983009808
    %v527 = vunpack.c.0.s8 %v526
    %v528 = vlaneseq
    %v529 = vshrl.u32 %v528, 7
    %v530 = vsub.s32 %v527, %v529
    %v531 = vrot.slane %v517, %v530
    %v532 = vcombine.low %v497, %v505
    %v533 = vcombine.high %v497, %v505
    %v535 = vunpack.c.l.s4 1983009808
    %v536 = vunpack.c.0.s8 %v535
    %v537 = vlaneseq
    %v538 = vshrl.u32 %v537, 7
    %v539 = vsub.s32 %v536, %v538
    %v540 = vrot.slane %v532, %v539
    %v542 = vunpack.c.l.s4 1983009808
    %v543 = vunpack.c.0.s8 %v542
    %v544 = vlaneseq
    %v545 = vshrl.u32 %v544, 7
    %v546 = vsub.s32 %v543, %v545
    %v547 = vrot.slane %v533, %v546
    %v548 = vcombine.low %v524, %v540
    %v549 = vcombine.high %v524, %v540
    %v551 = vunpack.c.l.s4 1934713408
    %v552 = vunpack.c.0.s8 %v551
    %v553 = vlaneseq
    %v554 = vshrl.u32 %v553, 7
    %v555 = vsub.s32 %v552, %v554
    %v556 = vrot.slane %v548, %v555
    %v558 = vunpack.c.l.s4 1934713408
    %v559 = vunpack.c.0.s8 %v558
    %v560 = vlaneseq
    %v561 = vshrl.u32 %v560, 7
    %v562 = vsub.s32 %v559, %v561
    %v563 = vrot.slane %v549, %v562
    %v564 = vcombine.low %v531, %v547
    %v565 = vcombine.high %v531, %v547
    %v567 = vunpack.c.l.s4 1934713408
    %v568 = vunpack.c.0.s8 %v567
    %v569 = vlaneseq
    %v570 = vshrl.u32 %v569, 7
    %v571 = vsub.s32 %v568, %v570
    %v572 = vrot.slane %v564, %v571
    %v574 = vunpack.c.l.s4 1934713408
    %v575 = vunpack.c.0.s8 %v574
    %v576 = vlaneseq
    %v577 = vshrl.u32 %v576, 7
    %v578 = vsub.s32 %v575, %v577
    %v579 = vrot.slane %v565, %v578
    %v580 = vcombine.high %v556, 0.0
    %v581 = vcombine.high %v563, 0.0
    %v582 = vcombine.high %v572, 0.0
    %v583 = vcombine.high %v579, 0.0
    %v584 = vcombine.low %v495, %v503
    %v585 = vcombine.high %v495, %v503
    %v587 = vunpack.c.l.s4 1983009808
    %v588 = vunpack.c.0.s8 %v587
    %v589 = vlaneseq
    %v590 = vshrl.u32 %v589, 7
    %v591 = vsub.s32 %v588, %v590
    %v592 = vrot.slane %v584, %v591
    %v594 = vunpack.c.l.s4 1983009808
    %v595 = vunpack.c.0.s8 %v594
    %v596 = vlaneseq
    %v597 = vshrl.u32 %v596, 7
    %v598 = vsub.s32 %v595, %v597
    %v599 = vrot.slane %v585, %v598
    %v600 = vcombine.low %v499, %v507
    %v601 = vcombine.high %v499, %v507
    %v603 = vunpack.c.l.s4 1983009808
    %v604 = vunpack.c.0.s8 %v603
    %v605 = vlaneseq
    %v606 = vshrl.u32 %v605, 7
    %v607 = vsub.s32 %v604, %v606
    %v608 = vrot.slane %v600, %v607
    %v610 = vunpack.c.l.s4 1983009808
    %v611 = vunpack.c.0.s8 %v610
    %v612 = vlaneseq
    %v613 = vshrl.u32 %v612, 7
    %v614 = vsub.s32 %v611, %v613
    %v615 = vrot.slane %v601, %v614
    %v616 = vcombine.low %v592, %v608
    %v617 = vcombine.high %v592, %v608
    %v619 = vunpack.c.l.s4 1934713408
    %v620 = vunpack.c.0.s8 %v619
    %v621 = vlaneseq
    %v622 = vshrl.u32 %v621, 7
    %v623 = vsub.s32 %v620, %v622
    %v624 = vrot.slane %v616, %v623
    %v626 = vunpack.c.l.s4 1934713408
    %v627 = vunpack.c.0.s8 %v626
    %v628 = vlaneseq
    %v629 = vshrl.u32 %v628, 7
    %v630 = vsub.s32 %v627, %v629
    %v631 = vrot.slane %v617, %v630
    %v632 = vcombine.low %v599, %v615
    %v633 = vcombine.high %v599, %v615
    %v635 = vunpack.c.l.s4 1934713408
    %v636 = vunpack.c.0.s8 %v635
    %v637 = vlaneseq
    %v638 = vshrl.u32 %v637, 7
    %v639 = vsub.s32 %v636, %v638
    %v640 = vrot.slane %v632, %v639
    %v642 = vunpack.c.l.s4 1934713408
    %v643 = vunpack.c.0.s8 %v642
    %v644 = vlaneseq
    %v645 = vshrl.u32 %v644, 7
    %v646 = vsub.s32 %v643, %v645
    %v647 = vrot.slane %v633, %v646
    %v648 = vcombine.high %v624, 0.0
    %v649 = vcombine.high %v631, 0.0
    %v650 = vcombine.high %v640, 0.0
    %v651 = vcombine.high %v647, 0.0
    %v652 = vcombine.low %v236, %v243
    %v654 = vunpack.c.l.s4 1983009808
    %v655 = vunpack.c.0.s8 %v654
    %v656 = vlaneseq
    %v657 = vshrl.u32 %v656, 7
    %v658 = vsub.s32 %v655, %v657
    %v659 = vrot.slane %v652, %v658
    %v660 = vcombine.low %v260, %v261
    %v662 = vunpack.c.l.s4 1983009808
    %v663 = vunpack.c.0.s8 %v662
    %v664 = vlaneseq
    %v665 = vshrl.u32 %v664, 7
    %v666 = vsub.s32 %v663, %v665
    %v667 = vrot.slane %v660, %v666
    %v668 = vcombine.low %v252, %v259
    %v670 = vunpack.c.l.s4 1983009808
    %v671 = vunpack.c.0.s8 %v670
    %v672 = vlaneseq
    %v673 = vshrl.u32 %v672, 7
    %v674 = vsub.s32 %v671, %v673
    %v675 = vrot.slane %v668, %v674
    %v676 = vcombine.low %v262, %v263
    %v678 = vunpack.c.l.s4 1983009808
    %v679 = vunpack.c.0.s8 %v678
    %v680 = vlaneseq
    %v681 = vshrl.u32 %v680, 7
    %v682 = vsub.s32 %v679, %v681
    %v683 = vrot.slane %v676, %v682
    %v684 = vcombine.low %v659, %v667
    %v685 = vcombine.high %v659, %v667
    %v687 = vunpack.c.l.s4 1934713408
    %v688 = vunpack.c.0.s8 %v687
    %v689 = vlaneseq
    %v690 = vshrl.u32 %v689, 7
    %v691 = vsub.s32 %v688, %v690
    %v692 = vrot.slane %v684, %v691
    %v694 = vunpack.c.l.s4 1934713408
    %v695 = vunpack.c.0.s8 %v694
    %v696 = vlaneseq
    %v697 = vshrl.u32 %v696, 7
    %v698 = vsub.s32 %v695, %v697
    %v699 = vrot.slane %v685, %v698
    %v700 = vcombine.low %v675, %v683
    %v701 = vcombine.high %v675, %v683
    %v703 = vunpack.c.l.s4 1934713408
    %v704 = vunpack.c.0.s8 %v703
    %v705 = vlaneseq
    %v706 = vshrl.u32 %v705, 7
    %v707 = vsub.s32 %v704, %v706
    %v708 = vrot.slane %v700, %v707
    %v710 = vunpack.c.l.s4 1934713408
    %v711 = vunpack.c.0.s8 %v710
    %v712 = vlaneseq
    %v713 = vshrl.u32 %v712, 7
    %v714 = vsub.s32 %v711, %v713
    %v715 = vrot.slane %v701, %v714
    %v716 = vcombine.low %v692, %v708
    %v717 = vcombine.high %v692, %v708
    %v718 = vcombine.low %v699, %v715
    %v719 = vcombine.high %v699, %v715
    %v720 = vcombine.low %v304, %v311
    %v722 = vunpack.c.l.s4 1983009808
    %v723 = vunpack.c.0.s8 %v722
    %v724 = vlaneseq
    %v725 = vshrl.u32 %v724, 7
    %v726 = vsub.s32 %v723, %v725
    %v727 = vrot.slane %v720, %v726
    %v728 = vcombine.low %v328, %v329
    %v730 = vunpack.c.l.s4 1983009808
    %v731 = vunpack.c.0.s8 %v730
    %v732 = vlaneseq
    %v733 = vshrl.u32 %v732, 7
    %v734 = vsub.s32 %v731, %v733
    %v735 = vrot.slane %v728, %v734
    %v736 = vcombine.low %v320, %v327
    %v738 = vunpack.c.l.s4 1983009808
    %v739 = vunpack.c.0.s8 %v738
    %v740 = vlaneseq
    %v741 = vshrl.u32 %v740, 7
    %v742 = vsub.s32 %v739, %v741
    %v743 = vrot.slane %v736, %v742
    %v744 = vcombine.low %v330, %v331
    %v746 = vunpack.c.l.s4 1983009808
    %v747 = vunpack.c.0.s8 %v746
    %v748 = vlaneseq
    %v749 = vshrl.u32 %v748, 7
    %v750 = vsub.s32 %v747, %v749
    %v751 = vrot.slane %v744, %v750
    %v752 = vcombine.low %v727, %v735
    %v753 = vcombine.high %v727, %v735
    %v755 = vunpack.c.l.s4 1934713408
    %v756 = vunpack.c.0.s8 %v755
    %v757 = vlaneseq
    %v758 = vshrl.u32 %v757, 7
    %v759 = vsub.s32 %v756, %v758
    %v760 = vrot.slane %v752, %v759
    %v762 = vunpack.c.l.s4 1934713408
    %v763 = vunpack.c.0.s8 %v762
    %v764 = vlaneseq
    %v765 = vshrl.u32 %v764, 7
    %v766 = vsub.s32 %v763, %v765
    %v767 = vrot.slane %v753, %v766
    %v768 = vcombine.low %v743, %v751
    %v769 = vcombine.high %v743, %v751
    %v771 = vunpack.c.l.s4 1934713408
    %v772 = vunpack.c.0.s8 %v771
    %v773 = vlaneseq
    %v774 = vshrl.u32 %v773, 7
    %v775 = vsub.s32 %v772, %v774
    %v776 = vrot.slane %v768, %v775
    %v778 = vunpack.c.l.s4 1934713408
    %v779 = vunpack.c.0.s8 %v778
    %v780 = vlaneseq
    %v781 = vshrl.u32 %v780, 7
    %v782 = vsub.s32 %v779, %v781
    %v783 = vrot.slane %v769, %v782
    %v784 = vcombine.low %v760, %v776
    %v785 = vcombine.high %v760, %v776
    %v786 = vcombine.low %v767, %v783
    %v787 = vcombine.high %v767, %v783
    %v788 = vcombine.low %v396, %v403
    %v790 = vunpack.c.l.s4 1983009808
    %v791 = vunpack.c.0.s8 %v790
    %v792 = vlaneseq
    %v793 = vshrl.u32 %v792, 7
    %v794 = vsub.s32 %v791, %v793
    %v795 = vrot.slane %v788, %v794
    %v796 = vcombine.low %v420, %v421
    %v798 = vunpack.c.l.s4 1983009808
    %v799 = vunpack.c.0.s8 %v798
    %v800 = vlaneseq
    %v801 = vshrl.u32 %v800, 7
    %v802 = vsub.s32 %v799, %v801
    %v803 = vrot.slane %v796, %v802
    %v804 = vcombine.low %v412, %v419
    %v806 = vunpack.c.l.s4 1983009808
    %v807 = vunpack.c.0.s8 %v806
    %v808 = vlaneseq
    %v809 = vshrl.u32 %v808, 7
    %v810 = vsub.s32 %v807, %v809
    %v811 = vrot.slane %v804, %v810
    %v812 = vcombine.low %v422, %v423
    %v814 = vunpack.c.l.s4 1983009808
    %v815 = vunpack.c.0.s8 %v814
    %v816 = vlaneseq
    %v817 = vshrl.u32 %v816, 7
    %v818 = vsub.s32 %v815, %v817
    %v819 = vrot.slane %v812, %v818
    %v820 = vcombine.low %v795, %v803
    %v821 = vcombine.high %v795, %v803
    %v823 = vunpack.c.l.s4 1934713408
    %v824 = vunpack.c.0.s8 %v823
    %v825 = vlaneseq
    %v826 = vshrl.u32 %v825, 7
    %v827 = vsub.s32 %v824, %v826
    %v828 = vrot.slane %v820, %v827
    %v830 = vunpack.c.l.s4 1934713408
    %v831 = vunpack.c.0.s8 %v830
    %v832 = vlaneseq
    %v833 = vshrl.u32 %v832, 7
    %v834 = vsub.s32 %v831, %v833
    %v835 = vrot.slane %v821, %v834
    %v836 = vcombine.low %v811, %v819
    %v837 = vcombine.high %v811, %v819
    %v839 = vunpack.c.l.s4 1934713408
    %v840 = vunpack.c.0.s8 %v839
    %v841 = vlaneseq
    %v842 = vshrl.u32 %v841, 7
    %v843 = vsub.s32 %v840, %v842
    %v844 = vrot.slane %v836, %v843
    %v846 = vunpack.c.l.s4 1934713408
    %v847 = vunpack.c.0.s8 %v846
    %v848 = vlaneseq
    %v849 = vshrl.u32 %v848, 7
    %v850 = vsub.s32 %v847, %v849
    %v851 = vrot.slane %v837, %v850
    %v852 = vcombine.low %v828, %v844
    %v853 = vcombine.high %v828, %v844
    %v854 = vcombine.low %v835, %v851
    %v855 = vcombine.high %v835, %v851
    %v856 = vcombine.low %v464, %v471
    %v858 = vunpack.c.l.s4 1983009808
    %v859 = vunpack.c.0.s8 %v858
    %v860 = vlaneseq
    %v861 = vshrl.u32 %v860, 7
    %v862 = vsub.s32 %v859, %v861
    %v863 = vrot.slane %v856, %v862
    %v864 = vcombine.low %v488, %v489
    %v866 = vunpack.c.l.s4 1983009808
    %v867 = vunpack.c.0.s8 %v866
    %v868 = vlaneseq
    %v869 = vshrl.u32 %v868, 7
    %v870 = vsub.s32 %v867, %v869
    %v871 = vrot.slane %v864, %v870
    %v872 = vcombine.low %v480, %v487
    %v874 = vunpack.c.l.s4 1983009808
    %v875 = vunpack.c.0.s8 %v874
    %v876 = vlaneseq
    %v877 = vshrl.u32 %v876, 7
    %v878 = vsub.s32 %v875, %v877
    %v879 = vrot.slane %v872, %v878
    %v880 = vcombine.low %v490, %v491
    %v882 = vunpack.c.l.s4 1983009808
    %v883 = vunpack.c.0.s8 %v882
    %v884 = vlaneseq
    %v885 = vshrl.u32 %v884, 7
    %v886 = vsub.s32 %v883, %v885
    %v887 = vrot.slane %v880, %v886
    %v888 = vcombine.low %v863, %v871
    %v889 = vcombine.high %v863, %v871
    %v891 = vunpack.c.l.s4 1934713408
    %v892 = vunpack.c.0.s8 %v891
    %v893 = vlaneseq
    %v894 = vshrl.u32 %v893, 7
    %v895 = vsub.s32 %v892, %v894
    %v896 = vrot.slane %v888, %v895
    %v898 = vunpack.c.l.s4 1934713408
    %v899 = vunpack.c.0.s8 %v898
    %v900 = vlaneseq
    %v901 = vshrl.u32 %v900, 7
    %v902 = vsub.s32 %v899, %v901
    %v903 = vrot.slane %v889, %v902
    %v904 = vcombine.low %v879, %v887
    %v905 = vcombine.high %v879, %v887
    %v907 = vunpack.c.l.s4 1934713408
    %v908 = vunpack.c.0.s8 %v907
    %v909 = vlaneseq
    %v910 = vshrl.u32 %v909, 7
    %v911 = vsub.s32 %v908, %v910
    %v912 = vrot.slane %v904, %v911
    %v914 = vunpack.c.l.s4 1934713408
    %v915 = vunpack.c.0.s8 %v914
    %v916 = vlaneseq
    %v917 = vshrl.u32 %v916, 7
    %v918 = vsub.s32 %v915, %v917
    %v919 = vrot.slane %v905, %v918
    %v920 = vcombine.low %v896, %v912
    %v921 = vcombine.high %v896, %v912
    %v922 = vcombine.low %v903, %v919
    %v923 = vcombine.high %v903, %v919
    %v924 = vcombine.low %v556, %v563
    %v926 = vunpack.c.l.s4 1983009808
    %v927 = vunpack.c.0.s8 %v926
    %v928 = vlaneseq
    %v929 = vshrl.u32 %v928, 7
    %v930 = vsub.s32 %v927, %v929
    %v931 = vrot.slane %v924, %v930
    %v932 = vcombine.low %v580, %v581
    %v934 = vunpack.c.l.s4 1983009808
    %v935 = vunpack.c.0.s8 %v934
    %v936 = vlaneseq
    %v937 = vshrl.u32 %v936, 7
    %v938 = vsub.s32 %v935, %v937
    %v939 = vrot.slane %v932, %v938
    %v940 = vcombine.low %v572, %v579
    %v942 = vunpack.c.l.s4 1983009808
    %v943 = vunpack.c.0.s8 %v942
    %v944 = vlaneseq
    %v945 = vshrl.u32 %v944, 7
    %v946 = vsub.s32 %v943, %v945
    %v947 = vrot.slane %v940, %v946
    %v948 = vcombine.low %v582, %v583
    %v950 = vunpack.c.l.s4 1983009808
    %v951 = vunpack.c.0.s8 %v950
    %v952 = vlaneseq
    %v953 = vshrl.u32 %v952, 7
    %v954 = vsub.s32 %v951, %v953
    %v955 = vrot.slane %v948, %v954
    %v956 = vcombine.low %v931, %v939
    %v957 = vcombine.high %v931, %v939
    %v959 = vunpack.c.l.s4 1934713408
    %v960 = vunpack.c.0.s8 %v959
    %v961 = vlaneseq
    %v962 = vshrl.u32 %v961, 7
    %v963 = vsub.s32 %v960, %v962
    %v964 = vrot.slane %v956, %v963
    %v966 = vunpack.c.l.s4 1934713408
    %v967 = vunpack.c.0.s8 %v966
    %v968 = vlaneseq
    %v969 = vshrl.u32 %v968, 7
    %v970 = vsub.s32 %v967, %v969
    %v971 = vrot.slane %v957, %v970
    %v972 = vcombine.low %v947, %v955
    %v973 = vcombine.high %v947, %v955
    %v975 = vunpack.c.l.s4 1934713408
    %v976 = vunpack.c.0.s8 %v975
    %v977 = vlaneseq
    %v978 = vshrl.u32 %v977, 7
    %v979 = vsub.s32 %v976, %v978
    %v980 = vrot.slane %v972, %v979
    %v982 = vunpack.c.l.s4 1934713408
    %v983 = vunpack.c.0.s8 %v982
    %v984 = vlaneseq
    %v985 = vshrl.u32 %v984, 7
    %v986 = vsub.s32 %v983, %v985
    %v987 = vrot.slane %v973, %v986
    %v988 = vcombine.low %v964, %v980
    %v989 = vcombine.high %v964, %v980
    %v990 = vcombine.low %v971, %v987
    %v991 = vcombine.high %v971, %v987
    %v992 = vcombine.low %v624, %v631
    %v994 = vunpack.c.l.s4 1983009808
    %v995 = vunpack.c.0.s8 %v994
    %v996 = vlaneseq
    %v997 = vshrl.u32 %v996, 7
    %v998 = vsub.s32 %v995, %v997
    %v999 = vrot.slane %v992, %v998
    %v1000 = vcombine.low %v648, %v649
    %v1002 = vunpack.c.l.s4 1983009808
    %v1003 = vunpack.c.0.s8 %v1002
    %v1004 = vlaneseq
    %v1005 = vshrl.u32 %v1004, 7
    %v1006 = vsub.s32 %v1003, %v1005
    %v1007 = vrot.slane %v1000, %v1006
    %v1008 = vcombine.low %v640, %v647
    %v1010 = vunpack.c.l.s4 1983009808
    %v1011 = vunpack.c.0.s8 %v1010
    %v1012 = vlaneseq
    %v1013 = vshrl.u32 %v1012, 7
    %v1014 = vsub.s32 %v1011, %v1013
    %v1015 = vrot.slane %v1008, %v1014
    %v1016 = vcombine.low %v650, %v651
    %v1018 = vunpack.c.l.s4 1983009808
    %v1019 = vunpack.c.0.s8 %v1018
    %v1020 = vlaneseq
    %v1021 = vshrl.u32 %v1020, 7
    %v1022 = vsub.s32 %v1019, %v1021
    %v1023 = vrot.slane %v1016, %v1022
    %v1024 = vcombine.low %v999, %v1007
    %v1025 = vcombine.high %v999, %v1007
    %v1027 = vunpack.c.l.s4 1934713408
    %v1028 = vunpack.c.0.s8 %v1027
    %v1029 = vlaneseq
    %v1030 = vshrl.u32 %v1029, 7
    %v1031 = vsub.s32 %v1028, %v1030
    %v1032 = vrot.slane %v1024, %v1031
    %v1034 = vunpack.c.l.s4 1934713408
    %v1035 = vunpack.c.0.s8 %v1034
    %v1036 = vlaneseq
    %v1037 = vshrl.u32 %v1036, 7
    %v1038 = vsub.s32 %v1035, %v1037
    %v1039 = vrot.slane %v1025, %v1038
    %v1040 = vcombine.low %v1015, %v1023
    %v1041 = vcombine.high %v1015, %v1023
    %v1043 = vunpack.c.l.s4 1934713408
    %v1044 = vunpack.c.0.s8 %v1043
    %v1045 = vlaneseq
    %v1046 = vshrl.u32 %v1045, 7
    %v1047 = vsub.s32 %v1044, %v1046
    %v1048 = vrot.slane %v1040, %v1047
    %v1050 = vunpack.c.l.s4 1934713408
    %v1051 = vunpack.c.0.s8 %v1050
    %v1052 = vlaneseq
    %v1053 = vshrl.u32 %v1052, 7
    %v1054 = vsub.s32 %v1051, %v1053
    %v1055 = vrot.slane %v1041, %v1054
    %v1056 = vcombine.low %v1032, %v1048
    %v1057 = vcombine.high %v1032, %v1048
    %v1058 = vcombine.low %v1039, %v1055
    %v1059 = vcombine.high %v1039, %v1055
    %v1060 = vpack.c.bf16 %v716, %v716
    %v1061 = vpack.c.bf16 %v717, %v717
    %v1062 = vpack.c.bf16 %v718, %v718
    %v1063 = vpack.c.bf16 %v719, %v719
    %v1064 = vpack.c.bf16 %v784, %v784
    %v1065 = vpack.c.bf16 %v785, %v785
    %v1066 = vpack.c.bf16 %v786, %v786
    %v1067 = vpack.c.bf16 %v787, %v787
    %v1068 = vpack.c.bf16 %v852, %v852
    %v1069 = vpack.c.bf16 %v853, %v853
    %v1070 = vpack.c.bf16 %v854, %v854
    %v1071 = vpack.c.bf16 %v855, %v855
    %v1072 = vpack.c.bf16 %v920, %v920
    %v1073 = vpack.c.bf16 %v921, %v921
    %v1074 = vpack.c.bf16 %v922, %v922
    %v1075 = vpack.c.bf16 %v923, %v923
    %vm1076 = vcmask 64512
    %v1078 = vsel %vm1076, %v1060, 0
    %v1081 = vsel %vm1076, %v1068, 0
    %1083 = vmatprep.subr.bf16.mxu0 0
    %1084 = vmatpush1.bf16.xpose.msra.mxu0 %v1081
    %1085 = vmatprep.subr.bf16.mxu0 0
    %1086 = vmatpush1.bf16.xpose.msra.mxu0 0
    %1087 = vmatprep.subr.bf16.mxu0 0
    %1088 = vmatpush1.bf16.xpose.msra.mxu0 0
    %1089 = vmatprep.subr.bf16.mxu0 0
    %1090 = vmatpush1.bf16.xpose.msra.mxu0 0
    %1091 = vmatprep.subr.bf16.mxu0 0
    %1092 = vmatpush1.bf16.xpose.msra.mxu0 0
    %1093 = vmatprep.subr.bf16.mxu0 0
    %1094 = vmatpush1.bf16.xpose.msra.mxu0 0
    %1095 = vmatprep.subr.bf16.mxu0 0
    %1096 = vmatpush1.bf16.xpose.msra.mxu0 0
    %1097 = vmatprep.subr.bf16.mxu0 0
    %1098 = vmatpush1.bf16.xpose.msra.mxu0 0
    %1099 = vmatprep.subr.bf16.mxu0 0
    %1100 = vmatpush1.bf16.xpose.msra.mxu0 0
    %1101 = vmatprep.subr.bf16.mxu0 0
    %1102 = vmatpush1.bf16.xpose.msra.mxu0 0
    %1103 = vmatprep.subr.bf16.mxu0 0
    %1104 = vmatpush1.bf16.xpose.msra.mxu0 0
    %1105 = vmatprep.subr.bf16.mxu0 0
    %1106 = vmatpush1.bf16.xpose.msra.mxu0 0
    %1107 = vmatprep.subr.bf16.mxu0 0
    %1108 = vmatpush1.bf16.xpose.msra.mxu0 0
    %1109 = vmatprep.subr.bf16.mxu0 0
    %1110 = vmatpush1.bf16.xpose.msra.mxu0 0
    %1111 = vmatprep.subr.bf16.mxu0 0
    %1112 = vmatpush1.bf16.xpose.msra.mxu0 0
    %1113 = vmatprep.subr.bf16.mxu0 0
    %1114 = vmatpush1.bf16.xpose.msra.mxu0 0
    %1115 = vmatprep.mubr.bf16.mxu0 0
    %1116 = vmatmul.mubr.bf16.gmra.mrb[0].mxu0 %v1078
    %v1117 = vpop.f32.mrb[0].mxu0
    %v1118 = vadd.f32 0.0, %v1117
    %v1119 = vpop.f32.mrb[0].mxu0
    %v1120 = vpop.f32.mrb[0].mxu0
    %v1121 = vpop.f32.mrb[0].mxu0
    %1122 = vdwg.mxu0
    %v1124 = vsel %vm1076, %v1061, 0
    %v1127 = vsel %vm1076, %v1069, 0
    %1129 = vmatprep.subr.bf16.mxu0 0
    %1130 = vmatpush1.bf16.xpose.msra.mxu0 %v1127
    %1131 = vmatprep.subr.bf16.mxu0 0
    %1132 = vmatpush1.bf16.xpose.msra.mxu0 0
    %1133 = vmatprep.subr.bf16.mxu0 0
    %1134 = vmatpush1.bf16.xpose.msra.mxu0 0
    %1135 = vmatprep.subr.bf16.mxu0 0
    %1136 = vmatpush1.bf16.xpose.msra.mxu0 0
    %1137 = vmatprep.subr.bf16.mxu0 0
    %1138 = vmatpush1.bf16.xpose.msra.mxu0 0
    %1139 = vmatprep.subr.bf16.mxu0 0
    %1140 = vmatpush1.bf16.xpose.msra.mxu0 0
    %1141 = vmatprep.subr.bf16.mxu0 0
    %1142 = vmatpush1.bf16.xpose.msra.mxu0 0
    %1143 = vmatprep.subr.bf16.mxu0 0
    %1144 = vmatpush1.bf16.xpose.msra.mxu0 0
    %1145 = vmatprep.subr.bf16.mxu0 0
    %1146 = vmatpush1.bf16.xpose.msra.mxu0 0
    %1147 = vmatprep.subr.bf16.mxu0 0
    %1148 = vmatpush1.bf16.xpose.msra.mxu0 0
    %1149 = vmatprep.subr.bf16.mxu0 0
    %1150 = vmatpush1.bf16.xpose.msra.mxu0 0
    %1151 = vmatprep.subr.bf16.mxu0 0
    %1152 = vmatpush1.bf16.xpose.msra.mxu0 0
    %1153 = vmatprep.subr.bf16.mxu0 0
    %1154 = vmatpush1.bf16.xpose.msra.mxu0 0
    %1155 = vmatprep.subr.bf16.mxu0 0
    %1156 = vmatpush1.bf16.xpose.msra.mxu0 0
    %1157 = vmatprep.subr.bf16.mxu0 0
    %1158 = vmatpush1.bf16.xpose.msra.mxu0 0
    %1159 = vmatprep.subr.bf16.mxu0 0
    %1160 = vmatpush1.bf16.xpose.msra.mxu0 0
    %1161 = vmatprep.mubr.bf16.mxu0 0
    %1162 = vmatmul.mubr.bf16.gmra.mrb[0].mxu0 %v1124
    %v1163 = vpop.f32.mrb[0].mxu0
    %v1164 = vadd.f32 0.0, %v1163
    %v1165 = vpop.f32.mrb[0].mxu0
    %v1166 = vpop.f32.mrb[0].mxu0
    %v1167 = vpop.f32.mrb[0].mxu0
    %1168 = vdwg.mxu0
    %v1170 = vsel %vm1076, %v1062, 0
    %v1173 = vsel %vm1076, %v1070, 0
    %1175 = vmatprep.subr.bf16.mxu0 0
    %1176 = vmatpush1.bf16.xpose.msra.mxu0 %v1173
    %1177 = vmatprep.subr.bf16.mxu0 0
    %1178 = vmatpush1.bf16.xpose.msra.mxu0 0
    %1179 = vmatprep.subr.bf16.mxu0 0
    %1180 = vmatpush1.bf16.xpose.msra.mxu0 0
    %1181 = vmatprep.subr.bf16.mxu0 0
    %1182 = vmatpush1.bf16.xpose.msra.mxu0 0
    %1183 = vmatprep.subr.bf16.mxu0 0
    %1184 = vmatpush1.bf16.xpose.msra.mxu0 0
    %1185 = vmatprep.subr.bf16.mxu0 0
    %1186 = vmatpush1.bf16.xpose.msra.mxu0 0
    %1187 = vmatprep.subr.bf16.mxu0 0
    %1188 = vmatpush1.bf16.xpose.msra.mxu0 0
    %1189 = vmatprep.subr.bf16.mxu0 0
    %1190 = vmatpush1.bf16.xpose.msra.mxu0 0
    %1191 = vmatprep.subr.bf16.mxu0 0
    %1192 = vmatpush1.bf16.xpose.msra.mxu0 0
    %1193 = vmatprep.subr.bf16.mxu0 0
    %1194 = vmatpush1.bf16.xpose.msra.mxu0 0
    %1195 = vmatprep.subr.bf16.mxu0 0
    %1196 = vmatpush1.bf16.xpose.msra.mxu0 0
    %1197 = vmatprep.subr.bf16.mxu0 0
    %1198 = vmatpush1.bf16.xpose.msra.mxu0 0
    %1199 = vmatprep.subr.bf16.mxu0 0
    %1200 = vmatpush1.bf16.xpose.msra.mxu0 0
    %1201 = vmatprep.subr.bf16.mxu0 0
    %1202 = vmatpush1.bf16.xpose.msra.mxu0 0
    %1203 = vmatprep.subr.bf16.mxu0 0
    %1204 = vmatpush1.bf16.xpose.msra.mxu0 0
    %1205 = vmatprep.subr.bf16.mxu0 0
    %1206 = vmatpush1.bf16.xpose.msra.mxu0 0
    %1207 = vmatprep.mubr.bf16.mxu0 0
    %1208 = vmatmul.mubr.bf16.gmra.mrb[0].mxu0 %v1170
    %v1209 = vpop.f32.mrb[0].mxu0
    %v1210 = vadd.f32 0.0, %v1209
    %v1211 = vpop.f32.mrb[0].mxu0
    %v1212 = vpop.f32.mrb[0].mxu0
    %v1213 = vpop.f32.mrb[0].mxu0
    %1214 = vdwg.mxu0
    %v1216 = vsel %vm1076, %v1063, 0
    %v1219 = vsel %vm1076, %v1071, 0
    %1221 = vmatprep.subr.bf16.mxu0 0
    %1222 = vmatpush1.bf16.xpose.msra.mxu0 %v1219
    %1223 = vmatprep.subr.bf16.mxu0 0
    %1224 = vmatpush1.bf16.xpose.msra.mxu0 0
    %1225 = vmatprep.subr.bf16.mxu0 0
    %1226 = vmatpush1.bf16.xpose.msra.mxu0 0
    %1227 = vmatprep.subr.bf16.mxu0 0
    %1228 = vmatpush1.bf16.xpose.msra.mxu0 0
    %1229 = vmatprep.subr.bf16.mxu0 0
    %1230 = vmatpush1.bf16.xpose.msra.mxu0 0
    %1231 = vmatprep.subr.bf16.mxu0 0
    %1232 = vmatpush1.bf16.xpose.msra.mxu0 0
    %1233 = vmatprep.subr.bf16.mxu0 0
    %1234 = vmatpush1.bf16.xpose.msra.mxu0 0
    %1235 = vmatprep.subr.bf16.mxu0 0
    %1236 = vmatpush1.bf16.xpose.msra.mxu0 0
    %1237 = vmatprep.subr.bf16.mxu0 0
    %1238 = vmatpush1.bf16.xpose.msra.mxu0 0
    %1239 = vmatprep.subr.bf16.mxu0 0
    %1240 = vmatpush1.bf16.xpose.msra.mxu0 0
    %1241 = vmatprep.subr.bf16.mxu0 0
    %1242 = vmatpush1.bf16.xpose.msra.mxu0 0
    %1243 = vmatprep.subr.bf16.mxu0 0
    %1244 = vmatpush1.bf16.xpose.msra.mxu0 0
    %1245 = vmatprep.subr.bf16.mxu0 0
    %1246 = vmatpush1.bf16.xpose.msra.mxu0 0
    %1247 = vmatprep.subr.bf16.mxu0 0
    %1248 = vmatpush1.bf16.xpose.msra.mxu0 0
    %1249 = vmatprep.subr.bf16.mxu0 0
    %1250 = vmatpush1.bf16.xpose.msra.mxu0 0
    %1251 = vmatprep.subr.bf16.mxu0 0
    %1252 = vmatpush1.bf16.xpose.msra.mxu0 0
    %1253 = vmatprep.mubr.bf16.mxu0 0
    %1254 = vmatmul.mubr.bf16.gmra.mrb[0].mxu0 %v1216
    %v1255 = vpop.f32.mrb[0].mxu0
    %v1256 = vadd.f32 0.0, %v1255
    %v1257 = vpop.f32.mrb[0].mxu0
    %v1258 = vpop.f32.mrb[0].mxu0
    %v1259 = vpop.f32.mrb[0].mxu0
    %1260 = vdwg.mxu0
    %v1262 = vsel %vm1076, %v1064, 0
    %v1265 = vsel %vm1076, %v1072, 0
    %1267 = vmatprep.subr.bf16.mxu0 0
    %1268 = vmatpush1.bf16.xpose.msra.mxu0 %v1265
    %1269 = vmatprep.subr.bf16.mxu0 0
    %1270 = vmatpush1.bf16.xpose.msra.mxu0 0
    %1271 = vmatprep.subr.bf16.mxu0 0
    %1272 = vmatpush1.bf16.xpose.msra.mxu0 0
    %1273 = vmatprep.subr.bf16.mxu0 0
    %1274 = vmatpush1.bf16.xpose.msra.mxu0 0
    %1275 = vmatprep.subr.bf16.mxu0 0
    %1276 = vmatpush1.bf16.xpose.msra.mxu0 0
    %1277 = vmatprep.subr.bf16.mxu0 0
    %1278 = vmatpush1.bf16.xpose.msra.mxu0 0
    %1279 = vmatprep.subr.bf16.mxu0 0
    %1280 = vmatpush1.bf16.xpose.msra.mxu0 0
    %1281 = vmatprep.subr.bf16.mxu0 0
    %1282 = vmatpush1.bf16.xpose.msra.mxu0 0
    %1283 = vmatprep.subr.bf16.mxu0 0
    %1284 = vmatpush1.bf16.xpose.msra.mxu0 0
    %1285 = vmatprep.subr.bf16.mxu0 0
    %1286 = vmatpush1.bf16.xpose.msra.mxu0 0
    %1287 = vmatprep.subr.bf16.mxu0 0
    %1288 = vmatpush1.bf16.xpose.msra.mxu0 0
    %1289 = vmatprep.subr.bf16.mxu0 0
    %1290 = vmatpush1.bf16.xpose.msra.mxu0 0
    %1291 = vmatprep.subr.bf16.mxu0 0
    %1292 = vmatpush1.bf16.xpose.msra.mxu0 0
    %1293 = vmatprep.subr.bf16.mxu0 0
    %1294 = vmatpush1.bf16.xpose.msra.mxu0 0
    %1295 = vmatprep.subr.bf16.mxu0 0
    %1296 = vmatpush1.bf16.xpose.msra.mxu0 0
    %1297 = vmatprep.subr.bf16.mxu0 0
    %1298 = vmatpush1.bf16.xpose.msra.mxu0 0
    %1299 = vmatprep.mubr.bf16.mxu0 0
    %1300 = vmatmul.mubr.bf16.gmra.mrb[0].mxu0 %v1262
    %v1301 = vpop.f32.mrb[0].mxu0
    %v1302 = vadd.f32 0.0, %v1301
    %v1303 = vpop.f32.mrb[0].mxu0
    %v1304 = vpop.f32.mrb[0].mxu0
    %v1305 = vpop.f32.mrb[0].mxu0
    %1306 = vdwg.mxu0
    %v1308 = vsel %vm1076, %v1065, 0
    %v1311 = vsel %vm1076, %v1073, 0
    %1313 = vmatprep.subr.bf16.mxu0 0
    %1314 = vmatpush1.bf16.xpose.msra.mxu0 %v1311
    %1315 = vmatprep.subr.bf16.mxu0 0
    %1316 = vmatpush1.bf16.xpose.msra.mxu0 0
    %1317 = vmatprep.subr.bf16.mxu0 0
    %1318 = vmatpush1.bf16.xpose.msra.mxu0 0
    %1319 = vmatprep.subr.bf16.mxu0 0
    %1320 = vmatpush1.bf16.xpose.msra.mxu0 0
    %1321 = vmatprep.subr.bf16.mxu0 0
    %1322 = vmatpush1.bf16.xpose.msra.mxu0 0
    %1323 = vmatprep.subr.bf16.mxu0 0
    %1324 = vmatpush1.bf16.xpose.msra.mxu0 0
    %1325 = vmatprep.subr.bf16.mxu0 0
    %1326 = vmatpush1.bf16.xpose.msra.mxu0 0
    %1327 = vmatprep.subr.bf16.mxu0 0
    %1328 = vmatpush1.bf16.xpose.msra.mxu0 0
    %1329 = vmatprep.subr.bf16.mxu0 0
    %1330 = vmatpush1.bf16.xpose.msra.mxu0 0
    %1331 = vmatprep.subr.bf16.mxu0 0
    %1332 = vmatpush1.bf16.xpose.msra.mxu0 0
    %1333 = vmatprep.subr.bf16.mxu0 0
    %1334 = vmatpush1.bf16.xpose.msra.mxu0 0
    %1335 = vmatprep.subr.bf16.mxu0 0
    %1336 = vmatpush1.bf16.xpose.msra.mxu0 0
    %1337 = vmatprep.subr.bf16.mxu0 0
    %1338 = vmatpush1.bf16.xpose.msra.mxu0 0
    %1339 = vmatprep.subr.bf16.mxu0 0
    %1340 = vmatpush1.bf16.xpose.msra.mxu0 0
    %1341 = vmatprep.subr.bf16.mxu0 0
    %1342 = vmatpush1.bf16.xpose.msra.mxu0 0
    %1343 = vmatprep.subr.bf16.mxu0 0
    %1344 = vmatpush1.bf16.xpose.msra.mxu0 0
    %1345 = vmatprep.mubr.bf16.mxu0 0
    %1346 = vmatmul.mubr.bf16.gmra.mrb[0].mxu0 %v1308
    %v1347 = vpop.f32.mrb[0].mxu0
    %v1348 = vadd.f32 0.0, %v1347
    %v1349 = vpop.f32.mrb[0].mxu0
    %v1350 = vpop.f32.mrb[0].mxu0
    %v1351 = vpop.f32.mrb[0].mxu0
    %1352 = vdwg.mxu0
    %v1354 = vsel %vm1076, %v1066, 0
    %v1357 = vsel %vm1076, %v1074, 0
    %1359 = vmatprep.subr.bf16.mxu0 0
    %1360 = vmatpush1.bf16.xpose.msra.mxu0 %v1357
    %1361 = vmatprep.subr.bf16.mxu0 0
    %1362 = vmatpush1.bf16.xpose.msra.mxu0 0
    %1363 = vmatprep.subr.bf16.mxu0 0
    %1364 = vmatpush1.bf16.xpose.msra.mxu0 0
    %1365 = vmatprep.subr.bf16.mxu0 0
    %1366 = vmatpush1.bf16.xpose.msra.mxu0 0
    %1367 = vmatprep.subr.bf16.mxu0 0
    %1368 = vmatpush1.bf16.xpose.msra.mxu0 0
    %1369 = vmatprep.subr.bf16.mxu0 0
    %1370 = vmatpush1.bf16.xpose.msra.mxu0 0
    %1371 = vmatprep.subr.bf16.mxu0 0
    %1372 = vmatpush1.bf16.xpose.msra.mxu0 0
    %1373 = vmatprep.subr.bf16.mxu0 0
    %1374 = vmatpush1.bf16.xpose.msra.mxu0 0
    %1375 = vmatprep.subr.bf16.mxu0 0
    %1376 = vmatpush1.bf16.xpose.msra.mxu0 0
    %1377 = vmatprep.subr.bf16.mxu0 0
    %1378 = vmatpush1.bf16.xpose.msra.mxu0 0
    %1379 = vmatprep.subr.bf16.mxu0 0
    %1380 = vmatpush1.bf16.xpose.msra.mxu0 0
    %1381 = vmatprep.subr.bf16.mxu0 0
    %1382 = vmatpush1.bf16.xpose.msra.mxu0 0
    %1383 = vmatprep.subr.bf16.mxu0 0
    %1384 = vmatpush1.bf16.xpose.msra.mxu0 0
    %1385 = vmatprep.subr.bf16.mxu0 0
    %1386 = vmatpush1.bf16.xpose.msra.mxu0 0
    %1387 = vmatprep.subr.bf16.mxu0 0
    %1388 = vmatpush1.bf16.xpose.msra.mxu0 0
    %1389 = vmatprep.subr.bf16.mxu0 0
    %1390 = vmatpush1.bf16.xpose.msra.mxu0 0
    %1391 = vmatprep.mubr.bf16.mxu0 0
    %1392 = vmatmul.mubr.bf16.gmra.mrb[0].mxu0 %v1354
    %v1393 = vpop.f32.mrb[0].mxu0
    %v1394 = vadd.f32 0.0, %v1393
    %v1395 = vpop.f32.mrb[0].mxu0
    %v1396 = vpop.f32.mrb[0].mxu0
    %v1397 = vpop.f32.mrb[0].mxu0
    %1398 = vdwg.mxu0
    %v1400 = vsel %vm1076, %v1067, 0
    %v1403 = vsel %vm1076, %v1075, 0
    %1405 = vmatprep.subr.bf16.mxu0 0
    %1406 = vmatpush1.bf16.xpose.msra.mxu0 %v1403
    %1407 = vmatprep.subr.bf16.mxu0 0
    %1408 = vmatpush1.bf16.xpose.msra.mxu0 0
    %1409 = vmatprep.subr.bf16.mxu0 0
    %1410 = vmatpush1.bf16.xpose.msra.mxu0 0
    %1411 = vmatprep.subr.bf16.mxu0 0
    %1412 = vmatpush1.bf16.xpose.msra.mxu0 0
    %1413 = vmatprep.subr.bf16.mxu0 0
    %1414 = vmatpush1.bf16.xpose.msra.mxu0 0
    %1415 = vmatprep.subr.bf16.mxu0 0
    %1416 = vmatpush1.bf16.xpose.msra.mxu0 0
    %1417 = vmatprep.subr.bf16.mxu0 0
    %1418 = vmatpush1.bf16.xpose.msra.mxu0 0
    %1419 = vmatprep.subr.bf16.mxu0 0
    %1420 = vmatpush1.bf16.xpose.msra.mxu0 0
    %1421 = vmatprep.subr.bf16.mxu0 0
    %1422 = vmatpush1.bf16.xpose.msra.mxu0 0
    %1423 = vmatprep.subr.bf16.mxu0 0
    %1424 = vmatpush1.bf16.xpose.msra.mxu0 0
    %1425 = vmatprep.subr.bf16.mxu0 0
    %1426 = vmatpush1.bf16.xpose.msra.mxu0 0
    %1427 = vmatprep.subr.bf16.mxu0 0
    %1428 = vmatpush1.bf16.xpose.msra.mxu0 0
    %1429 = vmatprep.subr.bf16.mxu0 0
    %1430 = vmatpush1.bf16.xpose.msra.mxu0 0
    %1431 = vmatprep.subr.bf16.mxu0 0
    %1432 = vmatpush1.bf16.xpose.msra.mxu0 0
    %1433 = vmatprep.subr.bf16.mxu0 0
    %1434 = vmatpush1.bf16.xpose.msra.mxu0 0
    %1435 = vmatprep.subr.bf16.mxu0 0
    %1436 = vmatpush1.bf16.xpose.msra.mxu0 0
    %1437 = vmatprep.mubr.bf16.mxu0 0
    %1438 = vmatmul.mubr.bf16.gmra.mrb[0].mxu0 %v1400
    %v1439 = vpop.f32.mrb[0].mxu0
    %v1440 = vadd.f32 0.0, %v1439
    %v1441 = vpop.f32.mrb[0].mxu0
    %v1442 = vpop.f32.mrb[0].mxu0
    %v1443 = vpop.f32.mrb[0].mxu0
    %1444 = vdwg.mxu0
    %v1445 = vsel %vm61, 1, 0
    %vm1446 = vcmp.eq.s32.totalorder %v1445, 1
    %v1447 = vsel %vm1446, %v1118, -inf
    %v1448 = vsel %vm1446, %v1164, -inf
    %v1449 = vsel %vm1446, %v1210, -inf
    %v1450 = vsel %vm1446, %v1256, -inf
    %v1451 = vsel %vm1446, %v1302, -inf
    %v1452 = vsel %vm1446, %v1348, -inf
    %v1453 = vsel %vm1446, %v1394, -inf
    %v1454 = vsel %vm1446, %v1440, -inf
    %v1455 = vsel %vm1076, %v1447, -inf
    %1456 = vmax.xlane.f32.xlu0 %v1455
    %v1457 = vpop.xlane.xlu0 %1456
    %v1458 = vsel %vm1076, %v1448, -inf
    %1459 = vmax.xlane.f32.xlu0 %v1458
    %v1460 = vpop.xlane.xlu0 %1459
    %v1461 = vsel %vm1076, %v1449, -inf
    %1462 = vmax.xlane.f32.xlu0 %v1461
    %v1463 = vpop.xlane.xlu0 %1462
    %v1464 = vsel %vm1076, %v1450, -inf
    %1465 = vmax.xlane.f32.xlu0 %v1464
    %v1466 = vpop.xlane.xlu0 %1465
    %v1467 = vsel %vm1076, %v1451, -inf
    %1468 = vmax.xlane.f32.xlu0 %v1467
    %v1469 = vpop.xlane.xlu0 %1468
    %v1470 = vsel %vm1076, %v1452, -inf
    %1471 = vmax.xlane.f32.xlu0 %v1470
    %v1472 = vpop.xlane.xlu0 %1471
    %v1473 = vsel %vm1076, %v1453, -inf
    %1474 = vmax.xlane.f32.xlu0 %v1473
    %v1475 = vpop.xlane.xlu0 %1474
    %v1476 = vsel %vm1076, %v1454, -inf
    %1477 = vmax.xlane.f32.xlu0 %v1476
    %v1478 = vpop.xlane.xlu0 %1477
    %v1479 = vsub.f32 %v1447, %v1457
    %v1480 = vsub.f32 %v1448, %v1460
    %v1481 = vsub.f32 %v1449, %v1463
    %v1482 = vsub.f32 %v1450, %v1466
    %v1483 = vsub.f32 %v1451, %v1469
    %v1484 = vsub.f32 %v1452, %v1472
    %v1485 = vsub.f32 %v1453, %v1475
    %v1486 = vsub.f32 %v1454, %v1478
    %v1487 = vmul.f32 %v1479, 1.442695
    %v1488 = vpow.pop %v1487
    %v1489 = vmul.f32 %v1480, 1.442695
    %v1490 = vpow.pop %v1489
    %v1491 = vmul.f32 %v1481, 1.442695
    %v1492 = vpow.pop %v1491
    %v1493 = vmul.f32 %v1482, 1.442695
    %v1494 = vpow.pop %v1493
    %v1495 = vmul.f32 %v1483, 1.442695
    %v1496 = vpow.pop %v1495
    %v1497 = vmul.f32 %v1484, 1.442695
    %v1498 = vpow.pop %v1497
    %v1499 = vmul.f32 %v1485, 1.442695
    %v1500 = vpow.pop %v1499
    %v1501 = vmul.f32 %v1486, 1.442695
    %v1502 = vpow.pop %v1501
    %v1503 = vsel %vm1076, %v1488, 0.0
    %1504 = vadd.xlane.f32.xlu0 %v1503
    %v1505 = vpop.xlane.xlu0 %1504
    %v1506 = vsel %vm1076, %v1490, 0.0
    %1507 = vadd.xlane.f32.xlu0 %v1506
    %v1508 = vpop.xlane.xlu0 %1507
    %v1509 = vsel %vm1076, %v1492, 0.0
    %1510 = vadd.xlane.f32.xlu0 %v1509
    %v1511 = vpop.xlane.xlu0 %1510
    %v1512 = vsel %vm1076, %v1494, 0.0
    %1513 = vadd.xlane.f32.xlu0 %v1512
    %v1514 = vpop.xlane.xlu0 %1513
    %v1515 = vsel %vm1076, %v1496, 0.0
    %1516 = vadd.xlane.f32.xlu0 %v1515
    %v1517 = vpop.xlane.xlu0 %1516
    %v1518 = vsel %vm1076, %v1498, 0.0
    %1519 = vadd.xlane.f32.xlu0 %v1518
    %v1520 = vpop.xlane.xlu0 %1519
    %v1521 = vsel %vm1076, %v1500, 0.0
    %1522 = vadd.xlane.f32.xlu0 %v1521
    %v1523 = vpop.xlane.xlu0 %1522
    %v1524 = vsel %vm1076, %v1502, 0.0
    %1525 = vadd.xlane.f32.xlu0 %v1524
    %v1526 = vpop.xlane.xlu0 %1525
    %v1527 = vrcp.pop %v1505
    %v1528 = vrcp.pop %v1508
    %v1529 = vrcp.pop %v1511
    %v1530 = vrcp.pop %v1514
    %v1531 = vrcp.pop %v1517
    %v1532 = vrcp.pop %v1520
    %v1533 = vrcp.pop %v1523
    %v1534 = vrcp.pop %v1526
    %v1535 = vmul.f32 %v1488, %v1527
    %v1536 = vmul.f32 %v1490, %v1528
    %v1537 = vmul.f32 %v1492, %v1529
    %v1538 = vmul.f32 %v1494, %v1530
    %v1539 = vmul.f32 %v1496, %v1531
    %v1540 = vmul.f32 %v1498, %v1532
    %v1541 = vmul.f32 %v1500, %v1533
    %v1542 = vmul.f32 %v1502, %v1534
    %v1543 = vpack.c.bf16 %v1535, %v1535
    %v1544 = vpack.c.bf16 %v1536, %v1536
    %v1545 = vpack.c.bf16 %v1537, %v1537
    %v1546 = vpack.c.bf16 %v1538, %v1538
    %v1547 = vpack.c.bf16 %v1539, %v1539
    %v1548 = vpack.c.bf16 %v1540, %v1540
    %v1549 = vpack.c.bf16 %v1541, %v1541
    %v1550 = vpack.c.bf16 %v1542, %v1542
    %v1551 = vpack.c.bf16 %v988, %v988
    %v1552 = vpack.c.bf16 %v989, %v989
    %v1553 = vpack.c.bf16 %v990, %v990
    %v1554 = vpack.c.bf16 %v991, %v991
    %v1555 = vpack.c.bf16 %v1056, %v1056
    %v1556 = vpack.c.bf16 %v1057, %v1057
    %v1557 = vpack.c.bf16 %v1058, %v1058
    %v1558 = vpack.c.bf16 %v1059, %v1059
    %v1560 = vsel %vm1076, %v1543, 0
    %vm1562 = vcmask 1043456
    %v1564 = vsel %vm1562, %v1551, 0
    %1566 = vmatprep.subr.bf16.mxu0 0
    %1567 = vmatpush1.bf16.msra.mxu0 %v1564
    %1568 = vmatprep.subr.bf16.mxu0 0
    %1569 = vmatpush1.bf16.msra.mxu0 0
    %1570 = vmatprep.subr.bf16.mxu0 0
    %1571 = vmatpush1.bf16.msra.mxu0 0
    %1572 = vmatprep.subr.bf16.mxu0 0
    %1573 = vmatpush1.bf16.msra.mxu0 0
    %1574 = vmatprep.subr.bf16.mxu0 0
    %1575 = vmatpush1.bf16.msra.mxu0 0
    %1576 = vmatprep.subr.bf16.mxu0 0
    %1577 = vmatpush1.bf16.msra.mxu0 0
    %1578 = vmatprep.subr.bf16.mxu0 0
    %1579 = vmatpush1.bf16.msra.mxu0 0
    %1580 = vmatprep.subr.bf16.mxu0 0
    %1581 = vmatpush1.bf16.msra.mxu0 0
    %1582 = vmatprep.subr.bf16.mxu0 0
    %1583 = vmatpush1.bf16.msra.mxu0 0
    %1584 = vmatprep.subr.bf16.mxu0 0
    %1585 = vmatpush1.bf16.msra.mxu0 0
    %1586 = vmatprep.subr.bf16.mxu0 0
    %1587 = vmatpush1.bf16.msra.mxu0 0
    %1588 = vmatprep.subr.bf16.mxu0 0
    %1589 = vmatpush1.bf16.msra.mxu0 0
    %1590 = vmatprep.subr.bf16.mxu0 0
    %1591 = vmatpush1.bf16.msra.mxu0 0
    %1592 = vmatprep.subr.bf16.mxu0 0
    %1593 = vmatpush1.bf16.msra.mxu0 0
    %1594 = vmatprep.subr.bf16.mxu0 0
    %1595 = vmatpush1.bf16.msra.mxu0 0
    %1596 = vmatprep.subr.bf16.mxu0 0
    %1597 = vmatpush1.bf16.msra.mxu0 0
    %1598 = vmatprep.mubr.bf16.mxu0 0
    %1599 = vmatmul.mubr.bf16.gmra.mrb[0].mxu0 %v1560
    %v1600 = vpop.f32.mrb[0].mxu0
    %v1601 = vadd.f32 0.0, %v1600
    %v1602 = vpop.f32.mrb[0].mxu0
    %v1603 = vpop.f32.mrb[0].mxu0
    %v1604 = vpop.f32.mrb[0].mxu0
    %1605 = vdwg.mxu0
    %v1607 = vsel %vm1076, %v1544, 0
    %v1610 = vsel %vm1562, %v1552, 0
    %1612 = vmatprep.subr.bf16.mxu0 0
    %1613 = vmatpush1.bf16.msra.mxu0 %v1610
    %1614 = vmatprep.subr.bf16.mxu0 0
    %1615 = vmatpush1.bf16.msra.mxu0 0
    %1616 = vmatprep.subr.bf16.mxu0 0
    %1617 = vmatpush1.bf16.msra.mxu0 0
    %1618 = vmatprep.subr.bf16.mxu0 0
    %1619 = vmatpush1.bf16.msra.mxu0 0
    %1620 = vmatprep.subr.bf16.mxu0 0
    %1621 = vmatpush1.bf16.msra.mxu0 0
    %1622 = vmatprep.subr.bf16.mxu0 0
    %1623 = vmatpush1.bf16.msra.mxu0 0
    %1624 = vmatprep.subr.bf16.mxu0 0
    %1625 = vmatpush1.bf16.msra.mxu0 0
    %1626 = vmatprep.subr.bf16.mxu0 0
    %1627 = vmatpush1.bf16.msra.mxu0 0
    %1628 = vmatprep.subr.bf16.mxu0 0
    %1629 = vmatpush1.bf16.msra.mxu0 0
    %1630 = vmatprep.subr.bf16.mxu0 0
    %1631 = vmatpush1.bf16.msra.mxu0 0
    %1632 = vmatprep.subr.bf16.mxu0 0
    %1633 = vmatpush1.bf16.msra.mxu0 0
    %1634 = vmatprep.subr.bf16.mxu0 0
    %1635 = vmatpush1.bf16.msra.mxu0 0
    %1636 = vmatprep.subr.bf16.mxu0 0
    %1637 = vmatpush1.bf16.msra.mxu0 0
    %1638 = vmatprep.subr.bf16.mxu0 0
    %1639 = vmatpush1.bf16.msra.mxu0 0
    %1640 = vmatprep.subr.bf16.mxu0 0
    %1641 = vmatpush1.bf16.msra.mxu0 0
    %1642 = vmatprep.subr.bf16.mxu0 0
    %1643 = vmatpush1.bf16.msra.mxu0 0
    %1644 = vmatprep.mubr.bf16.mxu0 0
    %1645 = vmatmul.mubr.bf16.gmra.mrb[0].mxu0 %v1607
    %v1646 = vpop.f32.mrb[0].mxu0
    %v1647 = vadd.f32 0.0, %v1646
    %v1648 = vpop.f32.mrb[0].mxu0
    %v1649 = vpop.f32.mrb[0].mxu0
    %v1650 = vpop.f32.mrb[0].mxu0
    %1651 = vdwg.mxu0
    %v1653 = vsel %vm1076, %v1545, 0
    %v1656 = vsel %vm1562, %v1553, 0
    %1658 = vmatprep.subr.bf16.mxu0 0
    %1659 = vmatpush1.bf16.msra.mxu0 %v1656
    %1660 = vmatprep.subr.bf16.mxu0 0
    %1661 = vmatpush1.bf16.msra.mxu0 0
    %1662 = vmatprep.subr.bf16.mxu0 0
    %1663 = vmatpush1.bf16.msra.mxu0 0
    %1664 = vmatprep.subr.bf16.mxu0 0
    %1665 = vmatpush1.bf16.msra.mxu0 0
    %1666 = vmatprep.subr.bf16.mxu0 0
    %1667 = vmatpush1.bf16.msra.mxu0 0
    %1668 = vmatprep.subr.bf16.mxu0 0
    %1669 = vmatpush1.bf16.msra.mxu0 0
    %1670 = vmatprep.subr.bf16.mxu0 0
    %1671 = vmatpush1.bf16.msra.mxu0 0
    %1672 = vmatprep.subr.bf16.mxu0 0
    %1673 = vmatpush1.bf16.msra.mxu0 0
    %1674 = vmatprep.subr.bf16.mxu0 0
    %1675 = vmatpush1.bf16.msra.mxu0 0
    %1676 = vmatprep.subr.bf16.mxu0 0
    %1677 = vmatpush1.bf16.msra.mxu0 0
    %1678 = vmatprep.subr.bf16.mxu0 0
    %1679 = vmatpush1.bf16.msra.mxu0 0
    %1680 = vmatprep.subr.bf16.mxu0 0
    %1681 = vmatpush1.bf16.msra.mxu0 0
    %1682 = vmatprep.subr.bf16.mxu0 0
    %1683 = vmatpush1.bf16.msra.mxu0 0
    %1684 = vmatprep.subr.bf16.mxu0 0
    %1685 = vmatpush1.bf16.msra.mxu0 0
    %1686 = vmatprep.subr.bf16.mxu0 0
    %1687 = vmatpush1.bf16.msra.mxu0 0
    %1688 = vmatprep.subr.bf16.mxu0 0
    %1689 = vmatpush1.bf16.msra.mxu0 0
    %1690 = vmatprep.mubr.bf16.mxu0 0
    %1691 = vmatmul.mubr.bf16.gmra.mrb[0].mxu0 %v1653
    %v1692 = vpop.f32.mrb[0].mxu0
    %v1693 = vadd.f32 0.0, %v1692
    %v1694 = vpop.f32.mrb[0].mxu0
    %v1695 = vpop.f32.mrb[0].mxu0
    %v1696 = vpop.f32.mrb[0].mxu0
    %1697 = vdwg.mxu0
    %v1699 = vsel %vm1076, %v1546, 0
    %v1702 = vsel %vm1562, %v1554, 0
    %1704 = vmatprep.subr.bf16.mxu0 0
    %1705 = vmatpush1.bf16.msra.mxu0 %v1702
    %1706 = vmatprep.subr.bf16.mxu0 0
    %1707 = vmatpush1.bf16.msra.mxu0 0
    %1708 = vmatprep.subr.bf16.mxu0 0
    %1709 = vmatpush1.bf16.msra.mxu0 0
    %1710 = vmatprep.subr.bf16.mxu0 0
    %1711 = vmatpush1.bf16.msra.mxu0 0
    %1712 = vmatprep.subr.bf16.mxu0 0
    %1713 = vmatpush1.bf16.msra.mxu0 0
    %1714 = vmatprep.subr.bf16.mxu0 0
    %1715 = vmatpush1.bf16.msra.mxu0 0
    %1716 = vmatprep.subr.bf16.mxu0 0
    %1717 = vmatpush1.bf16.msra.mxu0 0
    %1718 = vmatprep.subr.bf16.mxu0 0
    %1719 = vmatpush1.bf16.msra.mxu0 0
    %1720 = vmatprep.subr.bf16.mxu0 0
    %1721 = vmatpush1.bf16.msra.mxu0 0
    %1722 = vmatprep.subr.bf16.mxu0 0
    %1723 = vmatpush1.bf16.msra.mxu0 0
    %1724 = vmatprep.subr.bf16.mxu0 0
    %1725 = vmatpush1.bf16.msra.mxu0 0
    %1726 = vmatprep.subr.bf16.mxu0 0
    %1727 = vmatpush1.bf16.msra.mxu0 0
    %1728 = vmatprep.subr.bf16.mxu0 0
    %1729 = vmatpush1.bf16.msra.mxu0 0
    %1730 = vmatprep.subr.bf16.mxu0 0
    %1731 = vmatpush1.bf16.msra.mxu0 0
    %1732 = vmatprep.subr.bf16.mxu0 0
    %1733 = vmatpush1.bf16.msra.mxu0 0
    %1734 = vmatprep.subr.bf16.mxu0 0
    %1735 = vmatpush1.bf16.msra.mxu0 0
    %1736 = vmatprep.mubr.bf16.mxu0 0
    %1737 = vmatmul.mubr.bf16.gmra.mrb[0].mxu0 %v1699
    %v1738 = vpop.f32.mrb[0].mxu0
    %v1739 = vadd.f32 0.0, %v1738
    %v1740 = vpop.f32.mrb[0].mxu0
    %v1741 = vpop.f32.mrb[0].mxu0
    %v1742 = vpop.f32.mrb[0].mxu0
    %1743 = vdwg.mxu0
    %v1745 = vsel %vm1076, %v1547, 0
    %v1748 = vsel %vm1562, %v1555, 0
    %1750 = vmatprep.subr.bf16.mxu0 0
    %1751 = vmatpush1.bf16.msra.mxu0 %v1748
    %1752 = vmatprep.subr.bf16.mxu0 0
    %1753 = vmatpush1.bf16.msra.mxu0 0
    %1754 = vmatprep.subr.bf16.mxu0 0
    %1755 = vmatpush1.bf16.msra.mxu0 0
    %1756 = vmatprep.subr.bf16.mxu0 0
    %1757 = vmatpush1.bf16.msra.mxu0 0
    %1758 = vmatprep.subr.bf16.mxu0 0
    %1759 = vmatpush1.bf16.msra.mxu0 0
    %1760 = vmatprep.subr.bf16.mxu0 0
    %1761 = vmatpush1.bf16.msra.mxu0 0
    %1762 = vmatprep.subr.bf16.mxu0 0
    %1763 = vmatpush1.bf16.msra.mxu0 0
    %1764 = vmatprep.subr.bf16.mxu0 0
    %1765 = vmatpush1.bf16.msra.mxu0 0
    %1766 = vmatprep.subr.bf16.mxu0 0
    %1767 = vmatpush1.bf16.msra.mxu0 0
    %1768 = vmatprep.subr.bf16.mxu0 0
    %1769 = vmatpush1.bf16.msra.mxu0 0
    %1770 = vmatprep.subr.bf16.mxu0 0
    %1771 = vmatpush1.bf16.msra.mxu0 0
    %1772 = vmatprep.subr.bf16.mxu0 0
    %1773 = vmatpush1.bf16.msra.mxu0 0
    %1774 = vmatprep.subr.bf16.mxu0 0
    %1775 = vmatpush1.bf16.msra.mxu0 0
    %1776 = vmatprep.subr.bf16.mxu0 0
    %1777 = vmatpush1.bf16.msra.mxu0 0
    %1778 = vmatprep.subr.bf16.mxu0 0
    %1779 = vmatpush1.bf16.msra.mxu0 0
    %1780 = vmatprep.subr.bf16.mxu0 0
    %1781 = vmatpush1.bf16.msra.mxu0 0
    %1782 = vmatprep.mubr.bf16.mxu0 0
    %1783 = vmatmul.mubr.bf16.gmra.mrb[0].mxu0 %v1745
    %v1784 = vpop.f32.mrb[0].mxu0
    %v1785 = vadd.f32 0.0, %v1784
    %v1786 = vpop.f32.mrb[0].mxu0
    %v1787 = vpop.f32.mrb[0].mxu0
    %v1788 = vpop.f32.mrb[0].mxu0
    %1789 = vdwg.mxu0
    %v1791 = vsel %vm1076, %v1548, 0
    %v1794 = vsel %vm1562, %v1556, 0
    %1796 = vmatprep.subr.bf16.mxu0 0
    %1797 = vmatpush1.bf16.msra.mxu0 %v1794
    %1798 = vmatprep.subr.bf16.mxu0 0
    %1799 = vmatpush1.bf16.msra.mxu0 0
    %1800 = vmatprep.subr.bf16.mxu0 0
    %1801 = vmatpush1.bf16.msra.mxu0 0
    %1802 = vmatprep.subr.bf16.mxu0 0
    %1803 = vmatpush1.bf16.msra.mxu0 0
    %1804 = vmatprep.subr.bf16.mxu0 0
    %1805 = vmatpush1.bf16.msra.mxu0 0
    %1806 = vmatprep.subr.bf16.mxu0 0
    %1807 = vmatpush1.bf16.msra.mxu0 0
    %1808 = vmatprep.subr.bf16.mxu0 0
    %1809 = vmatpush1.bf16.msra.mxu0 0
    %1810 = vmatprep.subr.bf16.mxu0 0
    %1811 = vmatpush1.bf16.msra.mxu0 0
    %1812 = vmatprep.subr.bf16.mxu0 0
    %1813 = vmatpush1.bf16.msra.mxu0 0
    %1814 = vmatprep.subr.bf16.mxu0 0
    %1815 = vmatpush1.bf16.msra.mxu0 0
    %1816 = vmatprep.subr.bf16.mxu0 0
    %1817 = vmatpush1.bf16.msra.mxu0 0
    %1818 = vmatprep.subr.bf16.mxu0 0
    %1819 = vmatpush1.bf16.msra.mxu0 0
    %1820 = vmatprep.subr.bf16.mxu0 0
    %1821 = vmatpush1.bf16.msra.mxu0 0
    %1822 = vmatprep.subr.bf16.mxu0 0
    %1823 = vmatpush1.bf16.msra.mxu0 0
    %1824 = vmatprep.subr.bf16.mxu0 0
    %1825 = vmatpush1.bf16.msra.mxu0 0
    %1826 = vmatprep.subr.bf16.mxu0 0
    %1827 = vmatpush1.bf16.msra.mxu0 0
    %1828 = vmatprep.mubr.bf16.mxu0 0
    %1829 = vmatmul.mubr.bf16.gmra.mrb[0].mxu0 %v1791
    %v1830 = vpop.f32.mrb[0].mxu0
    %v1831 = vadd.f32 0.0, %v1830
    %v1832 = vpop.f32.mrb[0].mxu0
    %v1833 = vpop.f32.mrb[0].mxu0
    %v1834 = vpop.f32.mrb[0].mxu0
    %1835 = vdwg.mxu0
    %v1837 = vsel %vm1076, %v1549, 0
    %v1840 = vsel %vm1562, %v1557, 0
    %1842 = vmatprep.subr.bf16.mxu0 0
    %1843 = vmatpush1.bf16.msra.mxu0 %v1840
    %1844 = vmatprep.subr.bf16.mxu0 0
    %1845 = vmatpush1.bf16.msra.mxu0 0
    %1846 = vmatprep.subr.bf16.mxu0 0
    %1847 = vmatpush1.bf16.msra.mxu0 0
    %1848 = vmatprep.subr.bf16.mxu0 0
    %1849 = vmatpush1.bf16.msra.mxu0 0
    %1850 = vmatprep.subr.bf16.mxu0 0
    %1851 = vmatpush1.bf16.msra.mxu0 0
    %1852 = vmatprep.subr.bf16.mxu0 0
    %1853 = vmatpush1.bf16.msra.mxu0 0
    %1854 = vmatprep.subr.bf16.mxu0 0
    %1855 = vmatpush1.bf16.msra.mxu0 0
    %1856 = vmatprep.subr.bf16.mxu0 0
    %1857 = vmatpush1.bf16.msra.mxu0 0
    %1858 = vmatprep.subr.bf16.mxu0 0
    %1859 = vmatpush1.bf16.msra.mxu0 0
    %1860 = vmatprep.subr.bf16.mxu0 0
    %1861 = vmatpush1.bf16.msra.mxu0 0
    %1862 = vmatprep.subr.bf16.mxu0 0
    %1863 = vmatpush1.bf16.msra.mxu0 0
    %1864 = vmatprep.subr.bf16.mxu0 0
    %1865 = vmatpush1.bf16.msra.mxu0 0
    %1866 = vmatprep.subr.bf16.mxu0 0
    %1867 = vmatpush1.bf16.msra.mxu0 0
    %1868 = vmatprep.subr.bf16.mxu0 0
    %1869 = vmatpush1.bf16.msra.mxu0 0
    %1870 = vmatprep.subr.bf16.mxu0 0
    %1871 = vmatpush1.bf16.msra.mxu0 0
    %1872 = vmatprep.subr.bf16.mxu0 0
    %1873 = vmatpush1.bf16.msra.mxu0 0
    %1874 = vmatprep.mubr.bf16.mxu0 0
    %1875 = vmatmul.mubr.bf16.gmra.mrb[0].mxu0 %v1837
    %v1876 = vpop.f32.mrb[0].mxu0
    %v1877 = vadd.f32 0.0, %v1876
    %v1878 = vpop.f32.mrb[0].mxu0
    %v1879 = vpop.f32.mrb[0].mxu0
    %v1880 = vpop.f32.mrb[0].mxu0
    %1881 = vdwg.mxu0
    %v1883 = vsel %vm1076, %v1550, 0
    %v1886 = vsel %vm1562, %v1558, 0
    %1888 = vmatprep.subr.bf16.mxu0 0
    %1889 = vmatpush1.bf16.msra.mxu0 %v1886
    %1890 = vmatprep.subr.bf16.mxu0 0
    %1891 = vmatpush1.bf16.msra.mxu0 0
    %1892 = vmatprep.subr.bf16.mxu0 0
    %1893 = vmatpush1.bf16.msra.mxu0 0
    %1894 = vmatprep.subr.bf16.mxu0 0
    %1895 = vmatpush1.bf16.msra.mxu0 0
    %1896 = vmatprep.subr.bf16.mxu0 0
    %1897 = vmatpush1.bf16.msra.mxu0 0
    %1898 = vmatprep.subr.bf16.mxu0 0
    %1899 = vmatpush1.bf16.msra.mxu0 0
    %1900 = vmatprep.subr.bf16.mxu0 0
    %1901 = vmatpush1.bf16.msra.mxu0 0
    %1902 = vmatprep.subr.bf16.mxu0 0
    %1903 = vmatpush1.bf16.msra.mxu0 0
    %1904 = vmatprep.subr.bf16.mxu0 0
    %1905 = vmatpush1.bf16.msra.mxu0 0
    %1906 = vmatprep.subr.bf16.mxu0 0
    %1907 = vmatpush1.bf16.msra.mxu0 0
    %1908 = vmatprep.subr.bf16.mxu0 0
    %1909 = vmatpush1.bf16.msra.mxu0 0
    %1910 = vmatprep.subr.bf16.mxu0 0
    %1911 = vmatpush1.bf16.msra.mxu0 0
    %1912 = vmatprep.subr.bf16.mxu0 0
    %1913 = vmatpush1.bf16.msra.mxu0 0
    %1914 = vmatprep.subr.bf16.mxu0 0
    %1915 = vmatpush1.bf16.msra.mxu0 0
    %1916 = vmatprep.subr.bf16.mxu0 0
    %1917 = vmatpush1.bf16.msra.mxu0 0
    %1918 = vmatprep.subr.bf16.mxu0 0
    %1919 = vmatpush1.bf16.msra.mxu0 0
    %1920 = vmatprep.mubr.bf16.mxu0 0
    %1921 = vmatmul.mubr.bf16.gmra.mrb[0].mxu0 %v1883
    %v1922 = vpop.f32.mrb[0].mxu0
    %v1923 = vadd.f32 0.0, %v1922
    %v1924 = vpop.f32.mrb[0].mxu0
    %v1925 = vpop.f32.mrb[0].mxu0
    %v1926 = vpop.f32.mrb[0].mxu0
    %1927 = vdwg.mxu0
    %v1928 = vcombine.low %v1601, %v1693
    %v1929 = vcombine.high %v1601, %v1693
    %v1931 = vunpack.c.l.s4 1983009808
    %v1932 = vunpack.c.0.s8 %v1931
    %v1933 = vlaneseq
    %v1934 = vshrl.u32 %v1933, 7
    %v1935 = vsub.s32 %v1932, %v1934
    %v1936 = vrot.slane %v1928, %v1935
    %v1938 = vunpack.c.l.s4 1983009808
    %v1939 = vunpack.c.0.s8 %v1938
    %v1940 = vlaneseq
    %v1941 = vshrl.u32 %v1940, 7
    %v1942 = vsub.s32 %v1939, %v1941
    %v1943 = vrot.slane %v1929, %v1942
    %v1944 = vcombine.low %v1647, %v1739
    %v1945 = vcombine.high %v1647, %v1739
    %v1947 = vunpack.c.l.s4 1983009808
    %v1948 = vunpack.c.0.s8 %v1947
    %v1949 = vlaneseq
    %v1950 = vshrl.u32 %v1949, 7
    %v1951 = vsub.s32 %v1948, %v1950
    %v1952 = vrot.slane %v1944, %v1951
    %v1954 = vunpack.c.l.s4 1983009808
    %v1955 = vunpack.c.0.s8 %v1954
    %v1956 = vlaneseq
    %v1957 = vshrl.u32 %v1956, 7
    %v1958 = vsub.s32 %v1955, %v1957
    %v1959 = vrot.slane %v1945, %v1958
    %v1960 = vcombine.low %v1936, %v1952
    %v1961 = vcombine.high %v1936, %v1952
    %v1963 = vunpack.c.l.s4 1934713408
    %v1964 = vunpack.c.0.s8 %v1963
    %v1965 = vlaneseq
    %v1966 = vshrl.u32 %v1965, 7
    %v1967 = vsub.s32 %v1964, %v1966
    %v1968 = vrot.slane %v1960, %v1967
    %v1970 = vunpack.c.l.s4 1934713408
    %v1971 = vunpack.c.0.s8 %v1970
    %v1972 = vlaneseq
    %v1973 = vshrl.u32 %v1972, 7
    %v1974 = vsub.s32 %v1971, %v1973
    %v1975 = vrot.slane %v1961, %v1974
    %v1976 = vcombine.low %v1943, %v1959
    %v1977 = vcombine.high %v1943, %v1959
    %v1979 = vunpack.c.l.s4 1934713408
    %v1980 = vunpack.c.0.s8 %v1979
    %v1981 = vlaneseq
    %v1982 = vshrl.u32 %v1981, 7
    %v1983 = vsub.s32 %v1980, %v1982
    %v1984 = vrot.slane %v1976, %v1983
    %v1986 = vunpack.c.l.s4 1934713408
    %v1987 = vunpack.c.0.s8 %v1986
    %v1988 = vlaneseq
    %v1989 = vshrl.u32 %v1988, 7
    %v1990 = vsub.s32 %v1987, %v1989
    %v1991 = vrot.slane %v1977, %v1990
    %v1992 = vcombine.high %v1968, 0.0
    %v1993 = vcombine.high %v1975, 0.0
    %v1994 = vcombine.high %v1984, 0.0
    %v1995 = vcombine.high %v1991, 0.0
    %v1996 = vcombine.low %v1785, %v1877
    %v1997 = vcombine.high %v1785, %v1877
    %v1999 = vunpack.c.l.s4 1983009808
    %v2000 = vunpack.c.0.s8 %v1999
    %v2001 = vlaneseq
    %v2002 = vshrl.u32 %v2001, 7
    %v2003 = vsub.s32 %v2000, %v2002
    %v2004 = vrot.slane %v1996, %v2003
    %v2006 = vunpack.c.l.s4 1983009808
    %v2007 = vunpack.c.0.s8 %v2006
    %v2008 = vlaneseq
    %v2009 = vshrl.u32 %v2008, 7
    %v2010 = vsub.s32 %v2007, %v2009
    %v2011 = vrot.slane %v1997, %v2010
    %v2012 = vcombine.low %v1831, %v1923
    %v2013 = vcombine.high %v1831, %v1923
    %v2015 = vunpack.c.l.s4 1983009808
    %v2016 = vunpack.c.0.s8 %v2015
    %v2017 = vlaneseq
    %v2018 = vshrl.u32 %v2017, 7
    %v2019 = vsub.s32 %v2016, %v2018
    %v2020 = vrot.slane %v2012, %v2019
    %v2022 = vunpack.c.l.s4 1983009808
    %v2023 = vunpack.c.0.s8 %v2022
    %v2024 = vlaneseq
    %v2025 = vshrl.u32 %v2024, 7
    %v2026 = vsub.s32 %v2023, %v2025
    %v2027 = vrot.slane %v2013, %v2026
    %v2028 = vcombine.low %v2004, %v2020
    %v2029 = vcombine.high %v2004, %v2020
    %v2031 = vunpack.c.l.s4 1934713408
    %v2032 = vunpack.c.0.s8 %v2031
    %v2033 = vlaneseq
    %v2034 = vshrl.u32 %v2033, 7
    %v2035 = vsub.s32 %v2032, %v2034
    %v2036 = vrot.slane %v2028, %v2035
    %v2038 = vunpack.c.l.s4 1934713408
    %v2039 = vunpack.c.0.s8 %v2038
    %v2040 = vlaneseq
    %v2041 = vshrl.u32 %v2040, 7
    %v2042 = vsub.s32 %v2039, %v2041
    %v2043 = vrot.slane %v2029, %v2042
    %v2044 = vcombine.low %v2011, %v2027
    %v2045 = vcombine.high %v2011, %v2027
    %v2047 = vunpack.c.l.s4 1934713408
    %v2048 = vunpack.c.0.s8 %v2047
    %v2049 = vlaneseq
    %v2050 = vshrl.u32 %v2049, 7
    %v2051 = vsub.s32 %v2048, %v2050
    %v2052 = vrot.slane %v2044, %v2051
    %v2054 = vunpack.c.l.s4 1934713408
    %v2055 = vunpack.c.0.s8 %v2054
    %v2056 = vlaneseq
    %v2057 = vshrl.u32 %v2056, 7
    %v2058 = vsub.s32 %v2055, %v2057
    %v2059 = vrot.slane %v2045, %v2058
    %v2060 = vcombine.high %v2036, 0.0
    %v2061 = vcombine.high %v2043, 0.0
    %v2062 = vcombine.high %v2052, 0.0
    %v2063 = vcombine.high %v2059, 0.0
    %v2064 = vcombine.low %v1968, %v1975
    %v2066 = vunpack.c.l.s4 1983009808
    %v2067 = vunpack.c.0.s8 %v2066
    %v2068 = vlaneseq
    %v2069 = vshrl.u32 %v2068, 7
    %v2070 = vsub.s32 %v2067, %v2069
    %v2071 = vrot.slane %v2064, %v2070
    %v2072 = vcombine.low %v1992, %v1993
    %v2074 = vunpack.c.l.s4 1983009808
    %v2075 = vunpack.c.0.s8 %v2074
    %v2076 = vlaneseq
    %v2077 = vshrl.u32 %v2076, 7
    %v2078 = vsub.s32 %v2075, %v2077
    %v2079 = vrot.slane %v2072, %v2078
    %v2080 = vcombine.low %v1984, %v1991
    %v2082 = vunpack.c.l.s4 1983009808
    %v2083 = vunpack.c.0.s8 %v2082
    %v2084 = vlaneseq
    %v2085 = vshrl.u32 %v2084, 7
    %v2086 = vsub.s32 %v2083, %v2085
    %v2087 = vrot.slane %v2080, %v2086
    %v2088 = vcombine.low %v1994, %v1995
    %v2090 = vunpack.c.l.s4 1983009808
    %v2091 = vunpack.c.0.s8 %v2090
    %v2092 = vlaneseq
    %v2093 = vshrl.u32 %v2092, 7
    %v2094 = vsub.s32 %v2091, %v2093
    %v2095 = vrot.slane %v2088, %v2094
    %v2096 = vcombine.low %v2071, %v2079
    %v2097 = vcombine.high %v2071, %v2079
    %v2099 = vunpack.c.l.s4 1934713408
    %v2100 = vunpack.c.0.s8 %v2099
    %v2101 = vlaneseq
    %v2102 = vshrl.u32 %v2101, 7
    %v2103 = vsub.s32 %v2100, %v2102
    %v2104 = vrot.slane %v2096, %v2103
    %v2106 = vunpack.c.l.s4 1934713408
    %v2107 = vunpack.c.0.s8 %v2106
    %v2108 = vlaneseq
    %v2109 = vshrl.u32 %v2108, 7
    %v2110 = vsub.s32 %v2107, %v2109
    %v2111 = vrot.slane %v2097, %v2110
    %v2112 = vcombine.low %v2087, %v2095
    %v2113 = vcombine.high %v2087, %v2095
    %v2115 = vunpack.c.l.s4 1934713408
    %v2116 = vunpack.c.0.s8 %v2115
    %v2117 = vlaneseq
    %v2118 = vshrl.u32 %v2117, 7
    %v2119 = vsub.s32 %v2116, %v2118
    %v2120 = vrot.slane %v2112, %v2119
    %v2122 = vunpack.c.l.s4 1934713408
    %v2123 = vunpack.c.0.s8 %v2122
    %v2124 = vlaneseq
    %v2125 = vshrl.u32 %v2124, 7
    %v2126 = vsub.s32 %v2123, %v2125
    %v2127 = vrot.slane %v2113, %v2126
    %v2128 = vcombine.low %v2104, %v2120
    %v2129 = vcombine.high %v2104, %v2120
    %v2130 = vcombine.low %v2111, %v2127
    %v2131 = vcombine.high %v2111, %v2127
    %v2132 = vcombine.low %v2036, %v2043
    %v2134 = vunpack.c.l.s4 1983009808
    %v2135 = vunpack.c.0.s8 %v2134
    %v2136 = vlaneseq
    %v2137 = vshrl.u32 %v2136, 7
    %v2138 = vsub.s32 %v2135, %v2137
    %v2139 = vrot.slane %v2132, %v2138
    %v2140 = vcombine.low %v2060, %v2061
    %v2142 = vunpack.c.l.s4 1983009808
    %v2143 = vunpack.c.0.s8 %v2142
    %v2144 = vlaneseq
    %v2145 = vshrl.u32 %v2144, 7
    %v2146 = vsub.s32 %v2143, %v2145
    %v2147 = vrot.slane %v2140, %v2146
    %v2148 = vcombine.low %v2052, %v2059
    %v2150 = vunpack.c.l.s4 1983009808
    %v2151 = vunpack.c.0.s8 %v2150
    %v2152 = vlaneseq
    %v2153 = vshrl.u32 %v2152, 7
    %v2154 = vsub.s32 %v2151, %v2153
    %v2155 = vrot.slane %v2148, %v2154
    %v2156 = vcombine.low %v2062, %v2063
    %v2158 = vunpack.c.l.s4 1983009808
    %v2159 = vunpack.c.0.s8 %v2158
    %v2160 = vlaneseq
    %v2161 = vshrl.u32 %v2160, 7
    %v2162 = vsub.s32 %v2159, %v2161
    %v2163 = vrot.slane %v2156, %v2162
    %v2164 = vcombine.low %v2139, %v2147
    %v2165 = vcombine.high %v2139, %v2147
    %v2167 = vunpack.c.l.s4 1934713408
    %v2168 = vunpack.c.0.s8 %v2167
    %v2169 = vlaneseq
    %v2170 = vshrl.u32 %v2169, 7
    %v2171 = vsub.s32 %v2168, %v2170
    %v2172 = vrot.slane %v2164, %v2171
    %v2174 = vunpack.c.l.s4 1934713408
    %v2175 = vunpack.c.0.s8 %v2174
    %v2176 = vlaneseq
    %v2177 = vshrl.u32 %v2176, 7
    %v2178 = vsub.s32 %v2175, %v2177
    %v2179 = vrot.slane %v2165, %v2178
    %v2180 = vcombine.low %v2155, %v2163
    %v2181 = vcombine.high %v2155, %v2163
    %v2183 = vunpack.c.l.s4 1934713408
    %v2184 = vunpack.c.0.s8 %v2183
    %v2185 = vlaneseq
    %v2186 = vshrl.u32 %v2185, 7
    %v2187 = vsub.s32 %v2184, %v2186
    %v2188 = vrot.slane %v2180, %v2187
    %v2190 = vunpack.c.l.s4 1934713408
    %v2191 = vunpack.c.0.s8 %v2190
    %v2192 = vlaneseq
    %v2193 = vshrl.u32 %v2192, 7
    %v2194 = vsub.s32 %v2191, %v2193
    %v2195 = vrot.slane %v2181, %v2194
    %v2196 = vcombine.low %v2172, %v2188
    %v2197 = vcombine.high %v2172, %v2188
    %v2198 = vcombine.low %v2179, %v2195
    %v2199 = vcombine.high %v2179, %v2195
    %2202 = vrot.lane.b32.xlu0 %v2129, 8
    %v2203 = vpop.permute.xlu0 %2202
    %2204 = vrot.lane.b32.xlu0 %v2197, 8
    %v2205 = vpop.permute.xlu0 %2204
    %2210 = vrot.lane.b32.xlu0 %v2130, 16
    %v2211 = vpop.permute.xlu0 %2210
    %2212 = vrot.lane.b32.xlu0 %v2198, 16
    %v2213 = vpop.permute.xlu0 %2212
    %2218 = vrot.lane.b32.xlu0 %v2131, 24
    %v2219 = vpop.permute.xlu0 %2218
    %2220 = vrot.lane.b32.xlu0 %v2199, 24
    %v2221 = vpop.permute.xlu0 %2220
    %v2224 = vsel %vm1076, %v2128, %v2203
    %v2225 = vsel %vm1076, %v2196, %v2205
    %vm2226 = vcmask 130048
    %v2227 = vsel %vm2226, %v2224, %v2211
    %v2228 = vsel %vm2226, %v2225, %v2213
    %vm2229 = vcmask 195584
    %v2230 = vsel %vm2229, %v2227, %v2219
    %v2231 = vsel %vm2229, %v2228, %v2221
    %v2232 = vpack.c.bf16 %v2231, %v2230
    %v2233 = vld [vmem:[%s5] sm:$0xf]
    %v2234 = vld [vmem:[%s5 + $0x4] sm:$0xf]
    %v2235 = vld [vmem:[%s5 + $0x8] sm:$0xf]
    %v2236 = vld [vmem:[%s5 + $0xc] sm:$0xf]
    %v2237 = vld [vmem:[%s6] sm:$0x1]
    %v2239 = vlaneseq
    %v2240 = vshrl.u32 %v2239, 7
    %v2241 = vsub.s32 0, %v2240
    %v2242 = vrot.slane %v2237, %v2241
    %v2248 = vunpack.c.l.b16 %v2233
    %v2249 = vunpack.c.l.b16 %v2234
    %v2250 = vunpack.c.l.b16 %v2235
    %v2251 = vunpack.c.l.b16 %v2236
    %v2252 = vpack.c.b16 %v2249, %v2248
    %v2253 = vpack.c.b16 %v2251, %v2250
    %v2257 = vsel %vm64, %v2232, 0
    %2259 = vmatprep.subr.bf16.mxu0 0
    %2260 = vmatpush1.bf16.msra.mxu0 %v2252
    %2261 = vmatprep.subr.bf16.mxu0 0
    %2262 = vmatpush1.bf16.msra.mxu0 %v2253
    %2263 = vmatprep.subr.bf16.mxu0 0
    %2264 = vmatpush1.bf16.msra.mxu0 0
    %2265 = vmatprep.subr.bf16.mxu0 0
    %2266 = vmatpush1.bf16.msra.mxu0 0
    %2267 = vmatprep.subr.bf16.mxu0 0
    %2268 = vmatpush1.bf16.msra.mxu0 0
    %2269 = vmatprep.subr.bf16.mxu0 0
    %2270 = vmatpush1.bf16.msra.mxu0 0
    %2271 = vmatprep.subr.bf16.mxu0 0
    %2272 = vmatpush1.bf16.msra.mxu0 0
    %2273 = vmatprep.subr.bf16.mxu0 0
    %2274 = vmatpush1.bf16.msra.mxu0 0
    %2275 = vmatprep.subr.bf16.mxu0 0
    %2276 = vmatpush1.bf16.msra.mxu0 0
    %2277 = vmatprep.subr.bf16.mxu0 0
    %2278 = vmatpush1.bf16.msra.mxu0 0
    %2279 = vmatprep.subr.bf16.mxu0 0
    %2280 = vmatpush1.bf16.msra.mxu0 0
    %2281 = vmatprep.subr.bf16.mxu0 0
    %2282 = vmatpush1.bf16.msra.mxu0 0
    %2283 = vmatprep.subr.bf16.mxu0 0
    %2284 = vmatpush1.bf16.msra.mxu0 0
    %2285 = vmatprep.subr.bf16.mxu0 0
    %2286 = vmatpush1.bf16.msra.mxu0 0
    %2287 = vmatprep.subr.bf16.mxu0 0
    %2288 = vmatpush1.bf16.msra.mxu0 0
    %2289 = vmatprep.subr.bf16.mxu0 0
    %2290 = vmatpush1.bf16.msra.mxu0 0
    %2291 = vmatprep.mubr.bf16.mxu0 0
    %2292 = vmatmul.mubr.bf16.gmra.mrb[0].mxu0 %v2257
    %v2293 = vpop.f32.mrb[0].mxu0
    %v2294 = vadd.f32 %v2242, %v2293
    %v2295 = vpop.f32.mrb[0].mxu0
    %v2296 = vpop.f32.mrb[0].mxu0
    %v2297 = vadd.f32 %v2242, %v2296
    %v2298 = vpop.f32.mrb[0].mxu0
    %2299 = vdwg.mxu0
    %v2300 = vadd.f32 %v55, %v2294
    %v2301 = vadd.f32 %v56, %v2297
    %v2302 = vld [vmem:[%s7] sm:$0x1]
    %v2303 = vld [vmem:[%s8] sm:$0x1]
    %v2304 = vsel %vm64, %v2300, 0.0
    %2305 = vadd.xlane.f32.xlu0 %v2304
    %v2306 = vpop.xlane.xlu0 %2305
    %v2307 = vsel %vm64, %v2301, 0.0
    %2308 = vadd.xlane.f32.xlu0 %v2307
    %v2309 = vpop.xlane.xlu0 %2308
    %v2310 = vmul.f32 %v2306, %v71
    %v2311 = vmul.f32 %v2309, %v71
    %v2312 = vsub.f32 %v2300, %v2310
    %v2313 = vsub.f32 %v2301, %v2311
    %v2314 = vmul.f32 %v2312, %v2312
    %v2315 = vmul.f32 %v2313, %v2313
    %v2316 = vsel %vm64, %v2314, 0.0
    %2317 = vadd.xlane.f32.xlu0 %v2316
    %v2318 = vpop.xlane.xlu0 %2317
    %v2319 = vsel %vm64, %v2315, 0.0
    %2320 = vadd.xlane.f32.xlu0 %v2319
    %v2321 = vpop.xlane.xlu0 %2320
    %v2322 = vmul.f32 %v2318, %v71
    %v2323 = vmul.f32 %v2321, %v71
    %v2324 = vadd.f32 %v2322, 1e-05
    %v2325 = vadd.f32 %v2323, 1e-05
    %v2326 = vrsqrt.pop %v2324
    %v2327 = vrsqrt.pop %v2325
    %v2328 = vmul.f32 %v2312, %v2326
    %v2329 = vmul.f32 %v2313, %v2327
    %v2331 = vlaneseq
    %v2332 = vshrl.u32 %v2331, 7
    %v2333 = vsub.s32 0, %v2332
    %v2334 = vrot.slane %v2302, %v2333
    %v2336 = vmul.f32 %v2328, %v2334
    %v2337 = vmul.f32 %v2329, %v2334
    %v2339 = vlaneseq
    %v2340 = vshrl.u32 %v2339, 7
    %v2341 = vsub.s32 0, %v2340
    %v2342 = vrot.slane %v2303, %v2341
    %v2344 = vadd.f32 %v2336, %v2342
    %v2345 = vadd.f32 %v2337, %v2342
    %v2346 = vpack.c.bf16 %v2345, %v2344
    %v2347 = vld [vmem:[%s9] sm:$0xf]
    %v2348 = vld [vmem:[%s9 + $0x4] sm:$0xf]
    %v2349 = vld [vmem:[%s9 + $0x8] sm:$0xf]
    %v2350 = vld [vmem:[%s9 + $0xc] sm:$0xf]
    %v2351 = vld [vmem:[%s10] sm:$0x1]
    %v2353 = vlaneseq
    %v2354 = vshrl.u32 %v2353, 7
    %v2355 = vsub.s32 0, %v2354
    %v2356 = vrot.slane %v2351, %v2355
    %v2362 = vunpack.c.l.b16 %v2347
    %v2363 = vunpack.c.l.b16 %v2348
    %v2364 = vunpack.c.l.b16 %v2349
    %v2365 = vunpack.c.l.b16 %v2350
    %v2366 = vpack.c.b16 %v2363, %v2362
    %v2367 = vpack.c.b16 %v2365, %v2364
    %v2371 = vsel %vm64, %v2346, 0
    %2373 = vmatprep.subr.bf16.mxu0 0
    %2374 = vmatpush1.bf16.msra.mxu0 %v2366
    %2375 = vmatprep.subr.bf16.mxu0 0
    %2376 = vmatpush1.bf16.msra.mxu0 %v2367
    %2377 = vmatprep.subr.bf16.mxu0 0
    %2378 = vmatpush1.bf16.msra.mxu0 0
    %2379 = vmatprep.subr.bf16.mxu0 0
    %2380 = vmatpush1.bf16.msra.mxu0 0
    %2381 = vmatprep.subr.bf16.mxu0 0
    %2382 = vmatpush1.bf16.msra.mxu0 0
    %2383 = vmatprep.subr.bf16.mxu0 0
    %2384 = vmatpush1.bf16.msra.mxu0 0
    %2385 = vmatprep.subr.bf16.mxu0 0
    %2386 = vmatpush1.bf16.msra.mxu0 0
    %2387 = vmatprep.subr.bf16.mxu0 0
    %2388 = vmatpush1.bf16.msra.mxu0 0
    %2389 = vmatprep.subr.bf16.mxu0 0
    %2390 = vmatpush1.bf16.msra.mxu0 0
    %2391 = vmatprep.subr.bf16.mxu0 0
    %2392 = vmatpush1.bf16.msra.mxu0 0
    %2393 = vmatprep.subr.bf16.mxu0 0
    %2394 = vmatpush1.bf16.msra.mxu0 0
    %2395 = vmatprep.subr.bf16.mxu0 0
    %2396 = vmatpush1.bf16.msra.mxu0 0
    %2397 = vmatprep.subr.bf16.mxu0 0
    %2398 = vmatpush1.bf16.msra.mxu0 0
    %2399 = vmatprep.subr.bf16.mxu0 0
    %2400 = vmatpush1.bf16.msra.mxu0 0
    %2401 = vmatprep.subr.bf16.mxu0 0
    %2402 = vmatpush1.bf16.msra.mxu0 0
    %2403 = vmatprep.subr.bf16.mxu0 0
    %2404 = vmatpush1.bf16.msra.mxu0 0
    %2405 = vmatprep.mubr.bf16.mxu0 0
    %2406 = vmatmul.mubr.bf16.gmra.mrb[0].mxu0 %v2371
    %v2407 = vpop.f32.mrb[0].mxu0
    %v2408 = vadd.f32 %v2356, %v2407
    %v2409 = vpop.f32.mrb[0].mxu0
    %v2410 = vpop.f32.mrb[0].mxu0
    %v2411 = vadd.f32 %v2356, %v2410
    %v2412 = vpop.f32.mrb[0].mxu0
    %2413 = vdwg.mxu0
    %v2414 = vmul.f32 %v2408, 0.5
    %v2415 = vmul.f32 %v2411, 0.5
    %v2416 = vmul.f32 %v2408, 0.70710677
    %v2417 = vmul.f32 %v2411, 0.70710677
    %v2418 = verf.f32.pop %v2416
    %v2419 = verf.f32.pop %v2417
    %v2420 = vadd.f32 %v2418, 1.0
    %v2421 = vadd.f32 %v2419, 1.0
    %v2422 = vmul.f32 %v2414, %v2420
    %v2423 = vmul.f32 %v2415, %v2421
    %v2424 = vpack.c.bf16 %v2423, %v2422
    %v2425 = vld [vmem:[%s11] sm:$0xf]
    %v2426 = vld [vmem:[%s11 + $0x4] sm:$0xf]
    %v2427 = vld [vmem:[%s11 + $0x8] sm:$0xf]
    %v2428 = vld [vmem:[%s11 + $0xc] sm:$0xf]
    %v2429 = vld [vmem:[%s11 + $0x10] sm:$0xf]
    %v2430 = vld [vmem:[%s11 + $0x14] sm:$0xf]
    %v2431 = vld [vmem:[%s11 + $0x18] sm:$0xf]
    %v2432 = vld [vmem:[%s11 + $0x1c] sm:$0xf]
    %v2433 = vld [vmem:[%s11 + $0x20] sm:$0xf]
    %v2434 = vld [vmem:[%s11 + $0x24] sm:$0xf]
    %v2435 = vld [vmem:[%s11 + $0x28] sm:$0xf]
    %v2436 = vld [vmem:[%s11 + $0x2c] sm:$0xf]
    %v2437 = vld [vmem:[%s11 + $0x30] sm:$0xf]
    %v2438 = vld [vmem:[%s11 + $0x34] sm:$0xf]
    %v2439 = vld [vmem:[%s11 + $0x38] sm:$0xf]
    %v2440 = vld [vmem:[%s11 + $0x3c] sm:$0xf]
    %v2441 = vld [vmem:[%s12] sm:$0x1]
    %v2443 = vlaneseq
    %v2444 = vshrl.u32 %v2443, 7
    %v2445 = vsub.s32 0, %v2444
    %v2446 = vrot.slane %v2441, %v2445
    %v2464 = vunpack.c.l.b16 %v2425
    %v2465 = vunpack.c.l.b16 %v2426
    %v2466 = vunpack.c.l.b16 %v2427
    %v2467 = vunpack.c.l.b16 %v2428
    %v2468 = vunpack.c.l.b16 %v2429
    %v2469 = vunpack.c.l.b16 %v2430
    %v2470 = vunpack.c.l.b16 %v2431
    %v2471 = vunpack.c.l.b16 %v2432
    %v2472 = vunpack.c.l.b16 %v2433
    %v2473 = vunpack.c.l.b16 %v2434
    %v2474 = vunpack.c.l.b16 %v2435
    %v2475 = vunpack.c.l.b16 %v2436
    %v2476 = vunpack.c.l.b16 %v2437
    %v2477 = vunpack.c.l.b16 %v2438
    %v2478 = vunpack.c.l.b16 %v2439
    %v2479 = vunpack.c.l.b16 %v2440
    %v2480 = vpack.c.b16 %v2465, %v2464
    %v2481 = vpack.c.b16 %v2467, %v2466
    %v2482 = vpack.c.b16 %v2469, %v2468
    %v2483 = vpack.c.b16 %v2471, %v2470
    %v2484 = vpack.c.b16 %v2473, %v2472
    %v2485 = vpack.c.b16 %v2475, %v2474
    %v2486 = vpack.c.b16 %v2477, %v2476
    %v2487 = vpack.c.b16 %v2479, %v2478
    %2496 = vmatprep.subr.bf16.mxu0 0
    %2497 = vmatpush1.bf16.msra.mxu0 %v2480
    %2498 = vmatprep.subr.bf16.mxu0 0
    %2499 = vmatpush1.bf16.msra.mxu0 %v2481
    %2500 = vmatprep.subr.bf16.mxu0 0
    %2501 = vmatpush1.bf16.msra.mxu0 %v2482
    %2502 = vmatprep.subr.bf16.mxu0 0
    %2503 = vmatpush1.bf16.msra.mxu0 %v2483
    %2504 = vmatprep.subr.bf16.mxu0 0
    %2505 = vmatpush1.bf16.msra.mxu0 %v2484
    %2506 = vmatprep.subr.bf16.mxu0 0
    %2507 = vmatpush1.bf16.msra.mxu0 %v2485
    %2508 = vmatprep.subr.bf16.mxu0 0
    %2509 = vmatpush1.bf16.msra.mxu0 %v2486
    %2510 = vmatprep.subr.bf16.mxu0 0
    %2511 = vmatpush1.bf16.msra.mxu0 %v2487
    %2512 = vmatprep.subr.bf16.mxu0 0
    %2513 = vmatpush1.bf16.msra.mxu0 0
    %2514 = vmatprep.subr.bf16.mxu0 0
    %2515 = vmatpush1.bf16.msra.mxu0 0
    %2516 = vmatprep.subr.bf16.mxu0 0
    %2517 = vmatpush1.bf16.msra.mxu0 0
    %2518 = vmatprep.subr.bf16.mxu0 0
    %2519 = vmatpush1.bf16.msra.mxu0 0
    %2520 = vmatprep.subr.bf16.mxu0 0
    %2521 = vmatpush1.bf16.msra.mxu0 0
    %2522 = vmatprep.subr.bf16.mxu0 0
    %2523 = vmatpush1.bf16.msra.mxu0 0
    %2524 = vmatprep.subr.bf16.mxu0 0
    %2525 = vmatpush1.bf16.msra.mxu0 0
    %2526 = vmatprep.subr.bf16.mxu0 0
    %2527 = vmatpush1.bf16.msra.mxu0 0
    %2528 = vmatprep.mubr.bf16.mxu0 0
    %2529 = vmatmul.mubr.bf16.gmra.mrb[0].mxu0 %v2424
    %v2530 = vpop.f32.mrb[0].mxu0
    %v2531 = vadd.f32 %v2446, %v2530
    %v2532 = vpop.f32.mrb[0].mxu0
    %v2533 = vpop.f32.mrb[0].mxu0
    %v2534 = vadd.f32 %v2446, %v2533
    %v2535 = vpop.f32.mrb[0].mxu0
    %2536 = vdwg.mxu0
    %v2537 = vadd.f32 %v2300, %v2531
    %v2538 = vadd.f32 %v2301, %v2534
    %s2539 = scalar_lea.vmem %s1, 1
    %v2540 = vld [vmem:[%s2539] sm:$0x1]
    %s2541 = scalar_lea.vmem %s2, 1
    %v2542 = vld [vmem:[%s2541] sm:$0x1]
    %v2543 = vsel %vm64, %v2537, 0.0
    %2544 = vadd.xlane.f32.xlu0 %v2543
    %v2545 = vpop.xlane.xlu0 %2544
    %v2546 = vsel %vm64, %v2538, 0.0
    %2547 = vadd.xlane.f32.xlu0 %v2546
    %v2548 = vpop.xlane.xlu0 %2547
    %v2549 = vmul.f32 %v2545, %v71
    %v2550 = vmul.f32 %v2548, %v71
    %v2551 = vsub.f32 %v2537, %v2549
    %v2552 = vsub.f32 %v2538, %v2550
    %v2553 = vmul.f32 %v2551, %v2551
    %v2554 = vmul.f32 %v2552, %v2552
    %v2555 = vsel %vm64, %v2553, 0.0
    %2556 = vadd.xlane.f32.xlu0 %v2555
    %v2557 = vpop.xlane.xlu0 %2556
    %v2558 = vsel %vm64, %v2554, 0.0
    %2559 = vadd.xlane.f32.xlu0 %v2558
    %v2560 = vpop.xlane.xlu0 %2559
    %v2561 = vmul.f32 %v2557, %v71
    %v2562 = vmul.f32 %v2560, %v71
    %v2563 = vadd.f32 %v2561, 1e-05
    %v2564 = vadd.f32 %v2562, 1e-05
    %v2565 = vrsqrt.pop %v2563
    %v2566 = vrsqrt.pop %v2564
    %v2567 = vmul.f32 %v2551, %v2565
    %v2568 = vmul.f32 %v2552, %v2566
    %v2570 = vlaneseq
    %v2571 = vshrl.u32 %v2570, 7
    %v2572 = vsub.s32 0, %v2571
    %v2573 = vrot.slane %v2540, %v2572
    %v2575 = vmul.f32 %v2567, %v2573
    %v2576 = vmul.f32 %v2568, %v2573
    %v2578 = vlaneseq
    %v2579 = vshrl.u32 %v2578, 7
    %v2580 = vsub.s32 0, %v2579
    %v2581 = vrot.slane %v2542, %v2580
    %v2583 = vadd.f32 %v2575, %v2581
    %v2584 = vadd.f32 %v2576, %v2581
    %v2585 = vpack.c.bf16 %v2584, %v2583
    %s2586 = scalar_lea.vmem %s3, 16
    %v2587 = vld [vmem:[%s2586] sm:$0xf]
    %v2588 = vld [vmem:[%s2586 + $0x4] sm:$0xf]
    %v2589 = vld [vmem:[%s2586 + $0x8] sm:$0xf]
    %v2590 = vld [vmem:[%s2586 + $0xc] sm:$0xf]
    %s2591 = scalar_lea.vmem %s4, 1
    %v2592 = vld [vmem:[%s2591] sm:$0x1]
    %v2594 = vlaneseq
    %v2595 = vshrl.u32 %v2594, 7
    %v2596 = vsub.s32 0, %v2595
    %v2597 = vrot.slane %v2592, %v2596
    %v2603 = vunpack.c.l.b16 %v2587
    %v2604 = vunpack.c.l.b16 %v2588
    %v2605 = vunpack.c.l.b16 %v2589
    %v2606 = vunpack.c.l.b16 %v2590
    %v2607 = vpack.c.b16 %v2604, %v2603
    %v2608 = vpack.c.b16 %v2606, %v2605
    %v2612 = vsel %vm64, %v2585, 0
    %2614 = vmatprep.subr.bf16.mxu0 0
    %2615 = vmatpush1.bf16.msra.mxu0 %v2607
    %2616 = vmatprep.subr.bf16.mxu0 0
    %2617 = vmatpush1.bf16.msra.mxu0 %v2608
    %2618 = vmatprep.subr.bf16.mxu0 0
    %2619 = vmatpush1.bf16.msra.mxu0 0
    %2620 = vmatprep.subr.bf16.mxu0 0
    %2621 = vmatpush1.bf16.msra.mxu0 0
    %2622 = vmatprep.subr.bf16.mxu0 0
    %2623 = vmatpush1.bf16.msra.mxu0 0
    %2624 = vmatprep.subr.bf16.mxu0 0
    %2625 = vmatpush1.bf16.msra.mxu0 0
    %2626 = vmatprep.subr.bf16.mxu0 0
    %2627 = vmatpush1.bf16.msra.mxu0 0
    %2628 = vmatprep.subr.bf16.mxu0 0
    %2629 = vmatpush1.bf16.msra.mxu0 0
    %2630 = vmatprep.subr.bf16.mxu0 0
    %2631 = vmatpush1.bf16.msra.mxu0 0
    %2632 = vmatprep.subr.bf16.mxu0 0
    %2633 = vmatpush1.bf16.msra.mxu0 0
    %2634 = vmatprep.subr.bf16.mxu0 0
    %2635 = vmatpush1.bf16.msra.mxu0 0
    %2636 = vmatprep.subr.bf16.mxu0 0
    %2637 = vmatpush1.bf16.msra.mxu0 0
    %2638 = vmatprep.subr.bf16.mxu0 0
    %2639 = vmatpush1.bf16.msra.mxu0 0
    %2640 = vmatprep.subr.bf16.mxu0 0
    %2641 = vmatpush1.bf16.msra.mxu0 0
    %2642 = vmatprep.subr.bf16.mxu0 0
    %2643 = vmatpush1.bf16.msra.mxu0 0
    %2644 = vmatprep.subr.bf16.mxu0 0
    %2645 = vmatpush1.bf16.msra.mxu0 0
    %2646 = vmatprep.mubr.bf16.mxu0 0
    %2647 = vmatmul.mubr.bf16.gmra.mrb[0].mxu0 %v2612
    %v2648 = vpop.f32.mrb[0].mxu0
    %v2649 = vadd.f32 %v2597, %v2648
    %v2650 = vpop.f32.mrb[0].mxu0
    %v2651 = vpop.f32.mrb[0].mxu0
    %v2652 = vadd.f32 %v2597, %v2651
    %v2653 = vpop.f32.mrb[0].mxu0
    %2654 = vdwg.mxu0
    %2657 = vrot.lane.b32.xlu0 %v2649, 120
    %v2658 = vpop.permute.xlu0 %2657
    %2659 = vrot.lane.b32.xlu0 %v2652, 120
    %v2660 = vpop.permute.xlu0 %2659
    %2663 = vrot.lane.b32.xlu0 %v2649, 112
    %v2664 = vpop.permute.xlu0 %2663
    %2665 = vrot.lane.b32.xlu0 %v2652, 112
    %v2666 = vpop.permute.xlu0 %2665
    %2669 = vrot.lane.b32.xlu0 %v2649, 104
    %v2670 = vpop.permute.xlu0 %2669
    %2671 = vrot.lane.b32.xlu0 %v2652, 104
    %v2672 = vpop.permute.xlu0 %2671
    %v2675 = vcombine.low %v2649, %v2664
    %v2676 = vcombine.high %v2649, %v2664
    %v2678 = vunpack.c.l.s4 1983009808
    %v2679 = vunpack.c.0.s8 %v2678
    %v2680 = vlaneseq
    %v2681 = vshrl.u32 %v2680, 7
    %v2682 = vsub.s32 %v2679, %v2681
    %v2683 = vrot.slane %v2675, %v2682
    %v2685 = vunpack.c.l.s4 1983009808
    %v2686 = vunpack.c.0.s8 %v2685
    %v2687 = vlaneseq
    %v2688 = vshrl.u32 %v2687, 7
    %v2689 = vsub.s32 %v2686, %v2688
    %v2690 = vrot.slane %v2676, %v2689
    %v2691 = vcombine.low %v2658, %v2670
    %v2692 = vcombine.high %v2658, %v2670
    %v2694 = vunpack.c.l.s4 1983009808
    %v2695 = vunpack.c.0.s8 %v2694
    %v2696 = vlaneseq
    %v2697 = vshrl.u32 %v2696, 7
    %v2698 = vsub.s32 %v2695, %v2697
    %v2699 = vrot.slane %v2691, %v2698
    %v2701 = vunpack.c.l.s4 1983009808
    %v2702 = vunpack.c.0.s8 %v2701
    %v2703 = vlaneseq
    %v2704 = vshrl.u32 %v2703, 7
    %v2705 = vsub.s32 %v2702, %v2704
    %v2706 = vrot.slane %v2692, %v2705
    %v2707 = vcombine.low %v2683, %v2699
    %v2708 = vcombine.high %v2683, %v2699
    %v2710 = vunpack.c.l.s4 1934713408
    %v2711 = vunpack.c.0.s8 %v2710
    %v2712 = vlaneseq
    %v2713 = vshrl.u32 %v2712, 7
    %v2714 = vsub.s32 %v2711, %v2713
    %v2715 = vrot.slane %v2707, %v2714
    %v2717 = vunpack.c.l.s4 1934713408
    %v2718 = vunpack.c.0.s8 %v2717
    %v2719 = vlaneseq
    %v2720 = vshrl.u32 %v2719, 7
    %v2721 = vsub.s32 %v2718, %v2720
    %v2722 = vrot.slane %v2708, %v2721
    %v2723 = vcombine.low %v2690, %v2706
    %v2724 = vcombine.high %v2690, %v2706
    %v2726 = vunpack.c.l.s4 1934713408
    %v2727 = vunpack.c.0.s8 %v2726
    %v2728 = vlaneseq
    %v2729 = vshrl.u32 %v2728, 7
    %v2730 = vsub.s32 %v2727, %v2729
    %v2731 = vrot.slane %v2723, %v2730
    %v2733 = vunpack.c.l.s4 1934713408
    %v2734 = vunpack.c.0.s8 %v2733
    %v2735 = vlaneseq
    %v2736 = vshrl.u32 %v2735, 7
    %v2737 = vsub.s32 %v2734, %v2736
    %v2738 = vrot.slane %v2724, %v2737
    %v2739 = vcombine.high %v2715, 0.0
    %v2740 = vcombine.high %v2722, 0.0
    %v2741 = vcombine.high %v2731, 0.0
    %v2742 = vcombine.high %v2738, 0.0
    %v2743 = vcombine.low %v2652, %v2666
    %v2744 = vcombine.high %v2652, %v2666
    %v2746 = vunpack.c.l.s4 1983009808
    %v2747 = vunpack.c.0.s8 %v2746
    %v2748 = vlaneseq
    %v2749 = vshrl.u32 %v2748, 7
    %v2750 = vsub.s32 %v2747, %v2749
    %v2751 = vrot.slane %v2743, %v2750
    %v2753 = vunpack.c.l.s4 1983009808
    %v2754 = vunpack.c.0.s8 %v2753
    %v2755 = vlaneseq
    %v2756 = vshrl.u32 %v2755, 7
    %v2757 = vsub.s32 %v2754, %v2756
    %v2758 = vrot.slane %v2744, %v2757
    %v2759 = vcombine.low %v2660, %v2672
    %v2760 = vcombine.high %v2660, %v2672
    %v2762 = vunpack.c.l.s4 1983009808
    %v2763 = vunpack.c.0.s8 %v2762
    %v2764 = vlaneseq
    %v2765 = vshrl.u32 %v2764, 7
    %v2766 = vsub.s32 %v2763, %v2765
    %v2767 = vrot.slane %v2759, %v2766
    %v2769 = vunpack.c.l.s4 1983009808
    %v2770 = vunpack.c.0.s8 %v2769
    %v2771 = vlaneseq
    %v2772 = vshrl.u32 %v2771, 7
    %v2773 = vsub.s32 %v2770, %v2772
    %v2774 = vrot.slane %v2760, %v2773
    %v2775 = vcombine.low %v2751, %v2767
    %v2776 = vcombine.high %v2751, %v2767
    %v2778 = vunpack.c.l.s4 1934713408
    %v2779 = vunpack.c.0.s8 %v2778
    %v2780 = vlaneseq
    %v2781 = vshrl.u32 %v2780, 7
    %v2782 = vsub.s32 %v2779, %v2781
    %v2783 = vrot.slane %v2775, %v2782
    %v2785 = vunpack.c.l.s4 1934713408
    %v2786 = vunpack.c.0.s8 %v2785
    %v2787 = vlaneseq
    %v2788 = vshrl.u32 %v2787, 7
    %v2789 = vsub.s32 %v2786, %v2788
    %v2790 = vrot.slane %v2776, %v2789
    %v2791 = vcombine.low %v2758, %v2774
    %v2792 = vcombine.high %v2758, %v2774
    %v2794 = vunpack.c.l.s4 1934713408
    %v2795 = vunpack.c.0.s8 %v2794
    %v2796 = vlaneseq
    %v2797 = vshrl.u32 %v2796, 7
    %v2798 = vsub.s32 %v2795, %v2797
    %v2799 = vrot.slane %v2791, %v2798
    %v2801 = vunpack.c.l.s4 1934713408
    %v2802 = vunpack.c.0.s8 %v2801
    %v2803 = vlaneseq
    %v2804 = vshrl.u32 %v2803, 7
    %v2805 = vsub.s32 %v2802, %v2804
    %v2806 = vrot.slane %v2792, %v2805
    %v2807 = vcombine.high %v2783, 0.0
    %v2808 = vcombine.high %v2790, 0.0
    %v2809 = vcombine.high %v2799, 0.0
    %v2810 = vcombine.high %v2806, 0.0
    %2811 = vrot.lane.b32.xlu0 %v2649, 96
    %v2812 = vpop.permute.xlu0 %2811
    %2813 = vrot.lane.b32.xlu0 %v2652, 96
    %v2814 = vpop.permute.xlu0 %2813
    %2815 = vrot.lane.b32.xlu0 %v2658, 96
    %v2816 = vpop.permute.xlu0 %2815
    %2817 = vrot.lane.b32.xlu0 %v2660, 96
    %v2818 = vpop.permute.xlu0 %2817
    %2819 = vrot.lane.b32.xlu0 %v2664, 96
    %v2820 = vpop.permute.xlu0 %2819
    %2821 = vrot.lane.b32.xlu0 %v2666, 96
    %v2822 = vpop.permute.xlu0 %2821
    %2823 = vrot.lane.b32.xlu0 %v2670, 96
    %v2824 = vpop.permute.xlu0 %2823
    %2825 = vrot.lane.b32.xlu0 %v2672, 96
    %v2826 = vpop.permute.xlu0 %2825
    %v2835 = vcombine.low %v2812, %v2820
    %v2836 = vcombine.high %v2812, %v2820
    %v2838 = vunpack.c.l.s4 1983009808
    %v2839 = vunpack.c.0.s8 %v2838
    %v2840 = vlaneseq
    %v2841 = vshrl.u32 %v2840, 7
    %v2842 = vsub.s32 %v2839, %v2841
    %v2843 = vrot.slane %v2835, %v2842
    %v2845 = vunpack.c.l.s4 1983009808
    %v2846 = vunpack.c.0.s8 %v2845
    %v2847 = vlaneseq
    %v2848 = vshrl.u32 %v2847, 7
    %v2849 = vsub.s32 %v2846, %v2848
    %v2850 = vrot.slane %v2836, %v2849
    %v2851 = vcombine.low %v2816, %v2824
    %v2852 = vcombine.high %v2816, %v2824
    %v2854 = vunpack.c.l.s4 1983009808
    %v2855 = vunpack.c.0.s8 %v2854
    %v2856 = vlaneseq
    %v2857 = vshrl.u32 %v2856, 7
    %v2858 = vsub.s32 %v2855, %v2857
    %v2859 = vrot.slane %v2851, %v2858
    %v2861 = vunpack.c.l.s4 1983009808
    %v2862 = vunpack.c.0.s8 %v2861
    %v2863 = vlaneseq
    %v2864 = vshrl.u32 %v2863, 7
    %v2865 = vsub.s32 %v2862, %v2864
    %v2866 = vrot.slane %v2852, %v2865
    %v2867 = vcombine.low %v2843, %v2859
    %v2868 = vcombine.high %v2843, %v2859
    %v2870 = vunpack.c.l.s4 1934713408
    %v2871 = vunpack.c.0.s8 %v2870
    %v2872 = vlaneseq
    %v2873 = vshrl.u32 %v2872, 7
    %v2874 = vsub.s32 %v2871, %v2873
    %v2875 = vrot.slane %v2867, %v2874
    %v2877 = vunpack.c.l.s4 1934713408
    %v2878 = vunpack.c.0.s8 %v2877
    %v2879 = vlaneseq
    %v2880 = vshrl.u32 %v2879, 7
    %v2881 = vsub.s32 %v2878, %v2880
    %v2882 = vrot.slane %v2868, %v2881
    %v2883 = vcombine.low %v2850, %v2866
    %v2884 = vcombine.high %v2850, %v2866
    %v2886 = vunpack.c.l.s4 1934713408
    %v2887 = vunpack.c.0.s8 %v2886
    %v2888 = vlaneseq
    %v2889 = vshrl.u32 %v2888, 7
    %v2890 = vsub.s32 %v2887, %v2889
    %v2891 = vrot.slane %v2883, %v2890
    %v2893 = vunpack.c.l.s4 1934713408
    %v2894 = vunpack.c.0.s8 %v2893
    %v2895 = vlaneseq
    %v2896 = vshrl.u32 %v2895, 7
    %v2897 = vsub.s32 %v2894, %v2896
    %v2898 = vrot.slane %v2884, %v2897
    %v2899 = vcombine.high %v2875, 0.0
    %v2900 = vcombine.high %v2882, 0.0
    %v2901 = vcombine.high %v2891, 0.0
    %v2902 = vcombine.high %v2898, 0.0
    %v2903 = vcombine.low %v2814, %v2822
    %v2904 = vcombine.high %v2814, %v2822
    %v2906 = vunpack.c.l.s4 1983009808
    %v2907 = vunpack.c.0.s8 %v2906
    %v2908 = vlaneseq
    %v2909 = vshrl.u32 %v2908, 7
    %v2910 = vsub.s32 %v2907, %v2909
    %v2911 = vrot.slane %v2903, %v2910
    %v2913 = vunpack.c.l.s4 1983009808
    %v2914 = vunpack.c.0.s8 %v2913
    %v2915 = vlaneseq
    %v2916 = vshrl.u32 %v2915, 7
    %v2917 = vsub.s32 %v2914, %v2916
    %v2918 = vrot.slane %v2904, %v2917
    %v2919 = vcombine.low %v2818, %v2826
    %v2920 = vcombine.high %v2818, %v2826
    %v2922 = vunpack.c.l.s4 1983009808
    %v2923 = vunpack.c.0.s8 %v2922
    %v2924 = vlaneseq
    %v2925 = vshrl.u32 %v2924, 7
    %v2926 = vsub.s32 %v2923, %v2925
    %v2927 = vrot.slane %v2919, %v2926
    %v2929 = vunpack.c.l.s4 1983009808
    %v2930 = vunpack.c.0.s8 %v2929
    %v2931 = vlaneseq
    %v2932 = vshrl.u32 %v2931, 7
    %v2933 = vsub.s32 %v2930, %v2932
    %v2934 = vrot.slane %v2920, %v2933
    %v2935 = vcombine.low %v2911, %v2927
    %v2936 = vcombine.high %v2911, %v2927
    %v2938 = vunpack.c.l.s4 1934713408
    %v2939 = vunpack.c.0.s8 %v2938
    %v2940 = vlaneseq
    %v2941 = vshrl.u32 %v2940, 7
    %v2942 = vsub.s32 %v2939, %v2941
    %v2943 = vrot.slane %v2935, %v2942
    %v2945 = vunpack.c.l.s4 1934713408
    %v2946 = vunpack.c.0.s8 %v2945
    %v2947 = vlaneseq
    %v2948 = vshrl.u32 %v2947, 7
    %v2949 = vsub.s32 %v2946, %v2948
    %v2950 = vrot.slane %v2936, %v2949
    %v2951 = vcombine.low %v2918, %v2934
    %v2952 = vcombine.high %v2918, %v2934
    %v2954 = vunpack.c.l.s4 1934713408
    %v2955 = vunpack.c.0.s8 %v2954
    %v2956 = vlaneseq
    %v2957 = vshrl.u32 %v2956, 7
    %v2958 = vsub.s32 %v2955, %v2957
    %v2959 = vrot.slane %v2951, %v2958
    %v2961 = vunpack.c.l.s4 1934713408
    %v2962 = vunpack.c.0.s8 %v2961
    %v2963 = vlaneseq
    %v2964 = vshrl.u32 %v2963, 7
    %v2965 = vsub.s32 %v2962, %v2964
    %v2966 = vrot.slane %v2952, %v2965
    %v2967 = vcombine.high %v2943, 0.0
    %v2968 = vcombine.high %v2950, 0.0
    %v2969 = vcombine.high %v2959, 0.0
    %v2970 = vcombine.high %v2966, 0.0
    %2971 = vrot.lane.b32.xlu0 %v2649, 64
    %v2972 = vpop.permute.xlu0 %2971
    %2973 = vrot.lane.b32.xlu0 %v2652, 64
    %v2974 = vpop.permute.xlu0 %2973
    %2975 = vrot.lane.b32.xlu0 %v2658, 64
    %v2976 = vpop.permute.xlu0 %2975
    %2977 = vrot.lane.b32.xlu0 %v2660, 64
    %v2978 = vpop.permute.xlu0 %2977
    %2979 = vrot.lane.b32.xlu0 %v2664, 64
    %v2980 = vpop.permute.xlu0 %2979
    %2981 = vrot.lane.b32.xlu0 %v2666, 64
    %v2982 = vpop.permute.xlu0 %2981
    %2983 = vrot.lane.b32.xlu0 %v2670, 64
    %v2984 = vpop.permute.xlu0 %2983
    %2985 = vrot.lane.b32.xlu0 %v2672, 64
    %v2986 = vpop.permute.xlu0 %2985
    %v2995 = vcombine.low %v2972, %v2980
    %v2996 = vcombine.high %v2972, %v2980
    %v2998 = vunpack.c.l.s4 1983009808
    %v2999 = vunpack.c.0.s8 %v2998
    %v3000 = vlaneseq
    %v3001 = vshrl.u32 %v3000, 7
    %v3002 = vsub.s32 %v2999, %v3001
    %v3003 = vrot.slane %v2995, %v3002
    %v3005 = vunpack.c.l.s4 1983009808
    %v3006 = vunpack.c.0.s8 %v3005
    %v3007 = vlaneseq
    %v3008 = vshrl.u32 %v3007, 7
    %v3009 = vsub.s32 %v3006, %v3008
    %v3010 = vrot.slane %v2996, %v3009
    %v3011 = vcombine.low %v2976, %v2984
    %v3012 = vcombine.high %v2976, %v2984
    %v3014 = vunpack.c.l.s4 1983009808
    %v3015 = vunpack.c.0.s8 %v3014
    %v3016 = vlaneseq
    %v3017 = vshrl.u32 %v3016, 7
    %v3018 = vsub.s32 %v3015, %v3017
    %v3019 = vrot.slane %v3011, %v3018
    %v3021 = vunpack.c.l.s4 1983009808
    %v3022 = vunpack.c.0.s8 %v3021
    %v3023 = vlaneseq
    %v3024 = vshrl.u32 %v3023, 7
    %v3025 = vsub.s32 %v3022, %v3024
    %v3026 = vrot.slane %v3012, %v3025
    %v3027 = vcombine.low %v3003, %v3019
    %v3028 = vcombine.high %v3003, %v3019
    %v3030 = vunpack.c.l.s4 1934713408
    %v3031 = vunpack.c.0.s8 %v3030
    %v3032 = vlaneseq
    %v3033 = vshrl.u32 %v3032, 7
    %v3034 = vsub.s32 %v3031, %v3033
    %v3035 = vrot.slane %v3027, %v3034
    %v3037 = vunpack.c.l.s4 1934713408
    %v3038 = vunpack.c.0.s8 %v3037
    %v3039 = vlaneseq
    %v3040 = vshrl.u32 %v3039, 7
    %v3041 = vsub.s32 %v3038, %v3040
    %v3042 = vrot.slane %v3028, %v3041
    %v3043 = vcombine.low %v3010, %v3026
    %v3044 = vcombine.high %v3010, %v3026
    %v3046 = vunpack.c.l.s4 1934713408
    %v3047 = vunpack.c.0.s8 %v3046
    %v3048 = vlaneseq
    %v3049 = vshrl.u32 %v3048, 7
    %v3050 = vsub.s32 %v3047, %v3049
    %v3051 = vrot.slane %v3043, %v3050
    %v3053 = vunpack.c.l.s4 1934713408
    %v3054 = vunpack.c.0.s8 %v3053
    %v3055 = vlaneseq
    %v3056 = vshrl.u32 %v3055, 7
    %v3057 = vsub.s32 %v3054, %v3056
    %v3058 = vrot.slane %v3044, %v3057
    %v3059 = vcombine.high %v3035, 0.0
    %v3060 = vcombine.high %v3042, 0.0
    %v3061 = vcombine.high %v3051, 0.0
    %v3062 = vcombine.high %v3058, 0.0
    %v3063 = vcombine.low %v2974, %v2982
    %v3064 = vcombine.high %v2974, %v2982
    %v3066 = vunpack.c.l.s4 1983009808
    %v3067 = vunpack.c.0.s8 %v3066
    %v3068 = vlaneseq
    %v3069 = vshrl.u32 %v3068, 7
    %v3070 = vsub.s32 %v3067, %v3069
    %v3071 = vrot.slane %v3063, %v3070
    %v3073 = vunpack.c.l.s4 1983009808
    %v3074 = vunpack.c.0.s8 %v3073
    %v3075 = vlaneseq
    %v3076 = vshrl.u32 %v3075, 7
    %v3077 = vsub.s32 %v3074, %v3076
    %v3078 = vrot.slane %v3064, %v3077
    %v3079 = vcombine.low %v2978, %v2986
    %v3080 = vcombine.high %v2978, %v2986
    %v3082 = vunpack.c.l.s4 1983009808
    %v3083 = vunpack.c.0.s8 %v3082
    %v3084 = vlaneseq
    %v3085 = vshrl.u32 %v3084, 7
    %v3086 = vsub.s32 %v3083, %v3085
    %v3087 = vrot.slane %v3079, %v3086
    %v3089 = vunpack.c.l.s4 1983009808
    %v3090 = vunpack.c.0.s8 %v3089
    %v3091 = vlaneseq
    %v3092 = vshrl.u32 %v3091, 7
    %v3093 = vsub.s32 %v3090, %v3092
    %v3094 = vrot.slane %v3080, %v3093
    %v3095 = vcombine.low %v3071, %v3087
    %v3096 = vcombine.high %v3071, %v3087
    %v3098 = vunpack.c.l.s4 1934713408
    %v3099 = vunpack.c.0.s8 %v3098
    %v3100 = vlaneseq
    %v3101 = vshrl.u32 %v3100, 7
    %v3102 = vsub.s32 %v3099, %v3101
    %v3103 = vrot.slane %v3095, %v3102
    %v3105 = vunpack.c.l.s4 1934713408
    %v3106 = vunpack.c.0.s8 %v3105
    %v3107 = vlaneseq
    %v3108 = vshrl.u32 %v3107, 7
    %v3109 = vsub.s32 %v3106, %v3108
    %v3110 = vrot.slane %v3096, %v3109
    %v3111 = vcombine.low %v3078, %v3094
    %v3112 = vcombine.high %v3078, %v3094
    %v3114 = vunpack.c.l.s4 1934713408
    %v3115 = vunpack.c.0.s8 %v3114
    %v3116 = vlaneseq
    %v3117 = vshrl.u32 %v3116, 7
    %v3118 = vsub.s32 %v3115, %v3117
    %v3119 = vrot.slane %v3111, %v3118
    %v3121 = vunpack.c.l.s4 1934713408
    %v3122 = vunpack.c.0.s8 %v3121
    %v3123 = vlaneseq
    %v3124 = vshrl.u32 %v3123, 7
    %v3125 = vsub.s32 %v3122, %v3124
    %v3126 = vrot.slane %v3112, %v3125
    %v3127 = vcombine.high %v3103, 0.0
    %v3128 = vcombine.high %v3110, 0.0
    %v3129 = vcombine.high %v3119, 0.0
    %v3130 = vcombine.high %v3126, 0.0
    %v3131 = vcombine.low %v2715, %v2722
    %v3133 = vunpack.c.l.s4 1983009808
    %v3134 = vunpack.c.0.s8 %v3133
    %v3135 = vlaneseq
    %v3136 = vshrl.u32 %v3135, 7
    %v3137 = vsub.s32 %v3134, %v3136
    %v3138 = vrot.slane %v3131, %v3137
    %v3139 = vcombine.low %v2739, %v2740
    %v3141 = vunpack.c.l.s4 1983009808
    %v3142 = vunpack.c.0.s8 %v3141
    %v3143 = vlaneseq
    %v3144 = vshrl.u32 %v3143, 7
    %v3145 = vsub.s32 %v3142, %v3144
    %v3146 = vrot.slane %v3139, %v3145
    %v3147 = vcombine.low %v2731, %v2738
    %v3149 = vunpack.c.l.s4 1983009808
    %v3150 = vunpack.c.0.s8 %v3149
    %v3151 = vlaneseq
    %v3152 = vshrl.u32 %v3151, 7
    %v3153 = vsub.s32 %v3150, %v3152
    %v3154 = vrot.slane %v3147, %v3153
    %v3155 = vcombine.low %v2741, %v2742
    %v3157 = vunpack.c.l.s4 1983009808
    %v3158 = vunpack.c.0.s8 %v3157
    %v3159 = vlaneseq
    %v3160 = vshrl.u32 %v3159, 7
    %v3161 = vsub.s32 %v3158, %v3160
    %v3162 = vrot.slane %v3155, %v3161
    %v3163 = vcombine.low %v3138, %v3146
    %v3164 = vcombine.high %v3138, %v3146
    %v3166 = vunpack.c.l.s4 1934713408
    %v3167 = vunpack.c.0.s8 %v3166
    %v3168 = vlaneseq
    %v3169 = vshrl.u32 %v3168, 7
    %v3170 = vsub.s32 %v3167, %v3169
    %v3171 = vrot.slane %v3163, %v3170
    %v3173 = vunpack.c.l.s4 1934713408
    %v3174 = vunpack.c.0.s8 %v3173
    %v3175 = vlaneseq
    %v3176 = vshrl.u32 %v3175, 7
    %v3177 = vsub.s32 %v3174, %v3176
    %v3178 = vrot.slane %v3164, %v3177
    %v3179 = vcombine.low %v3154, %v3162
    %v3180 = vcombine.high %v3154, %v3162
    %v3182 = vunpack.c.l.s4 1934713408
    %v3183 = vunpack.c.0.s8 %v3182
    %v3184 = vlaneseq
    %v3185 = vshrl.u32 %v3184, 7
    %v3186 = vsub.s32 %v3183, %v3185
    %v3187 = vrot.slane %v3179, %v3186
    %v3189 = vunpack.c.l.s4 1934713408
    %v3190 = vunpack.c.0.s8 %v3189
    %v3191 = vlaneseq
    %v3192 = vshrl.u32 %v3191, 7
    %v3193 = vsub.s32 %v3190, %v3192
    %v3194 = vrot.slane %v3180, %v3193
    %v3195 = vcombine.low %v3171, %v3187
    %v3196 = vcombine.high %v3171, %v3187
    %v3197 = vcombine.low %v3178, %v3194
    %v3198 = vcombine.high %v3178, %v3194
    %v3199 = vcombine.low %v2783, %v2790
    %v3201 = vunpack.c.l.s4 1983009808
    %v3202 = vunpack.c.0.s8 %v3201
    %v3203 = vlaneseq
    %v3204 = vshrl.u32 %v3203, 7
    %v3205 = vsub.s32 %v3202, %v3204
    %v3206 = vrot.slane %v3199, %v3205
    %v3207 = vcombine.low %v2807, %v2808
    %v3209 = vunpack.c.l.s4 1983009808
    %v3210 = vunpack.c.0.s8 %v3209
    %v3211 = vlaneseq
    %v3212 = vshrl.u32 %v3211, 7
    %v3213 = vsub.s32 %v3210, %v3212
    %v3214 = vrot.slane %v3207, %v3213
    %v3215 = vcombine.low %v2799, %v2806
    %v3217 = vunpack.c.l.s4 1983009808
    %v3218 = vunpack.c.0.s8 %v3217
    %v3219 = vlaneseq
    %v3220 = vshrl.u32 %v3219, 7
    %v3221 = vsub.s32 %v3218, %v3220
    %v3222 = vrot.slane %v3215, %v3221
    %v3223 = vcombine.low %v2809, %v2810
    %v3225 = vunpack.c.l.s4 1983009808
    %v3226 = vunpack.c.0.s8 %v3225
    %v3227 = vlaneseq
    %v3228 = vshrl.u32 %v3227, 7
    %v3229 = vsub.s32 %v3226, %v3228
    %v3230 = vrot.slane %v3223, %v3229
    %v3231 = vcombine.low %v3206, %v3214
    %v3232 = vcombine.high %v3206, %v3214
    %v3234 = vunpack.c.l.s4 1934713408
    %v3235 = vunpack.c.0.s8 %v3234
    %v3236 = vlaneseq
    %v3237 = vshrl.u32 %v3236, 7
    %v3238 = vsub.s32 %v3235, %v3237
    %v3239 = vrot.slane %v3231, %v3238
    %v3241 = vunpack.c.l.s4 1934713408
    %v3242 = vunpack.c.0.s8 %v3241
    %v3243 = vlaneseq
    %v3244 = vshrl.u32 %v3243, 7
    %v3245 = vsub.s32 %v3242, %v3244
    %v3246 = vrot.slane %v3232, %v3245
    %v3247 = vcombine.low %v3222, %v3230
    %v3248 = vcombine.high %v3222, %v3230
    %v3250 = vunpack.c.l.s4 1934713408
    %v3251 = vunpack.c.0.s8 %v3250
    %v3252 = vlaneseq
    %v3253 = vshrl.u32 %v3252, 7
    %v3254 = vsub.s32 %v3251, %v3253
    %v3255 = vrot.slane %v3247, %v3254
    %v3257 = vunpack.c.l.s4 1934713408
    %v3258 = vunpack.c.0.s8 %v3257
    %v3259 = vlaneseq
    %v3260 = vshrl.u32 %v3259, 7
    %v3261 = vsub.s32 %v3258, %v3260
    %v3262 = vrot.slane %v3248, %v3261
    %v3263 = vcombine.low %v3239, %v3255
    %v3264 = vcombine.high %v3239, %v3255
    %v3265 = vcombine.low %v3246, %v3262
    %v3266 = vcombine.high %v3246, %v3262
    %v3267 = vcombine.low %v2875, %v2882
    %v3269 = vunpack.c.l.s4 1983009808
    %v3270 = vunpack.c.0.s8 %v3269
    %v3271 = vlaneseq
    %v3272 = vshrl.u32 %v3271, 7
    %v3273 = vsub.s32 %v3270, %v3272
    %v3274 = vrot.slane %v3267, %v3273
    %v3275 = vcombine.low %v2899, %v2900
    %v3277 = vunpack.c.l.s4 1983009808
    %v3278 = vunpack.c.0.s8 %v3277
    %v3279 = vlaneseq
    %v3280 = vshrl.u32 %v3279, 7
    %v3281 = vsub.s32 %v3278, %v3280
    %v3282 = vrot.slane %v3275, %v3281
    %v3283 = vcombine.low %v2891, %v2898
    %v3285 = vunpack.c.l.s4 1983009808
    %v3286 = vunpack.c.0.s8 %v3285
    %v3287 = vlaneseq
    %v3288 = vshrl.u32 %v3287, 7
    %v3289 = vsub.s32 %v3286, %v3288
    %v3290 = vrot.slane %v3283, %v3289
    %v3291 = vcombine.low %v2901, %v2902
    %v3293 = vunpack.c.l.s4 1983009808
    %v3294 = vunpack.c.0.s8 %v3293
    %v3295 = vlaneseq
    %v3296 = vshrl.u32 %v3295, 7
    %v3297 = vsub.s32 %v3294, %v3296
    %v3298 = vrot.slane %v3291, %v3297
    %v3299 = vcombine.low %v3274, %v3282
    %v3300 = vcombine.high %v3274, %v3282
    %v3302 = vunpack.c.l.s4 1934713408
    %v3303 = vunpack.c.0.s8 %v3302
    %v3304 = vlaneseq
    %v3305 = vshrl.u32 %v3304, 7
    %v3306 = vsub.s32 %v3303, %v3305
    %v3307 = vrot.slane %v3299, %v3306
    %v3309 = vunpack.c.l.s4 1934713408
    %v3310 = vunpack.c.0.s8 %v3309
    %v3311 = vlaneseq
    %v3312 = vshrl.u32 %v3311, 7
    %v3313 = vsub.s32 %v3310, %v3312
    %v3314 = vrot.slane %v3300, %v3313
    %v3315 = vcombine.low %v3290, %v3298
    %v3316 = vcombine.high %v3290, %v3298
    %v3318 = vunpack.c.l.s4 1934713408
    %v3319 = vunpack.c.0.s8 %v3318
    %v3320 = vlaneseq
    %v3321 = vshrl.u32 %v3320, 7
    %v3322 = vsub.s32 %v3319, %v3321
    %v3323 = vrot.slane %v3315, %v3322
    %v3325 = vunpack.c.l.s4 1934713408
    %v3326 = vunpack.c.0.s8 %v3325
    %v3327 = vlaneseq
    %v3328 = vshrl.u32 %v3327, 7
    %v3329 = vsub.s32 %v3326, %v3328
    %v3330 = vrot.slane %v3316, %v3329
    %v3331 = vcombine.low %v3307, %v3323
    %v3332 = vcombine.high %v3307, %v3323
    %v3333 = vcombine.low %v3314, %v3330
    %v3334 = vcombine.high %v3314, %v3330
    %v3335 = vcombine.low %v2943, %v2950
    %v3337 = vunpack.c.l.s4 1983009808
    %v3338 = vunpack.c.0.s8 %v3337
    %v3339 = vlaneseq
    %v3340 = vshrl.u32 %v3339, 7
    %v3341 = vsub.s32 %v3338, %v3340
    %v3342 = vrot.slane %v3335, %v3341
    %v3343 = vcombine.low %v2967, %v2968
    %v3345 = vunpack.c.l.s4 1983009808
    %v3346 = vunpack.c.0.s8 %v3345
    %v3347 = vlaneseq
    %v3348 = vshrl.u32 %v3347, 7
    %v3349 = vsub.s32 %v3346, %v3348
    %v3350 = vrot.slane %v3343, %v3349
    %v3351 = vcombine.low %v2959, %v2966
    %v3353 = vunpack.c.l.s4 1983009808
    %v3354 = vunpack.c.0.s8 %v3353
    %v3355 = vlaneseq
    %v3356 = vshrl.u32 %v3355, 7
    %v3357 = vsub.s32 %v3354, %v3356
    %v3358 = vrot.slane %v3351, %v3357
    %v3359 = vcombine.low %v2969, %v2970
    %v3361 = vunpack.c.l.s4 1983009808
    %v3362 = vunpack.c.0.s8 %v3361
    %v3363 = vlaneseq
    %v3364 = vshrl.u32 %v3363, 7
    %v3365 = vsub.s32 %v3362, %v3364
    %v3366 = vrot.slane %v3359, %v3365
    %v3367 = vcombine.low %v3342, %v3350
    %v3368 = vcombine.high %v3342, %v3350
    %v3370 = vunpack.c.l.s4 1934713408
    %v3371 = vunpack.c.0.s8 %v3370
    %v3372 = vlaneseq
    %v3373 = vshrl.u32 %v3372, 7
    %v3374 = vsub.s32 %v3371, %v3373
    %v3375 = vrot.slane %v3367, %v3374
    %v3377 = vunpack.c.l.s4 1934713408
    %v3378 = vunpack.c.0.s8 %v3377
    %v3379 = vlaneseq
    %v3380 = vshrl.u32 %v3379, 7
    %v3381 = vsub.s32 %v3378, %v3380
    %v3382 = vrot.slane %v3368, %v3381
    %v3383 = vcombine.low %v3358, %v3366
    %v3384 = vcombine.high %v3358, %v3366
    %v3386 = vunpack.c.l.s4 1934713408
    %v3387 = vunpack.c.0.s8 %v3386
    %v3388 = vlaneseq
    %v3389 = vshrl.u32 %v3388, 7
    %v3390 = vsub.s32 %v3387, %v3389
    %v3391 = vrot.slane %v3383, %v3390
    %v3393 = vunpack.c.l.s4 1934713408
    %v3394 = vunpack.c.0.s8 %v3393
    %v3395 = vlaneseq
    %v3396 = vshrl.u32 %v3395, 7
    %v3397 = vsub.s32 %v3394, %v3396
    %v3398 = vrot.slane %v3384, %v3397
    %v3399 = vcombine.low %v3375, %v3391
    %v3400 = vcombine.high %v3375, %v3391
    %v3401 = vcombine.low %v3382, %v3398
    %v3402 = vcombine.high %v3382, %v3398
    %v3403 = vcombine.low %v3035, %v3042
    %v3405 = vunpack.c.l.s4 1983009808
    %v3406 = vunpack.c.0.s8 %v3405
    %v3407 = vlaneseq
    %v3408 = vshrl.u32 %v3407, 7
    %v3409 = vsub.s32 %v3406, %v3408
    %v3410 = vrot.slane %v3403, %v3409
    %v3411 = vcombine.low %v3059, %v3060
    %v3413 = vunpack.c.l.s4 1983009808
    %v3414 = vunpack.c.0.s8 %v3413
    %v3415 = vlaneseq
    %v3416 = vshrl.u32 %v3415, 7
    %v3417 = vsub.s32 %v3414, %v3416
    %v3418 = vrot.slane %v3411, %v3417
    %v3419 = vcombine.low %v3051, %v3058
    %v3421 = vunpack.c.l.s4 1983009808
    %v3422 = vunpack.c.0.s8 %v3421
    %v3423 = vlaneseq
    %v3424 = vshrl.u32 %v3423, 7
    %v3425 = vsub.s32 %v3422, %v3424
    %v3426 = vrot.slane %v3419, %v3425
    %v3427 = vcombine.low %v3061, %v3062
    %v3429 = vunpack.c.l.s4 1983009808
    %v3430 = vunpack.c.0.s8 %v3429
    %v3431 = vlaneseq
    %v3432 = vshrl.u32 %v3431, 7
    %v3433 = vsub.s32 %v3430, %v3432
    %v3434 = vrot.slane %v3427, %v3433
    %v3435 = vcombine.low %v3410, %v3418
    %v3436 = vcombine.high %v3410, %v3418
    %v3438 = vunpack.c.l.s4 1934713408
    %v3439 = vunpack.c.0.s8 %v3438
    %v3440 = vlaneseq
    %v3441 = vshrl.u32 %v3440, 7
    %v3442 = vsub.s32 %v3439, %v3441
    %v3443 = vrot.slane %v3435, %v3442
    %v3445 = vunpack.c.l.s4 1934713408
    %v3446 = vunpack.c.0.s8 %v3445
    %v3447 = vlaneseq
    %v3448 = vshrl.u32 %v3447, 7
    %v3449 = vsub.s32 %v3446, %v3448
    %v3450 = vrot.slane %v3436, %v3449
    %v3451 = vcombine.low %v3426, %v3434
    %v3452 = vcombine.high %v3426, %v3434
    %v3454 = vunpack.c.l.s4 1934713408
    %v3455 = vunpack.c.0.s8 %v3454
    %v3456 = vlaneseq
    %v3457 = vshrl.u32 %v3456, 7
    %v3458 = vsub.s32 %v3455, %v3457
    %v3459 = vrot.slane %v3451, %v3458
    %v3461 = vunpack.c.l.s4 1934713408
    %v3462 = vunpack.c.0.s8 %v3461
    %v3463 = vlaneseq
    %v3464 = vshrl.u32 %v3463, 7
    %v3465 = vsub.s32 %v3462, %v3464
    %v3466 = vrot.slane %v3452, %v3465
    %v3467 = vcombine.low %v3443, %v3459
    %v3468 = vcombine.high %v3443, %v3459
    %v3469 = vcombine.low %v3450, %v3466
    %v3470 = vcombine.high %v3450, %v3466
    %v3471 = vcombine.low %v3103, %v3110
    %v3473 = vunpack.c.l.s4 1983009808
    %v3474 = vunpack.c.0.s8 %v3473
    %v3475 = vlaneseq
    %v3476 = vshrl.u32 %v3475, 7
    %v3477 = vsub.s32 %v3474, %v3476
    %v3478 = vrot.slane %v3471, %v3477
    %v3479 = vcombine.low %v3127, %v3128
    %v3481 = vunpack.c.l.s4 1983009808
    %v3482 = vunpack.c.0.s8 %v3481
    %v3483 = vlaneseq
    %v3484 = vshrl.u32 %v3483, 7
    %v3485 = vsub.s32 %v3482, %v3484
    %v3486 = vrot.slane %v3479, %v3485
    %v3487 = vcombine.low %v3119, %v3126
    %v3489 = vunpack.c.l.s4 1983009808
    %v3490 = vunpack.c.0.s8 %v3489
    %v3491 = vlaneseq
    %v3492 = vshrl.u32 %v3491, 7
    %v3493 = vsub.s32 %v3490, %v3492
    %v3494 = vrot.slane %v3487, %v3493
    %v3495 = vcombine.low %v3129, %v3130
    %v3497 = vunpack.c.l.s4 1983009808
    %v3498 = vunpack.c.0.s8 %v3497
    %v3499 = vlaneseq
    %v3500 = vshrl.u32 %v3499, 7
    %v3501 = vsub.s32 %v3498, %v3500
    %v3502 = vrot.slane %v3495, %v3501
    %v3503 = vcombine.low %v3478, %v3486
    %v3504 = vcombine.high %v3478, %v3486
    %v3506 = vunpack.c.l.s4 1934713408
    %v3507 = vunpack.c.0.s8 %v3506
    %v3508 = vlaneseq
    %v3509 = vshrl.u32 %v3508, 7
    %v3510 = vsub.s32 %v3507, %v3509
    %v3511 = vrot.slane %v3503, %v3510
    %v3513 = vunpack.c.l.s4 1934713408
    %v3514 = vunpack.c.0.s8 %v3513
    %v3515 = vlaneseq
    %v3516 = vshrl.u32 %v3515, 7
    %v3517 = vsub.s32 %v3514, %v3516
    %v3518 = vrot.slane %v3504, %v3517
    %v3519 = vcombine.low %v3494, %v3502
    %v3520 = vcombine.high %v3494, %v3502
    %v3522 = vunpack.c.l.s4 1934713408
    %v3523 = vunpack.c.0.s8 %v3522
    %v3524 = vlaneseq
    %v3525 = vshrl.u32 %v3524, 7
    %v3526 = vsub.s32 %v3523, %v3525
    %v3527 = vrot.slane %v3519, %v3526
    %v3529 = vunpack.c.l.s4 1934713408
    %v3530 = vunpack.c.0.s8 %v3529
    %v3531 = vlaneseq
    %v3532 = vshrl.u32 %v3531, 7
    %v3533 = vsub.s32 %v3530, %v3532
    %v3534 = vrot.slane %v3520, %v3533
    %v3535 = vcombine.low %v3511, %v3527
    %v3536 = vcombine.high %v3511, %v3527
    %v3537 = vcombine.low %v3518, %v3534
    %v3538 = vcombine.high %v3518, %v3534
    %v3539 = vpack.c.bf16 %v3195, %v3195
    %v3540 = vpack.c.bf16 %v3196, %v3196
    %v3541 = vpack.c.bf16 %v3197, %v3197
    %v3542 = vpack.c.bf16 %v3198, %v3198
    %v3543 = vpack.c.bf16 %v3263, %v3263
    %v3544 = vpack.c.bf16 %v3264, %v3264
    %v3545 = vpack.c.bf16 %v3265, %v3265
    %v3546 = vpack.c.bf16 %v3266, %v3266
    %v3547 = vpack.c.bf16 %v3331, %v3331
    %v3548 = vpack.c.bf16 %v3332, %v3332
    %v3549 = vpack.c.bf16 %v3333, %v3333
    %v3550 = vpack.c.bf16 %v3334, %v3334
    %v3551 = vpack.c.bf16 %v3399, %v3399
    %v3552 = vpack.c.bf16 %v3400, %v3400
    %v3553 = vpack.c.bf16 %v3401, %v3401
    %v3554 = vpack.c.bf16 %v3402, %v3402
    %v3556 = vsel %vm1076, %v3539, 0
    %v3559 = vsel %vm1076, %v3547, 0
    %3561 = vmatprep.subr.bf16.mxu0 0
    %3562 = vmatpush1.bf16.xpose.msra.mxu0 %v3559
    %3563 = vmatprep.subr.bf16.mxu0 0
    %3564 = vmatpush1.bf16.xpose.msra.mxu0 0
    %3565 = vmatprep.subr.bf16.mxu0 0
    %3566 = vmatpush1.bf16.xpose.msra.mxu0 0
    %3567 = vmatprep.subr.bf16.mxu0 0
    %3568 = vmatpush1.bf16.xpose.msra.mxu0 0
    %3569 = vmatprep.subr.bf16.mxu0 0
    %3570 = vmatpush1.bf16.xpose.msra.mxu0 0
    %3571 = vmatprep.subr.bf16.mxu0 0
    %3572 = vmatpush1.bf16.xpose.msra.mxu0 0
    %3573 = vmatprep.subr.bf16.mxu0 0
    %3574 = vmatpush1.bf16.xpose.msra.mxu0 0
    %3575 = vmatprep.subr.bf16.mxu0 0
    %3576 = vmatpush1.bf16.xpose.msra.mxu0 0
    %3577 = vmatprep.subr.bf16.mxu0 0
    %3578 = vmatpush1.bf16.xpose.msra.mxu0 0
    %3579 = vmatprep.subr.bf16.mxu0 0
    %3580 = vmatpush1.bf16.xpose.msra.mxu0 0
    %3581 = vmatprep.subr.bf16.mxu0 0
    %3582 = vmatpush1.bf16.xpose.msra.mxu0 0
    %3583 = vmatprep.subr.bf16.mxu0 0
    %3584 = vmatpush1.bf16.xpose.msra.mxu0 0
    %3585 = vmatprep.subr.bf16.mxu0 0
    %3586 = vmatpush1.bf16.xpose.msra.mxu0 0
    %3587 = vmatprep.subr.bf16.mxu0 0
    %3588 = vmatpush1.bf16.xpose.msra.mxu0 0
    %3589 = vmatprep.subr.bf16.mxu0 0
    %3590 = vmatpush1.bf16.xpose.msra.mxu0 0
    %3591 = vmatprep.subr.bf16.mxu0 0
    %3592 = vmatpush1.bf16.xpose.msra.mxu0 0
    %3593 = vmatprep.mubr.bf16.mxu0 0
    %3594 = vmatmul.mubr.bf16.gmra.mrb[0].mxu0 %v3556
    %v3595 = vpop.f32.mrb[0].mxu0
    %v3596 = vadd.f32 0.0, %v3595
    %v3597 = vpop.f32.mrb[0].mxu0
    %v3598 = vpop.f32.mrb[0].mxu0
    %v3599 = vpop.f32.mrb[0].mxu0
    %3600 = vdwg.mxu0
    %v3602 = vsel %vm1076, %v3540, 0
    %v3605 = vsel %vm1076, %v3548, 0
    %3607 = vmatprep.subr.bf16.mxu0 0
    %3608 = vmatpush1.bf16.xpose.msra.mxu0 %v3605
    %3609 = vmatprep.subr.bf16.mxu0 0
    %3610 = vmatpush1.bf16.xpose.msra.mxu0 0
    %3611 = vmatprep.subr.bf16.mxu0 0
    %3612 = vmatpush1.bf16.xpose.msra.mxu0 0
    %3613 = vmatprep.subr.bf16.mxu0 0
    %3614 = vmatpush1.bf16.xpose.msra.mxu0 0
    %3615 = vmatprep.subr.bf16.mxu0 0
    %3616 = vmatpush1.bf16.xpose.msra.mxu0 0
    %3617 = vmatprep.subr.bf16.mxu0 0
    %3618 = vmatpush1.bf16.xpose.msra.mxu0 0
    %3619 = vmatprep.subr.bf16.mxu0 0
    %3620 = vmatpush1.bf16.xpose.msra.mxu0 0
    %3621 = vmatprep.subr.bf16.mxu0 0
    %3622 = vmatpush1.bf16.xpose.msra.mxu0 0
    %3623 = vmatprep.subr.bf16.mxu0 0
    %3624 = vmatpush1.bf16.xpose.msra.mxu0 0
    %3625 = vmatprep.subr.bf16.mxu0 0
    %3626 = vmatpush1.bf16.xpose.msra.mxu0 0
    %3627 = vmatprep.subr.bf16.mxu0 0
    %3628 = vmatpush1.bf16.xpose.msra.mxu0 0
    %3629 = vmatprep.subr.bf16.mxu0 0
    %3630 = vmatpush1.bf16.xpose.msra.mxu0 0
    %3631 = vmatprep.subr.bf16.mxu0 0
    %3632 = vmatpush1.bf16.xpose.msra.mxu0 0
    %3633 = vmatprep.subr.bf16.mxu0 0
    %3634 = vmatpush1.bf16.xpose.msra.mxu0 0
    %3635 = vmatprep.subr.bf16.mxu0 0
    %3636 = vmatpush1.bf16.xpose.msra.mxu0 0
    %3637 = vmatprep.subr.bf16.mxu0 0
    %3638 = vmatpush1.bf16.xpose.msra.mxu0 0
    %3639 = vmatprep.mubr.bf16.mxu0 0
    %3640 = vmatmul.mubr.bf16.gmra.mrb[0].mxu0 %v3602
    %v3641 = vpop.f32.mrb[0].mxu0
    %v3642 = vadd.f32 0.0, %v3641
    %v3643 = vpop.f32.mrb[0].mxu0
    %v3644 = vpop.f32.mrb[0].mxu0
    %v3645 = vpop.f32.mrb[0].mxu0
    %3646 = vdwg.mxu0
    %v3648 = vsel %vm1076, %v3541, 0
    %v3651 = vsel %vm1076, %v3549, 0
    %3653 = vmatprep.subr.bf16.mxu0 0
    %3654 = vmatpush1.bf16.xpose.msra.mxu0 %v3651
    %3655 = vmatprep.subr.bf16.mxu0 0
    %3656 = vmatpush1.bf16.xpose.msra.mxu0 0
    %3657 = vmatprep.subr.bf16.mxu0 0
    %3658 = vmatpush1.bf16.xpose.msra.mxu0 0
    %3659 = vmatprep.subr.bf16.mxu0 0
    %3660 = vmatpush1.bf16.xpose.msra.mxu0 0
    %3661 = vmatprep.subr.bf16.mxu0 0
    %3662 = vmatpush1.bf16.xpose.msra.mxu0 0
    %3663 = vmatprep.subr.bf16.mxu0 0
    %3664 = vmatpush1.bf16.xpose.msra.mxu0 0
    %3665 = vmatprep.subr.bf16.mxu0 0
    %3666 = vmatpush1.bf16.xpose.msra.mxu0 0
    %3667 = vmatprep.subr.bf16.mxu0 0
    %3668 = vmatpush1.bf16.xpose.msra.mxu0 0
    %3669 = vmatprep.subr.bf16.mxu0 0
    %3670 = vmatpush1.bf16.xpose.msra.mxu0 0
    %3671 = vmatprep.subr.bf16.mxu0 0
    %3672 = vmatpush1.bf16.xpose.msra.mxu0 0
    %3673 = vmatprep.subr.bf16.mxu0 0
    %3674 = vmatpush1.bf16.xpose.msra.mxu0 0
    %3675 = vmatprep.subr.bf16.mxu0 0
    %3676 = vmatpush1.bf16.xpose.msra.mxu0 0
    %3677 = vmatprep.subr.bf16.mxu0 0
    %3678 = vmatpush1.bf16.xpose.msra.mxu0 0
    %3679 = vmatprep.subr.bf16.mxu0 0
    %3680 = vmatpush1.bf16.xpose.msra.mxu0 0
    %3681 = vmatprep.subr.bf16.mxu0 0
    %3682 = vmatpush1.bf16.xpose.msra.mxu0 0
    %3683 = vmatprep.subr.bf16.mxu0 0
    %3684 = vmatpush1.bf16.xpose.msra.mxu0 0
    %3685 = vmatprep.mubr.bf16.mxu0 0
    %3686 = vmatmul.mubr.bf16.gmra.mrb[0].mxu0 %v3648
    %v3687 = vpop.f32.mrb[0].mxu0
    %v3688 = vadd.f32 0.0, %v3687
    %v3689 = vpop.f32.mrb[0].mxu0
    %v3690 = vpop.f32.mrb[0].mxu0
    %v3691 = vpop.f32.mrb[0].mxu0
    %3692 = vdwg.mxu0
    %v3694 = vsel %vm1076, %v3542, 0
    %v3697 = vsel %vm1076, %v3550, 0
    %3699 = vmatprep.subr.bf16.mxu0 0
    %3700 = vmatpush1.bf16.xpose.msra.mxu0 %v3697
    %3701 = vmatprep.subr.bf16.mxu0 0
    %3702 = vmatpush1.bf16.xpose.msra.mxu0 0
    %3703 = vmatprep.subr.bf16.mxu0 0
    %3704 = vmatpush1.bf16.xpose.msra.mxu0 0
    %3705 = vmatprep.subr.bf16.mxu0 0
    %3706 = vmatpush1.bf16.xpose.msra.mxu0 0
    %3707 = vmatprep.subr.bf16.mxu0 0
    %3708 = vmatpush1.bf16.xpose.msra.mxu0 0
    %3709 = vmatprep.subr.bf16.mxu0 0
    %3710 = vmatpush1.bf16.xpose.msra.mxu0 0
    %3711 = vmatprep.subr.bf16.mxu0 0
    %3712 = vmatpush1.bf16.xpose.msra.mxu0 0
    %3713 = vmatprep.subr.bf16.mxu0 0
    %3714 = vmatpush1.bf16.xpose.msra.mxu0 0
    %3715 = vmatprep.subr.bf16.mxu0 0
    %3716 = vmatpush1.bf16.xpose.msra.mxu0 0
    %3717 = vmatprep.subr.bf16.mxu0 0
    %3718 = vmatpush1.bf16.xpose.msra.mxu0 0
    %3719 = vmatprep.subr.bf16.mxu0 0
    %3720 = vmatpush1.bf16.xpose.msra.mxu0 0
    %3721 = vmatprep.subr.bf16.mxu0 0
    %3722 = vmatpush1.bf16.xpose.msra.mxu0 0
    %3723 = vmatprep.subr.bf16.mxu0 0
    %3724 = vmatpush1.bf16.xpose.msra.mxu0 0
    %3725 = vmatprep.subr.bf16.mxu0 0
    %3726 = vmatpush1.bf16.xpose.msra.mxu0 0
    %3727 = vmatprep.subr.bf16.mxu0 0
    %3728 = vmatpush1.bf16.xpose.msra.mxu0 0
    %3729 = vmatprep.subr.bf16.mxu0 0
    %3730 = vmatpush1.bf16.xpose.msra.mxu0 0
    %3731 = vmatprep.mubr.bf16.mxu0 0
    %3732 = vmatmul.mubr.bf16.gmra.mrb[0].mxu0 %v3694
    %v3733 = vpop.f32.mrb[0].mxu0
    %v3734 = vadd.f32 0.0, %v3733
    %v3735 = vpop.f32.mrb[0].mxu0
    %v3736 = vpop.f32.mrb[0].mxu0
    %v3737 = vpop.f32.mrb[0].mxu0
    %3738 = vdwg.mxu0
    %v3740 = vsel %vm1076, %v3543, 0
    %v3743 = vsel %vm1076, %v3551, 0
    %3745 = vmatprep.subr.bf16.mxu0 0
    %3746 = vmatpush1.bf16.xpose.msra.mxu0 %v3743
    %3747 = vmatprep.subr.bf16.mxu0 0
    %3748 = vmatpush1.bf16.xpose.msra.mxu0 0
    %3749 = vmatprep.subr.bf16.mxu0 0
    %3750 = vmatpush1.bf16.xpose.msra.mxu0 0
    %3751 = vmatprep.subr.bf16.mxu0 0
    %3752 = vmatpush1.bf16.xpose.msra.mxu0 0
    %3753 = vmatprep.subr.bf16.mxu0 0
    %3754 = vmatpush1.bf16.xpose.msra.mxu0 0
    %3755 = vmatprep.subr.bf16.mxu0 0
    %3756 = vmatpush1.bf16.xpose.msra.mxu0 0
    %3757 = vmatprep.subr.bf16.mxu0 0
    %3758 = vmatpush1.bf16.xpose.msra.mxu0 0
    %3759 = vmatprep.subr.bf16.mxu0 0
    %3760 = vmatpush1.bf16.xpose.msra.mxu0 0
    %3761 = vmatprep.subr.bf16.mxu0 0
    %3762 = vmatpush1.bf16.xpose.msra.mxu0 0
    %3763 = vmatprep.subr.bf16.mxu0 0
    %3764 = vmatpush1.bf16.xpose.msra.mxu0 0
    %3765 = vmatprep.subr.bf16.mxu0 0
    %3766 = vmatpush1.bf16.xpose.msra.mxu0 0
    %3767 = vmatprep.subr.bf16.mxu0 0
    %3768 = vmatpush1.bf16.xpose.msra.mxu0 0
    %3769 = vmatprep.subr.bf16.mxu0 0
    %3770 = vmatpush1.bf16.xpose.msra.mxu0 0
    %3771 = vmatprep.subr.bf16.mxu0 0
    %3772 = vmatpush1.bf16.xpose.msra.mxu0 0
    %3773 = vmatprep.subr.bf16.mxu0 0
    %3774 = vmatpush1.bf16.xpose.msra.mxu0 0
    %3775 = vmatprep.subr.bf16.mxu0 0
    %3776 = vmatpush1.bf16.xpose.msra.mxu0 0
    %3777 = vmatprep.mubr.bf16.mxu0 0
    %3778 = vmatmul.mubr.bf16.gmra.mrb[0].mxu0 %v3740
    %v3779 = vpop.f32.mrb[0].mxu0
    %v3780 = vadd.f32 0.0, %v3779
    %v3781 = vpop.f32.mrb[0].mxu0
    %v3782 = vpop.f32.mrb[0].mxu0
    %v3783 = vpop.f32.mrb[0].mxu0
    %3784 = vdwg.mxu0
    %v3786 = vsel %vm1076, %v3544, 0
    %v3789 = vsel %vm1076, %v3552, 0
    %3791 = vmatprep.subr.bf16.mxu0 0
    %3792 = vmatpush1.bf16.xpose.msra.mxu0 %v3789
    %3793 = vmatprep.subr.bf16.mxu0 0
    %3794 = vmatpush1.bf16.xpose.msra.mxu0 0
    %3795 = vmatprep.subr.bf16.mxu0 0
    %3796 = vmatpush1.bf16.xpose.msra.mxu0 0
    %3797 = vmatprep.subr.bf16.mxu0 0
    %3798 = vmatpush1.bf16.xpose.msra.mxu0 0
    %3799 = vmatprep.subr.bf16.mxu0 0
    %3800 = vmatpush1.bf16.xpose.msra.mxu0 0
    %3801 = vmatprep.subr.bf16.mxu0 0
    %3802 = vmatpush1.bf16.xpose.msra.mxu0 0
    %3803 = vmatprep.subr.bf16.mxu0 0
    %3804 = vmatpush1.bf16.xpose.msra.mxu0 0
    %3805 = vmatprep.subr.bf16.mxu0 0
    %3806 = vmatpush1.bf16.xpose.msra.mxu0 0
    %3807 = vmatprep.subr.bf16.mxu0 0
    %3808 = vmatpush1.bf16.xpose.msra.mxu0 0
    %3809 = vmatprep.subr.bf16.mxu0 0
    %3810 = vmatpush1.bf16.xpose.msra.mxu0 0
    %3811 = vmatprep.subr.bf16.mxu0 0
    %3812 = vmatpush1.bf16.xpose.msra.mxu0 0
    %3813 = vmatprep.subr.bf16.mxu0 0
    %3814 = vmatpush1.bf16.xpose.msra.mxu0 0
    %3815 = vmatprep.subr.bf16.mxu0 0
    %3816 = vmatpush1.bf16.xpose.msra.mxu0 0
    %3817 = vmatprep.subr.bf16.mxu0 0
    %3818 = vmatpush1.bf16.xpose.msra.mxu0 0
    %3819 = vmatprep.subr.bf16.mxu0 0
    %3820 = vmatpush1.bf16.xpose.msra.mxu0 0
    %3821 = vmatprep.subr.bf16.mxu0 0
    %3822 = vmatpush1.bf16.xpose.msra.mxu0 0
    %3823 = vmatprep.mubr.bf16.mxu0 0
    %3824 = vmatmul.mubr.bf16.gmra.mrb[0].mxu0 %v3786
    %v3825 = vpop.f32.mrb[0].mxu0
    %v3826 = vadd.f32 0.0, %v3825
    %v3827 = vpop.f32.mrb[0].mxu0
    %v3828 = vpop.f32.mrb[0].mxu0
    %v3829 = vpop.f32.mrb[0].mxu0
    %3830 = vdwg.mxu0
    %v3832 = vsel %vm1076, %v3545, 0
    %v3835 = vsel %vm1076, %v3553, 0
    %3837 = vmatprep.subr.bf16.mxu0 0
    %3838 = vmatpush1.bf16.xpose.msra.mxu0 %v3835
    %3839 = vmatprep.subr.bf16.mxu0 0
    %3840 = vmatpush1.bf16.xpose.msra.mxu0 0
    %3841 = vmatprep.subr.bf16.mxu0 0
    %3842 = vmatpush1.bf16.xpose.msra.mxu0 0
    %3843 = vmatprep.subr.bf16.mxu0 0
    %3844 = vmatpush1.bf16.xpose.msra.mxu0 0
    %3845 = vmatprep.subr.bf16.mxu0 0
    %3846 = vmatpush1.bf16.xpose.msra.mxu0 0
    %3847 = vmatprep.subr.bf16.mxu0 0
    %3848 = vmatpush1.bf16.xpose.msra.mxu0 0
    %3849 = vmatprep.subr.bf16.mxu0 0
    %3850 = vmatpush1.bf16.xpose.msra.mxu0 0
    %3851 = vmatprep.subr.bf16.mxu0 0
    %3852 = vmatpush1.bf16.xpose.msra.mxu0 0
    %3853 = vmatprep.subr.bf16.mxu0 0
    %3854 = vmatpush1.bf16.xpose.msra.mxu0 0
    %3855 = vmatprep.subr.bf16.mxu0 0
    %3856 = vmatpush1.bf16.xpose.msra.mxu0 0
    %3857 = vmatprep.subr.bf16.mxu0 0
    %3858 = vmatpush1.bf16.xpose.msra.mxu0 0
    %3859 = vmatprep.subr.bf16.mxu0 0
    %3860 = vmatpush1.bf16.xpose.msra.mxu0 0
    %3861 = vmatprep.subr.bf16.mxu0 0
    %3862 = vmatpush1.bf16.xpose.msra.mxu0 0
    %3863 = vmatprep.subr.bf16.mxu0 0
    %3864 = vmatpush1.bf16.xpose.msra.mxu0 0
    %3865 = vmatprep.subr.bf16.mxu0 0
    %3866 = vmatpush1.bf16.xpose.msra.mxu0 0
    %3867 = vmatprep.subr.bf16.mxu0 0
    %3868 = vmatpush1.bf16.xpose.msra.mxu0 0
    %3869 = vmatprep.mubr.bf16.mxu0 0
    %3870 = vmatmul.mubr.bf16.gmra.mrb[0].mxu0 %v3832
    %v3871 = vpop.f32.mrb[0].mxu0
    %v3872 = vadd.f32 0.0, %v3871
    %v3873 = vpop.f32.mrb[0].mxu0
    %v3874 = vpop.f32.mrb[0].mxu0
    %v3875 = vpop.f32.mrb[0].mxu0
    %3876 = vdwg.mxu0
    %v3878 = vsel %vm1076, %v3546, 0
    %v3881 = vsel %vm1076, %v3554, 0
    %3883 = vmatprep.subr.bf16.mxu0 0
    %3884 = vmatpush1.bf16.xpose.msra.mxu0 %v3881
    %3885 = vmatprep.subr.bf16.mxu0 0
    %3886 = vmatpush1.bf16.xpose.msra.mxu0 0
    %3887 = vmatprep.subr.bf16.mxu0 0
    %3888 = vmatpush1.bf16.xpose.msra.mxu0 0
    %3889 = vmatprep.subr.bf16.mxu0 0
    %3890 = vmatpush1.bf16.xpose.msra.mxu0 0
    %3891 = vmatprep.subr.bf16.mxu0 0
    %3892 = vmatpush1.bf16.xpose.msra.mxu0 0
    %3893 = vmatprep.subr.bf16.mxu0 0
    %3894 = vmatpush1.bf16.xpose.msra.mxu0 0
    %3895 = vmatprep.subr.bf16.mxu0 0
    %3896 = vmatpush1.bf16.xpose.msra.mxu0 0
    %3897 = vmatprep.subr.bf16.mxu0 0
    %3898 = vmatpush1.bf16.xpose.msra.mxu0 0
    %3899 = vmatprep.subr.bf16.mxu0 0
    %3900 = vmatpush1.bf16.xpose.msra.mxu0 0
    %3901 = vmatprep.subr.bf16.mxu0 0
    %3902 = vmatpush1.bf16.xpose.msra.mxu0 0
    %3903 = vmatprep.subr.bf16.mxu0 0
    %3904 = vmatpush1.bf16.xpose.msra.mxu0 0
    %3905 = vmatprep.subr.bf16.mxu0 0
    %3906 = vmatpush1.bf16.xpose.msra.mxu0 0
    %3907 = vmatprep.subr.bf16.mxu0 0
    %3908 = vmatpush1.bf16.xpose.msra.mxu0 0
    %3909 = vmatprep.subr.bf16.mxu0 0
    %3910 = vmatpush1.bf16.xpose.msra.mxu0 0
    %3911 = vmatprep.subr.bf16.mxu0 0
    %3912 = vmatpush1.bf16.xpose.msra.mxu0 0
    %3913 = vmatprep.subr.bf16.mxu0 0
    %3914 = vmatpush1.bf16.xpose.msra.mxu0 0
    %3915 = vmatprep.mubr.bf16.mxu0 0
    %3916 = vmatmul.mubr.bf16.gmra.mrb[0].mxu0 %v3878
    %v3917 = vpop.f32.mrb[0].mxu0
    %v3918 = vadd.f32 0.0, %v3917
    %v3919 = vpop.f32.mrb[0].mxu0
    %v3920 = vpop.f32.mrb[0].mxu0
    %v3921 = vpop.f32.mrb[0].mxu0
    %3922 = vdwg.mxu0
    %v3923 = vsel %vm1446, %v3596, -inf
    %v3924 = vsel %vm1446, %v3642, -inf
    %v3925 = vsel %vm1446, %v3688, -inf
    %v3926 = vsel %vm1446, %v3734, -inf
    %v3927 = vsel %vm1446, %v3780, -inf
    %v3928 = vsel %vm1446, %v3826, -inf
    %v3929 = vsel %vm1446, %v3872, -inf
    %v3930 = vsel %vm1446, %v3918, -inf
    %v3931 = vsel %vm1076, %v3923, -inf
    %3932 = vmax.xlane.f32.xlu0 %v3931
    %v3933 = vpop.xlane.xlu0 %3932
    %v3934 = vsel %vm1076, %v3924, -inf
    %3935 = vmax.xlane.f32.xlu0 %v3934
    %v3936 = vpop.xlane.xlu0 %3935
    %v3937 = vsel %vm1076, %v3925, -inf
    %3938 = vmax.xlane.f32.xlu0 %v3937
    %v3939 = vpop.xlane.xlu0 %3938
    %v3940 = vsel %vm1076, %v3926, -inf
    %3941 = vmax.xlane.f32.xlu0 %v3940
    %v3942 = vpop.xlane.xlu0 %3941
    %v3943 = vsel %vm1076, %v3927, -inf
    %3944 = vmax.xlane.f32.xlu0 %v3943
    %v3945 = vpop.xlane.xlu0 %3944
    %v3946 = vsel %vm1076, %v3928, -inf
    %3947 = vmax.xlane.f32.xlu0 %v3946
    %v3948 = vpop.xlane.xlu0 %3947
    %v3949 = vsel %vm1076, %v3929, -inf
    %3950 = vmax.xlane.f32.xlu0 %v3949
    %v3951 = vpop.xlane.xlu0 %3950
    %v3952 = vsel %vm1076, %v3930, -inf
    %3953 = vmax.xlane.f32.xlu0 %v3952
    %v3954 = vpop.xlane.xlu0 %3953
    %v3955 = vsub.f32 %v3923, %v3933
    %v3956 = vsub.f32 %v3924, %v3936
    %v3957 = vsub.f32 %v3925, %v3939
    %v3958 = vsub.f32 %v3926, %v3942
    %v3959 = vsub.f32 %v3927, %v3945
    %v3960 = vsub.f32 %v3928, %v3948
    %v3961 = vsub.f32 %v3929, %v3951
    %v3962 = vsub.f32 %v3930, %v3954
    %v3963 = vmul.f32 %v3955, 1.442695
    %v3964 = vpow.pop %v3963
    %v3965 = vmul.f32 %v3956, 1.442695
    %v3966 = vpow.pop %v3965
    %v3967 = vmul.f32 %v3957, 1.442695
    %v3968 = vpow.pop %v3967
    %v3969 = vmul.f32 %v3958, 1.442695
    %v3970 = vpow.pop %v3969
    %v3971 = vmul.f32 %v3959, 1.442695
    %v3972 = vpow.pop %v3971
    %v3973 = vmul.f32 %v3960, 1.442695
    %v3974 = vpow.pop %v3973
    %v3975 = vmul.f32 %v3961, 1.442695
    %v3976 = vpow.pop %v3975
    %v3977 = vmul.f32 %v3962, 1.442695
    %v3978 = vpow.pop %v3977
    %v3979 = vsel %vm1076, %v3964, 0.0
    %3980 = vadd.xlane.f32.xlu0 %v3979
    %v3981 = vpop.xlane.xlu0 %3980
    %v3982 = vsel %vm1076, %v3966, 0.0
    %3983 = vadd.xlane.f32.xlu0 %v3982
    %v3984 = vpop.xlane.xlu0 %3983
    %v3985 = vsel %vm1076, %v3968, 0.0
    %3986 = vadd.xlane.f32.xlu0 %v3985
    %v3987 = vpop.xlane.xlu0 %3986
    %v3988 = vsel %vm1076, %v3970, 0.0
    %3989 = vadd.xlane.f32.xlu0 %v3988
    %v3990 = vpop.xlane.xlu0 %3989
    %v3991 = vsel %vm1076, %v3972, 0.0
    %3992 = vadd.xlane.f32.xlu0 %v3991
    %v3993 = vpop.xlane.xlu0 %3992
    %v3994 = vsel %vm1076, %v3974, 0.0
    %3995 = vadd.xlane.f32.xlu0 %v3994
    %v3996 = vpop.xlane.xlu0 %3995
    %v3997 = vsel %vm1076, %v3976, 0.0
    %3998 = vadd.xlane.f32.xlu0 %v3997
    %v3999 = vpop.xlane.xlu0 %3998
    %v4000 = vsel %vm1076, %v3978, 0.0
    %4001 = vadd.xlane.f32.xlu0 %v4000
    %v4002 = vpop.xlane.xlu0 %4001
    %v4003 = vrcp.pop %v3981
    %v4004 = vrcp.pop %v3984
    %v4005 = vrcp.pop %v3987
    %v4006 = vrcp.pop %v3990
    %v4007 = vrcp.pop %v3993
    %v4008 = vrcp.pop %v3996
    %v4009 = vrcp.pop %v3999
    %v4010 = vrcp.pop %v4002
    %v4011 = vmul.f32 %v3964, %v4003
    %v4012 = vmul.f32 %v3966, %v4004
    %v4013 = vmul.f32 %v3968, %v4005
    %v4014 = vmul.f32 %v3970, %v4006
    %v4015 = vmul.f32 %v3972, %v4007
    %v4016 = vmul.f32 %v3974, %v4008
    %v4017 = vmul.f32 %v3976, %v4009
    %v4018 = vmul.f32 %v3978, %v4010
    %v4019 = vpack.c.bf16 %v4011, %v4011
    %v4020 = vpack.c.bf16 %v4012, %v4012
    %v4021 = vpack.c.bf16 %v4013, %v4013
    %v4022 = vpack.c.bf16 %v4014, %v4014
    %v4023 = vpack.c.bf16 %v4015, %v4015
    %v4024 = vpack.c.bf16 %v4016, %v4016
    %v4025 = vpack.c.bf16 %v4017, %v4017
    %v4026 = vpack.c.bf16 %v4018, %v4018
    %v4027 = vpack.c.bf16 %v3467, %v3467
    %v4028 = vpack.c.bf16 %v3468, %v3468
    %v4029 = vpack.c.bf16 %v3469, %v3469
    %v4030 = vpack.c.bf16 %v3470, %v3470
    %v4031 = vpack.c.bf16 %v3535, %v3535
    %v4032 = vpack.c.bf16 %v3536, %v3536
    %v4033 = vpack.c.bf16 %v3537, %v3537
    %v4034 = vpack.c.bf16 %v3538, %v3538
    %v4036 = vsel %vm1076, %v4019, 0
    %v4039 = vsel %vm1562, %v4027, 0
    %4041 = vmatprep.subr.bf16.mxu0 0
    %4042 = vmatpush1.bf16.msra.mxu0 %v4039
    %4043 = vmatprep.subr.bf16.mxu0 0
    %4044 = vmatpush1.bf16.msra.mxu0 0
    %4045 = vmatprep.subr.bf16.mxu0 0
    %4046 = vmatpush1.bf16.msra.mxu0 0
    %4047 = vmatprep.subr.bf16.mxu0 0
    %4048 = vmatpush1.bf16.msra.mxu0 0
    %4049 = vmatprep.subr.bf16.mxu0 0
    %4050 = vmatpush1.bf16.msra.mxu0 0
    %4051 = vmatprep.subr.bf16.mxu0 0
    %4052 = vmatpush1.bf16.msra.mxu0 0
    %4053 = vmatprep.subr.bf16.mxu0 0
    %4054 = vmatpush1.bf16.msra.mxu0 0
    %4055 = vmatprep.subr.bf16.mxu0 0
    %4056 = vmatpush1.bf16.msra.mxu0 0
    %4057 = vmatprep.subr.bf16.mxu0 0
    %4058 = vmatpush1.bf16.msra.mxu0 0
    %4059 = vmatprep.subr.bf16.mxu0 0
    %4060 = vmatpush1.bf16.msra.mxu0 0
    %4061 = vmatprep.subr.bf16.mxu0 0
    %4062 = vmatpush1.bf16.msra.mxu0 0
    %4063 = vmatprep.subr.bf16.mxu0 0
    %4064 = vmatpush1.bf16.msra.mxu0 0
    %4065 = vmatprep.subr.bf16.mxu0 0
    %4066 = vmatpush1.bf16.msra.mxu0 0
    %4067 = vmatprep.subr.bf16.mxu0 0
    %4068 = vmatpush1.bf16.msra.mxu0 0
    %4069 = vmatprep.subr.bf16.mxu0 0
    %4070 = vmatpush1.bf16.msra.mxu0 0
    %4071 = vmatprep.subr.bf16.mxu0 0
    %4072 = vmatpush1.bf16.msra.mxu0 0
    %4073 = vmatprep.mubr.bf16.mxu0 0
    %4074 = vmatmul.mubr.bf16.gmra.mrb[0].mxu0 %v4036
    %v4075 = vpop.f32.mrb[0].mxu0
    %v4076 = vadd.f32 0.0, %v4075
    %v4077 = vpop.f32.mrb[0].mxu0
    %v4078 = vpop.f32.mrb[0].mxu0
    %v4079 = vpop.f32.mrb[0].mxu0
    %4080 = vdwg.mxu0
    %v4082 = vsel %vm1076, %v4020, 0
    %v4085 = vsel %vm1562, %v4028, 0
    %4087 = vmatprep.subr.bf16.mxu0 0
    %4088 = vmatpush1.bf16.msra.mxu0 %v4085
    %4089 = vmatprep.subr.bf16.mxu0 0
    %4090 = vmatpush1.bf16.msra.mxu0 0
    %4091 = vmatprep.subr.bf16.mxu0 0
    %4092 = vmatpush1.bf16.msra.mxu0 0
    %4093 = vmatprep.subr.bf16.mxu0 0
    %4094 = vmatpush1.bf16.msra.mxu0 0
    %4095 = vmatprep.subr.bf16.mxu0 0
    %4096 = vmatpush1.bf16.msra.mxu0 0
    %4097 = vmatprep.subr.bf16.mxu0 0
    %4098 = vmatpush1.bf16.msra.mxu0 0
    %4099 = vmatprep.subr.bf16.mxu0 0
    %4100 = vmatpush1.bf16.msra.mxu0 0
    %4101 = vmatprep.subr.bf16.mxu0 0
    %4102 = vmatpush1.bf16.msra.mxu0 0
    %4103 = vmatprep.subr.bf16.mxu0 0
    %4104 = vmatpush1.bf16.msra.mxu0 0
    %4105 = vmatprep.subr.bf16.mxu0 0
    %4106 = vmatpush1.bf16.msra.mxu0 0
    %4107 = vmatprep.subr.bf16.mxu0 0
    %4108 = vmatpush1.bf16.msra.mxu0 0
    %4109 = vmatprep.subr.bf16.mxu0 0
    %4110 = vmatpush1.bf16.msra.mxu0 0
    %4111 = vmatprep.subr.bf16.mxu0 0
    %4112 = vmatpush1.bf16.msra.mxu0 0
    %4113 = vmatprep.subr.bf16.mxu0 0
    %4114 = vmatpush1.bf16.msra.mxu0 0
    %4115 = vmatprep.subr.bf16.mxu0 0
    %4116 = vmatpush1.bf16.msra.mxu0 0
    %4117 = vmatprep.subr.bf16.mxu0 0
    %4118 = vmatpush1.bf16.msra.mxu0 0
    %4119 = vmatprep.mubr.bf16.mxu0 0
    %4120 = vmatmul.mubr.bf16.gmra.mrb[0].mxu0 %v4082
    %v4121 = vpop.f32.mrb[0].mxu0
    %v4122 = vadd.f32 0.0, %v4121
    %v4123 = vpop.f32.mrb[0].mxu0
    %v4124 = vpop.f32.mrb[0].mxu0
    %v4125 = vpop.f32.mrb[0].mxu0
    %4126 = vdwg.mxu0
    %v4128 = vsel %vm1076, %v4021, 0
    %v4131 = vsel %vm1562, %v4029, 0
    %4133 = vmatprep.subr.bf16.mxu0 0
    %4134 = vmatpush1.bf16.msra.mxu0 %v4131
    %4135 = vmatprep.subr.bf16.mxu0 0
    %4136 = vmatpush1.bf16.msra.mxu0 0
    %4137 = vmatprep.subr.bf16.mxu0 0
    %4138 = vmatpush1.bf16.msra.mxu0 0
    %4139 = vmatprep.subr.bf16.mxu0 0
    %4140 = vmatpush1.bf16.msra.mxu0 0
    %4141 = vmatprep.subr.bf16.mxu0 0
    %4142 = vmatpush1.bf16.msra.mxu0 0
    %4143 = vmatprep.subr.bf16.mxu0 0
    %4144 = vmatpush1.bf16.msra.mxu0 0
    %4145 = vmatprep.subr.bf16.mxu0 0
    %4146 = vmatpush1.bf16.msra.mxu0 0
    %4147 = vmatprep.subr.bf16.mxu0 0
    %4148 = vmatpush1.bf16.msra.mxu0 0
    %4149 = vmatprep.subr.bf16.mxu0 0
    %4150 = vmatpush1.bf16.msra.mxu0 0
    %4151 = vmatprep.subr.bf16.mxu0 0
    %4152 = vmatpush1.bf16.msra.mxu0 0
    %4153 = vmatprep.subr.bf16.mxu0 0
    %4154 = vmatpush1.bf16.msra.mxu0 0
    %4155 = vmatprep.subr.bf16.mxu0 0
    %4156 = vmatpush1.bf16.msra.mxu0 0
    %4157 = vmatprep.subr.bf16.mxu0 0
    %4158 = vmatpush1.bf16.msra.mxu0 0
    %4159 = vmatprep.subr.bf16.mxu0 0
    %4160 = vmatpush1.bf16.msra.mxu0 0
    %4161 = vmatprep.subr.bf16.mxu0 0
    %4162 = vmatpush1.bf16.msra.mxu0 0
    %4163 = vmatprep.subr.bf16.mxu0 0
    %4164 = vmatpush1.bf16.msra.mxu0 0
    %4165 = vmatprep.mubr.bf16.mxu0 0
    %4166 = vmatmul.mubr.bf16.gmra.mrb[0].mxu0 %v4128
    %v4167 = vpop.f32.mrb[0].mxu0
    %v4168 = vadd.f32 0.0, %v4167
    %v4169 = vpop.f32.mrb[0].mxu0
    %v4170 = vpop.f32.mrb[0].mxu0
    %v4171 = vpop.f32.mrb[0].mxu0
    %4172 = vdwg.mxu0
    %v4174 = vsel %vm1076, %v4022, 0
    %v4177 = vsel %vm1562, %v4030, 0
    %4179 = vmatprep.subr.bf16.mxu0 0
    %4180 = vmatpush1.bf16.msra.mxu0 %v4177
    %4181 = vmatprep.subr.bf16.mxu0 0
    %4182 = vmatpush1.bf16.msra.mxu0 0
    %4183 = vmatprep.subr.bf16.mxu0 0
    %4184 = vmatpush1.bf16.msra.mxu0 0
    %4185 = vmatprep.subr.bf16.mxu0 0
    %4186 = vmatpush1.bf16.msra.mxu0 0
    %4187 = vmatprep.subr.bf16.mxu0 0
    %4188 = vmatpush1.bf16.msra.mxu0 0
    %4189 = vmatprep.subr.bf16.mxu0 0
    %4190 = vmatpush1.bf16.msra.mxu0 0
    %4191 = vmatprep.subr.bf16.mxu0 0
    %4192 = vmatpush1.bf16.msra.mxu0 0
    %4193 = vmatprep.subr.bf16.mxu0 0
    %4194 = vmatpush1.bf16.msra.mxu0 0
    %4195 = vmatprep.subr.bf16.mxu0 0
    %4196 = vmatpush1.bf16.msra.mxu0 0
    %4197 = vmatprep.subr.bf16.mxu0 0
    %4198 = vmatpush1.bf16.msra.mxu0 0
    %4199 = vmatprep.subr.bf16.mxu0 0
    %4200 = vmatpush1.bf16.msra.mxu0 0
    %4201 = vmatprep.subr.bf16.mxu0 0
    %4202 = vmatpush1.bf16.msra.mxu0 0
    %4203 = vmatprep.subr.bf16.mxu0 0
    %4204 = vmatpush1.bf16.msra.mxu0 0
    %4205 = vmatprep.subr.bf16.mxu0 0
    %4206 = vmatpush1.bf16.msra.mxu0 0
    %4207 = vmatprep.subr.bf16.mxu0 0
    %4208 = vmatpush1.bf16.msra.mxu0 0
    %4209 = vmatprep.subr.bf16.mxu0 0
    %4210 = vmatpush1.bf16.msra.mxu0 0
    %4211 = vmatprep.mubr.bf16.mxu0 0
    %4212 = vmatmul.mubr.bf16.gmra.mrb[0].mxu0 %v4174
    %v4213 = vpop.f32.mrb[0].mxu0
    %v4214 = vadd.f32 0.0, %v4213
    %v4215 = vpop.f32.mrb[0].mxu0
    %v4216 = vpop.f32.mrb[0].mxu0
    %v4217 = vpop.f32.mrb[0].mxu0
    %4218 = vdwg.mxu0
    %v4220 = vsel %vm1076, %v4023, 0
    %v4223 = vsel %vm1562, %v4031, 0
    %4225 = vmatprep.subr.bf16.mxu0 0
    %4226 = vmatpush1.bf16.msra.mxu0 %v4223
    %4227 = vmatprep.subr.bf16.mxu0 0
    %4228 = vmatpush1.bf16.msra.mxu0 0
    %4229 = vmatprep.subr.bf16.mxu0 0
    %4230 = vmatpush1.bf16.msra.mxu0 0
    %4231 = vmatprep.subr.bf16.mxu0 0
    %4232 = vmatpush1.bf16.msra.mxu0 0
    %4233 = vmatprep.subr.bf16.mxu0 0
    %4234 = vmatpush1.bf16.msra.mxu0 0
    %4235 = vmatprep.subr.bf16.mxu0 0
    %4236 = vmatpush1.bf16.msra.mxu0 0
    %4237 = vmatprep.subr.bf16.mxu0 0
    %4238 = vmatpush1.bf16.msra.mxu0 0
    %4239 = vmatprep.subr.bf16.mxu0 0
    %4240 = vmatpush1.bf16.msra.mxu0 0
    %4241 = vmatprep.subr.bf16.mxu0 0
    %4242 = vmatpush1.bf16.msra.mxu0 0
    %4243 = vmatprep.subr.bf16.mxu0 0
    %4244 = vmatpush1.bf16.msra.mxu0 0
    %4245 = vmatprep.subr.bf16.mxu0 0
    %4246 = vmatpush1.bf16.msra.mxu0 0
    %4247 = vmatprep.subr.bf16.mxu0 0
    %4248 = vmatpush1.bf16.msra.mxu0 0
    %4249 = vmatprep.subr.bf16.mxu0 0
    %4250 = vmatpush1.bf16.msra.mxu0 0
    %4251 = vmatprep.subr.bf16.mxu0 0
    %4252 = vmatpush1.bf16.msra.mxu0 0
    %4253 = vmatprep.subr.bf16.mxu0 0
    %4254 = vmatpush1.bf16.msra.mxu0 0
    %4255 = vmatprep.subr.bf16.mxu0 0
    %4256 = vmatpush1.bf16.msra.mxu0 0
    %4257 = vmatprep.mubr.bf16.mxu0 0
    %4258 = vmatmul.mubr.bf16.gmra.mrb[0].mxu0 %v4220
    %v4259 = vpop.f32.mrb[0].mxu0
    %v4260 = vadd.f32 0.0, %v4259
    %v4261 = vpop.f32.mrb[0].mxu0
    %v4262 = vpop.f32.mrb[0].mxu0
    %v4263 = vpop.f32.mrb[0].mxu0
    %4264 = vdwg.mxu0
    %v4266 = vsel %vm1076, %v4024, 0
    %v4269 = vsel %vm1562, %v4032, 0
    %4271 = vmatprep.subr.bf16.mxu0 0
    %4272 = vmatpush1.bf16.msra.mxu0 %v4269
    %4273 = vmatprep.subr.bf16.mxu0 0
    %4274 = vmatpush1.bf16.msra.mxu0 0
    %4275 = vmatprep.subr.bf16.mxu0 0
    %4276 = vmatpush1.bf16.msra.mxu0 0
    %4277 = vmatprep.subr.bf16.mxu0 0
    %4278 = vmatpush1.bf16.msra.mxu0 0
    %4279 = vmatprep.subr.bf16.mxu0 0
    %4280 = vmatpush1.bf16.msra.mxu0 0
    %4281 = vmatprep.subr.bf16.mxu0 0
    %4282 = vmatpush1.bf16.msra.mxu0 0
    %4283 = vmatprep.subr.bf16.mxu0 0
    %4284 = vmatpush1.bf16.msra.mxu0 0
    %4285 = vmatprep.subr.bf16.mxu0 0
    %4286 = vmatpush1.bf16.msra.mxu0 0
    %4287 = vmatprep.subr.bf16.mxu0 0
    %4288 = vmatpush1.bf16.msra.mxu0 0
    %4289 = vmatprep.subr.bf16.mxu0 0
    %4290 = vmatpush1.bf16.msra.mxu0 0
    %4291 = vmatprep.subr.bf16.mxu0 0
    %4292 = vmatpush1.bf16.msra.mxu0 0
    %4293 = vmatprep.subr.bf16.mxu0 0
    %4294 = vmatpush1.bf16.msra.mxu0 0
    %4295 = vmatprep.subr.bf16.mxu0 0
    %4296 = vmatpush1.bf16.msra.mxu0 0
    %4297 = vmatprep.subr.bf16.mxu0 0
    %4298 = vmatpush1.bf16.msra.mxu0 0
    %4299 = vmatprep.subr.bf16.mxu0 0
    %4300 = vmatpush1.bf16.msra.mxu0 0
    %4301 = vmatprep.subr.bf16.mxu0 0
    %4302 = vmatpush1.bf16.msra.mxu0 0
    %4303 = vmatprep.mubr.bf16.mxu0 0
    %4304 = vmatmul.mubr.bf16.gmra.mrb[0].mxu0 %v4266
    %v4305 = vpop.f32.mrb[0].mxu0
    %v4306 = vadd.f32 0.0, %v4305
    %v4307 = vpop.f32.mrb[0].mxu0
    %v4308 = vpop.f32.mrb[0].mxu0
    %v4309 = vpop.f32.mrb[0].mxu0
    %4310 = vdwg.mxu0
    %v4312 = vsel %vm1076, %v4025, 0
    %v4315 = vsel %vm1562, %v4033, 0
    %4317 = vmatprep.subr.bf16.mxu0 0
    %4318 = vmatpush1.bf16.msra.mxu0 %v4315
    %4319 = vmatprep.subr.bf16.mxu0 0
    %4320 = vmatpush1.bf16.msra.mxu0 0
    %4321 = vmatprep.subr.bf16.mxu0 0
    %4322 = vmatpush1.bf16.msra.mxu0 0
    %4323 = vmatprep.subr.bf16.mxu0 0
    %4324 = vmatpush1.bf16.msra.mxu0 0
    %4325 = vmatprep.subr.bf16.mxu0 0
    %4326 = vmatpush1.bf16.msra.mxu0 0
    %4327 = vmatprep.subr.bf16.mxu0 0
    %4328 = vmatpush1.bf16.msra.mxu0 0
    %4329 = vmatprep.subr.bf16.mxu0 0
    %4330 = vmatpush1.bf16.msra.mxu0 0
    %4331 = vmatprep.subr.bf16.mxu0 0
    %4332 = vmatpush1.bf16.msra.mxu0 0
    %4333 = vmatprep.subr.bf16.mxu0 0
    %4334 = vmatpush1.bf16.msra.mxu0 0
    %4335 = vmatprep.subr.bf16.mxu0 0
    %4336 = vmatpush1.bf16.msra.mxu0 0
    %4337 = vmatprep.subr.bf16.mxu0 0
    %4338 = vmatpush1.bf16.msra.mxu0 0
    %4339 = vmatprep.subr.bf16.mxu0 0
    %4340 = vmatpush1.bf16.msra.mxu0 0
    %4341 = vmatprep.subr.bf16.mxu0 0
    %4342 = vmatpush1.bf16.msra.mxu0 0
    %4343 = vmatprep.subr.bf16.mxu0 0
    %4344 = vmatpush1.bf16.msra.mxu0 0
    %4345 = vmatprep.subr.bf16.mxu0 0
    %4346 = vmatpush1.bf16.msra.mxu0 0
    %4347 = vmatprep.subr.bf16.mxu0 0
    %4348 = vmatpush1.bf16.msra.mxu0 0
    %4349 = vmatprep.mubr.bf16.mxu0 0
    %4350 = vmatmul.mubr.bf16.gmra.mrb[0].mxu0 %v4312
    %v4351 = vpop.f32.mrb[0].mxu0
    %v4352 = vadd.f32 0.0, %v4351
    %v4353 = vpop.f32.mrb[0].mxu0
    %v4354 = vpop.f32.mrb[0].mxu0
    %v4355 = vpop.f32.mrb[0].mxu0
    %4356 = vdwg.mxu0
    %v4358 = vsel %vm1076, %v4026, 0
    %v4361 = vsel %vm1562, %v4034, 0
    %4363 = vmatprep.subr.bf16.mxu0 0
    %4364 = vmatpush1.bf16.msra.mxu0 %v4361
    %4365 = vmatprep.subr.bf16.mxu0 0
    %4366 = vmatpush1.bf16.msra.mxu0 0
    %4367 = vmatprep.subr.bf16.mxu0 0
    %4368 = vmatpush1.bf16.msra.mxu0 0
    %4369 = vmatprep.subr.bf16.mxu0 0
    %4370 = vmatpush1.bf16.msra.mxu0 0
    %4371 = vmatprep.subr.bf16.mxu0 0
    %4372 = vmatpush1.bf16.msra.mxu0 0
    %4373 = vmatprep.subr.bf16.mxu0 0
    %4374 = vmatpush1.bf16.msra.mxu0 0
    %4375 = vmatprep.subr.bf16.mxu0 0
    %4376 = vmatpush1.bf16.msra.mxu0 0
    %4377 = vmatprep.subr.bf16.mxu0 0
    %4378 = vmatpush1.bf16.msra.mxu0 0
    %4379 = vmatprep.subr.bf16.mxu0 0
    %4380 = vmatpush1.bf16.msra.mxu0 0
    %4381 = vmatprep.subr.bf16.mxu0 0
    %4382 = vmatpush1.bf16.msra.mxu0 0
    %4383 = vmatprep.subr.bf16.mxu0 0
    %4384 = vmatpush1.bf16.msra.mxu0 0
    %4385 = vmatprep.subr.bf16.mxu0 0
    %4386 = vmatpush1.bf16.msra.mxu0 0
    %4387 = vmatprep.subr.bf16.mxu0 0
    %4388 = vmatpush1.bf16.msra.mxu0 0
    %4389 = vmatprep.subr.bf16.mxu0 0
    %4390 = vmatpush1.bf16.msra.mxu0 0
    %4391 = vmatprep.subr.bf16.mxu0 0
    %4392 = vmatpush1.bf16.msra.mxu0 0
    %4393 = vmatprep.subr.bf16.mxu0 0
    %4394 = vmatpush1.bf16.msra.mxu0 0
    %4395 = vmatprep.mubr.bf16.mxu0 0
    %4396 = vmatmul.mubr.bf16.gmra.mrb[0].mxu0 %v4358
    %v4397 = vpop.f32.mrb[0].mxu0
    %v4398 = vadd.f32 0.0, %v4397
    %v4399 = vpop.f32.mrb[0].mxu0
    %v4400 = vpop.f32.mrb[0].mxu0
    %v4401 = vpop.f32.mrb[0].mxu0
    %4402 = vdwg.mxu0
    %v4403 = vcombine.low %v4076, %v4168
    %v4404 = vcombine.high %v4076, %v4168
    %v4406 = vunpack.c.l.s4 1983009808
    %v4407 = vunpack.c.0.s8 %v4406
    %v4408 = vlaneseq
    %v4409 = vshrl.u32 %v4408, 7
    %v4410 = vsub.s32 %v4407, %v4409
    %v4411 = vrot.slane %v4403, %v4410
    %v4413 = vunpack.c.l.s4 1983009808
    %v4414 = vunpack.c.0.s8 %v4413
    %v4415 = vlaneseq
    %v4416 = vshrl.u32 %v4415, 7
    %v4417 = vsub.s32 %v4414, %v4416
    %v4418 = vrot.slane %v4404, %v4417
    %v4419 = vcombine.low %v4122, %v4214
    %v4420 = vcombine.high %v4122, %v4214
    %v4422 = vunpack.c.l.s4 1983009808
    %v4423 = vunpack.c.0.s8 %v4422
    %v4424 = vlaneseq
    %v4425 = vshrl.u32 %v4424, 7
    %v4426 = vsub.s32 %v4423, %v4425
    %v4427 = vrot.slane %v4419, %v4426
    %v4429 = vunpack.c.l.s4 1983009808
    %v4430 = vunpack.c.0.s8 %v4429
    %v4431 = vlaneseq
    %v4432 = vshrl.u32 %v4431, 7
    %v4433 = vsub.s32 %v4430, %v4432
    %v4434 = vrot.slane %v4420, %v4433
    %v4435 = vcombine.low %v4411, %v4427
    %v4436 = vcombine.high %v4411, %v4427
    %v4438 = vunpack.c.l.s4 1934713408
    %v4439 = vunpack.c.0.s8 %v4438
    %v4440 = vlaneseq
    %v4441 = vshrl.u32 %v4440, 7
    %v4442 = vsub.s32 %v4439, %v4441
    %v4443 = vrot.slane %v4435, %v4442
    %v4445 = vunpack.c.l.s4 1934713408
    %v4446 = vunpack.c.0.s8 %v4445
    %v4447 = vlaneseq
    %v4448 = vshrl.u32 %v4447, 7
    %v4449 = vsub.s32 %v4446, %v4448
    %v4450 = vrot.slane %v4436, %v4449
    %v4451 = vcombine.low %v4418, %v4434
    %v4452 = vcombine.high %v4418, %v4434
    %v4454 = vunpack.c.l.s4 1934713408
    %v4455 = vunpack.c.0.s8 %v4454
    %v4456 = vlaneseq
    %v4457 = vshrl.u32 %v4456, 7
    %v4458 = vsub.s32 %v4455, %v4457
    %v4459 = vrot.slane %v4451, %v4458
    %v4461 = vunpack.c.l.s4 1934713408
    %v4462 = vunpack.c.0.s8 %v4461
    %v4463 = vlaneseq
    %v4464 = vshrl.u32 %v4463, 7
    %v4465 = vsub.s32 %v4462, %v4464
    %v4466 = vrot.slane %v4452, %v4465
    %v4467 = vcombine.high %v4443, 0.0
    %v4468 = vcombine.high %v4450, 0.0
    %v4469 = vcombine.high %v4459, 0.0
    %v4470 = vcombine.high %v4466, 0.0
    %v4471 = vcombine.low %v4260, %v4352
    %v4472 = vcombine.high %v4260, %v4352
    %v4474 = vunpack.c.l.s4 1983009808
    %v4475 = vunpack.c.0.s8 %v4474
    %v4476 = vlaneseq
    %v4477 = vshrl.u32 %v4476, 7
    %v4478 = vsub.s32 %v4475, %v4477
    %v4479 = vrot.slane %v4471, %v4478
    %v4481 = vunpack.c.l.s4 1983009808
    %v4482 = vunpack.c.0.s8 %v4481
    %v4483 = vlaneseq
    %v4484 = vshrl.u32 %v4483, 7
    %v4485 = vsub.s32 %v4482, %v4484
    %v4486 = vrot.slane %v4472, %v4485
    %v4487 = vcombine.low %v4306, %v4398
    %v4488 = vcombine.high %v4306, %v4398
    %v4490 = vunpack.c.l.s4 1983009808
    %v4491 = vunpack.c.0.s8 %v4490
    %v4492 = vlaneseq
    %v4493 = vshrl.u32 %v4492, 7
    %v4494 = vsub.s32 %v4491, %v4493
    %v4495 = vrot.slane %v4487, %v4494
    %v4497 = vunpack.c.l.s4 1983009808
    %v4498 = vunpack.c.0.s8 %v4497
    %v4499 = vlaneseq
    %v4500 = vshrl.u32 %v4499, 7
    %v4501 = vsub.s32 %v4498, %v4500
    %v4502 = vrot.slane %v4488, %v4501
    %v4503 = vcombine.low %v4479, %v4495
    %v4504 = vcombine.high %v4479, %v4495
    %v4506 = vunpack.c.l.s4 1934713408
    %v4507 = vunpack.c.0.s8 %v4506
    %v4508 = vlaneseq
    %v4509 = vshrl.u32 %v4508, 7
    %v4510 = vsub.s32 %v4507, %v4509
    %v4511 = vrot.slane %v4503, %v4510
    %v4513 = vunpack.c.l.s4 1934713408
    %v4514 = vunpack.c.0.s8 %v4513
    %v4515 = vlaneseq
    %v4516 = vshrl.u32 %v4515, 7
    %v4517 = vsub.s32 %v4514, %v4516
    %v4518 = vrot.slane %v4504, %v4517
    %v4519 = vcombine.low %v4486, %v4502
    %v4520 = vcombine.high %v4486, %v4502
    %v4522 = vunpack.c.l.s4 1934713408
    %v4523 = vunpack.c.0.s8 %v4522
    %v4524 = vlaneseq
    %v4525 = vshrl.u32 %v4524, 7
    %v4526 = vsub.s32 %v4523, %v4525
    %v4527 = vrot.slane %v4519, %v4526
    %v4529 = vunpack.c.l.s4 1934713408
    %v4530 = vunpack.c.0.s8 %v4529
    %v4531 = vlaneseq
    %v4532 = vshrl.u32 %v4531, 7
    %v4533 = vsub.s32 %v4530, %v4532
    %v4534 = vrot.slane %v4520, %v4533
    %v4535 = vcombine.high %v4511, 0.0
    %v4536 = vcombine.high %v4518, 0.0
    %v4537 = vcombine.high %v4527, 0.0
    %v4538 = vcombine.high %v4534, 0.0
    %v4539 = vcombine.low %v4443, %v4450
    %v4541 = vunpack.c.l.s4 1983009808
    %v4542 = vunpack.c.0.s8 %v4541
    %v4543 = vlaneseq
    %v4544 = vshrl.u32 %v4543, 7
    %v4545 = vsub.s32 %v4542, %v4544
    %v4546 = vrot.slane %v4539, %v4545
    %v4547 = vcombine.low %v4467, %v4468
    %v4549 = vunpack.c.l.s4 1983009808
    %v4550 = vunpack.c.0.s8 %v4549
    %v4551 = vlaneseq
    %v4552 = vshrl.u32 %v4551, 7
    %v4553 = vsub.s32 %v4550, %v4552
    %v4554 = vrot.slane %v4547, %v4553
    %v4555 = vcombine.low %v4459, %v4466
    %v4557 = vunpack.c.l.s4 1983009808
    %v4558 = vunpack.c.0.s8 %v4557
    %v4559 = vlaneseq
    %v4560 = vshrl.u32 %v4559, 7
    %v4561 = vsub.s32 %v4558, %v4560
    %v4562 = vrot.slane %v4555, %v4561
    %v4563 = vcombine.low %v4469, %v4470
    %v4565 = vunpack.c.l.s4 1983009808
    %v4566 = vunpack.c.0.s8 %v4565
    %v4567 = vlaneseq
    %v4568 = vshrl.u32 %v4567, 7
    %v4569 = vsub.s32 %v4566, %v4568
    %v4570 = vrot.slane %v4563, %v4569
    %v4571 = vcombine.low %v4546, %v4554
    %v4572 = vcombine.high %v4546, %v4554
    %v4574 = vunpack.c.l.s4 1934713408
    %v4575 = vunpack.c.0.s8 %v4574
    %v4576 = vlaneseq
    %v4577 = vshrl.u32 %v4576, 7
    %v4578 = vsub.s32 %v4575, %v4577
    %v4579 = vrot.slane %v4571, %v4578
    %v4581 = vunpack.c.l.s4 1934713408
    %v4582 = vunpack.c.0.s8 %v4581
    %v4583 = vlaneseq
    %v4584 = vshrl.u32 %v4583, 7
    %v4585 = vsub.s32 %v4582, %v4584
    %v4586 = vrot.slane %v4572, %v4585
    %v4587 = vcombine.low %v4562, %v4570
    %v4588 = vcombine.high %v4562, %v4570
    %v4590 = vunpack.c.l.s4 1934713408
    %v4591 = vunpack.c.0.s8 %v4590
    %v4592 = vlaneseq
    %v4593 = vshrl.u32 %v4592, 7
    %v4594 = vsub.s32 %v4591, %v4593
    %v4595 = vrot.slane %v4587, %v4594
    %v4597 = vunpack.c.l.s4 1934713408
    %v4598 = vunpack.c.0.s8 %v4597
    %v4599 = vlaneseq
    %v4600 = vshrl.u32 %v4599, 7
    %v4601 = vsub.s32 %v4598, %v4600
    %v4602 = vrot.slane %v4588, %v4601
    %v4603 = vcombine.low %v4579, %v4595
    %v4604 = vcombine.high %v4579, %v4595
    %v4605 = vcombine.low %v4586, %v4602
    %v4606 = vcombine.high %v4586, %v4602
    %v4607 = vcombine.low %v4511, %v4518
    %v4609 = vunpack.c.l.s4 1983009808
    %v4610 = vunpack.c.0.s8 %v4609
    %v4611 = vlaneseq
    %v4612 = vshrl.u32 %v4611, 7
    %v4613 = vsub.s32 %v4610, %v4612
    %v4614 = vrot.slane %v4607, %v4613
    %v4615 = vcombine.low %v4535, %v4536
    %v4617 = vunpack.c.l.s4 1983009808
    %v4618 = vunpack.c.0.s8 %v4617
    %v4619 = vlaneseq
    %v4620 = vshrl.u32 %v4619, 7
    %v4621 = vsub.s32 %v4618, %v4620
    %v4622 = vrot.slane %v4615, %v4621
    %v4623 = vcombine.low %v4527, %v4534
    %v4625 = vunpack.c.l.s4 1983009808
    %v4626 = vunpack.c.0.s8 %v4625
    %v4627 = vlaneseq
    %v4628 = vshrl.u32 %v4627, 7
    %v4629 = vsub.s32 %v4626, %v4628
    %v4630 = vrot.slane %v4623, %v4629
    %v4631 = vcombine.low %v4537, %v4538
    %v4633 = vunpack.c.l.s4 1983009808
    %v4634 = vunpack.c.0.s8 %v4633
    %v4635 = vlaneseq
    %v4636 = vshrl.u32 %v4635, 7
    %v4637 = vsub.s32 %v4634, %v4636
    %v4638 = vrot.slane %v4631, %v4637
    %v4639 = vcombine.low %v4614, %v4622
    %v4640 = vcombine.high %v4614, %v4622
    %v4642 = vunpack.c.l.s4 1934713408
    %v4643 = vunpack.c.0.s8 %v4642
    %v4644 = vlaneseq
    %v4645 = vshrl.u32 %v4644, 7
    %v4646 = vsub.s32 %v4643, %v4645
    %v4647 = vrot.slane %v4639, %v4646
    %v4649 = vunpack.c.l.s4 1934713408
    %v4650 = vunpack.c.0.s8 %v4649
    %v4651 = vlaneseq
    %v4652 = vshrl.u32 %v4651, 7
    %v4653 = vsub.s32 %v4650, %v4652
    %v4654 = vrot.slane %v4640, %v4653
    %v4655 = vcombine.low %v4630, %v4638
    %v4656 = vcombine.high %v4630, %v4638
    %v4658 = vunpack.c.l.s4 1934713408
    %v4659 = vunpack.c.0.s8 %v4658
    %v4660 = vlaneseq
    %v4661 = vshrl.u32 %v4660, 7
    %v4662 = vsub.s32 %v4659, %v4661
    %v4663 = vrot.slane %v4655, %v4662
    %v4665 = vunpack.c.l.s4 1934713408
    %v4666 = vunpack.c.0.s8 %v4665
    %v4667 = vlaneseq
    %v4668 = vshrl.u32 %v4667, 7
    %v4669 = vsub.s32 %v4666, %v4668
    %v4670 = vrot.slane %v4656, %v4669
    %v4671 = vcombine.low %v4647, %v4663
    %v4672 = vcombine.high %v4647, %v4663
    %v4673 = vcombine.low %v4654, %v4670
    %v4674 = vcombine.high %v4654, %v4670
    %4677 = vrot.lane.b32.xlu0 %v4604, 8
    %v4678 = vpop.permute.xlu0 %4677
    %4679 = vrot.lane.b32.xlu0 %v4672, 8
    %v4680 = vpop.permute.xlu0 %4679
    %4685 = vrot.lane.b32.xlu0 %v4605, 16
    %v4686 = vpop.permute.xlu0 %4685
    %4687 = vrot.lane.b32.xlu0 %v4673, 16
    %v4688 = vpop.permute.xlu0 %4687
    %4693 = vrot.lane.b32.xlu0 %v4606, 24
    %v4694 = vpop.permute.xlu0 %4693
    %4695 = vrot.lane.b32.xlu0 %v4674, 24
    %v4696 = vpop.permute.xlu0 %4695
    %v4699 = vsel %vm1076, %v4603, %v4678
    %v4700 = vsel %vm1076, %v4671, %v4680
    %v4701 = vsel %vm2226, %v4699, %v4686
    %v4702 = vsel %vm2226, %v4700, %v4688
    %v4703 = vsel %vm2229, %v4701, %v4694
    %v4704 = vsel %vm2229, %v4702, %v4696
    %v4705 = vpack.c.bf16 %v4704, %v4703
    %s4706 = scalar_lea.vmem %s5, 16
    %v4707 = vld [vmem:[%s4706] sm:$0xf]
    %v4708 = vld [vmem:[%s4706 + $0x4] sm:$0xf]
    %v4709 = vld [vmem:[%s4706 + $0x8] sm:$0xf]
    %v4710 = vld [vmem:[%s4706 + $0xc] sm:$0xf]
    %s4711 = scalar_lea.vmem %s6, 1
    %v4712 = vld [vmem:[%s4711] sm:$0x1]
    %v4714 = vlaneseq
    %v4715 = vshrl.u32 %v4714, 7
    %v4716 = vsub.s32 0, %v4715
    %v4717 = vrot.slane %v4712, %v4716
    %v4723 = vunpack.c.l.b16 %v4707
    %v4724 = vunpack.c.l.b16 %v4708
    %v4725 = vunpack.c.l.b16 %v4709
    %v4726 = vunpack.c.l.b16 %v4710
    %v4727 = vpack.c.b16 %v4724, %v4723
    %v4728 = vpack.c.b16 %v4726, %v4725
    %v4732 = vsel %vm64, %v4705, 0
    %4734 = vmatprep.subr.bf16.mxu0 0
    %4735 = vmatpush1.bf16.msra.mxu0 %v4727
    %4736 = vmatprep.subr.bf16.mxu0 0
    %4737 = vmatpush1.bf16.msra.mxu0 %v4728
    %4738 = vmatprep.subr.bf16.mxu0 0
    %4739 = vmatpush1.bf16.msra.mxu0 0
    %4740 = vmatprep.subr.bf16.mxu0 0
    %4741 = vmatpush1.bf16.msra.mxu0 0
    %4742 = vmatprep.subr.bf16.mxu0 0
    %4743 = vmatpush1.bf16.msra.mxu0 0
    %4744 = vmatprep.subr.bf16.mxu0 0
    %4745 = vmatpush1.bf16.msra.mxu0 0
    %4746 = vmatprep.subr.bf16.mxu0 0
    %4747 = vmatpush1.bf16.msra.mxu0 0
    %4748 = vmatprep.subr.bf16.mxu0 0
    %4749 = vmatpush1.bf16.msra.mxu0 0
    %4750 = vmatprep.subr.bf16.mxu0 0
    %4751 = vmatpush1.bf16.msra.mxu0 0
    %4752 = vmatprep.subr.bf16.mxu0 0
    %4753 = vmatpush1.bf16.msra.mxu0 0
    %4754 = vmatprep.subr.bf16.mxu0 0
    %4755 = vmatpush1.bf16.msra.mxu0 0
    %4756 = vmatprep.subr.bf16.mxu0 0
    %4757 = vmatpush1.bf16.msra.mxu0 0
    %4758 = vmatprep.subr.bf16.mxu0 0
    %4759 = vmatpush1.bf16.msra.mxu0 0
    %4760 = vmatprep.subr.bf16.mxu0 0
    %4761 = vmatpush1.bf16.msra.mxu0 0
    %4762 = vmatprep.subr.bf16.mxu0 0
    %4763 = vmatpush1.bf16.msra.mxu0 0
    %4764 = vmatprep.subr.bf16.mxu0 0
    %4765 = vmatpush1.bf16.msra.mxu0 0
    %4766 = vmatprep.mubr.bf16.mxu0 0
    %4767 = vmatmul.mubr.bf16.gmra.mrb[0].mxu0 %v4732
    %v4768 = vpop.f32.mrb[0].mxu0
    %v4769 = vadd.f32 %v4717, %v4768
    %v4770 = vpop.f32.mrb[0].mxu0
    %v4771 = vpop.f32.mrb[0].mxu0
    %v4772 = vadd.f32 %v4717, %v4771
    %v4773 = vpop.f32.mrb[0].mxu0
    %4774 = vdwg.mxu0
    %v4775 = vadd.f32 %v2537, %v4769
    %v4776 = vadd.f32 %v2538, %v4772
    %s4777 = scalar_lea.vmem %s7, 1
    %v4778 = vld [vmem:[%s4777] sm:$0x1]
    %s4779 = scalar_lea.vmem %s8, 1
    %v4780 = vld [vmem:[%s4779] sm:$0x1]
    %v4781 = vsel %vm64, %v4775, 0.0
    %4782 = vadd.xlane.f32.xlu0 %v4781
    %v4783 = vpop.xlane.xlu0 %4782
    %v4784 = vsel %vm64, %v4776, 0.0
    %4785 = vadd.xlane.f32.xlu0 %v4784
    %v4786 = vpop.xlane.xlu0 %4785
    %v4787 = vmul.f32 %v4783, %v71
    %v4788 = vmul.f32 %v4786, %v71
    %v4789 = vsub.f32 %v4775, %v4787
    %v4790 = vsub.f32 %v4776, %v4788
    %v4791 = vmul.f32 %v4789, %v4789
    %v4792 = vmul.f32 %v4790, %v4790
    %v4793 = vsel %vm64, %v4791, 0.0
    %4794 = vadd.xlane.f32.xlu0 %v4793
    %v4795 = vpop.xlane.xlu0 %4794
    %v4796 = vsel %vm64, %v4792, 0.0
    %4797 = vadd.xlane.f32.xlu0 %v4796
    %v4798 = vpop.xlane.xlu0 %4797
    %v4799 = vmul.f32 %v4795, %v71
    %v4800 = vmul.f32 %v4798, %v71
    %v4801 = vadd.f32 %v4799, 1e-05
    %v4802 = vadd.f32 %v4800, 1e-05
    %v4803 = vrsqrt.pop %v4801
    %v4804 = vrsqrt.pop %v4802
    %v4805 = vmul.f32 %v4789, %v4803
    %v4806 = vmul.f32 %v4790, %v4804
    %v4808 = vlaneseq
    %v4809 = vshrl.u32 %v4808, 7
    %v4810 = vsub.s32 0, %v4809
    %v4811 = vrot.slane %v4778, %v4810
    %v4813 = vmul.f32 %v4805, %v4811
    %v4814 = vmul.f32 %v4806, %v4811
    %v4816 = vlaneseq
    %v4817 = vshrl.u32 %v4816, 7
    %v4818 = vsub.s32 0, %v4817
    %v4819 = vrot.slane %v4780, %v4818
    %v4821 = vadd.f32 %v4813, %v4819
    %v4822 = vadd.f32 %v4814, %v4819
    %v4823 = vpack.c.bf16 %v4822, %v4821
    %s4824 = scalar_lea.vmem %s9, 16
    %v4825 = vld [vmem:[%s4824] sm:$0xf]
    %v4826 = vld [vmem:[%s4824 + $0x4] sm:$0xf]
    %v4827 = vld [vmem:[%s4824 + $0x8] sm:$0xf]
    %v4828 = vld [vmem:[%s4824 + $0xc] sm:$0xf]
    %s4829 = scalar_lea.vmem %s10, 1
    %v4830 = vld [vmem:[%s4829] sm:$0x1]
    %v4832 = vlaneseq
    %v4833 = vshrl.u32 %v4832, 7
    %v4834 = vsub.s32 0, %v4833
    %v4835 = vrot.slane %v4830, %v4834
    %v4841 = vunpack.c.l.b16 %v4825
    %v4842 = vunpack.c.l.b16 %v4826
    %v4843 = vunpack.c.l.b16 %v4827
    %v4844 = vunpack.c.l.b16 %v4828
    %v4845 = vpack.c.b16 %v4842, %v4841
    %v4846 = vpack.c.b16 %v4844, %v4843
    %v4850 = vsel %vm64, %v4823, 0
    %4852 = vmatprep.subr.bf16.mxu0 0
    %4853 = vmatpush1.bf16.msra.mxu0 %v4845
    %4854 = vmatprep.subr.bf16.mxu0 0
    %4855 = vmatpush1.bf16.msra.mxu0 %v4846
    %4856 = vmatprep.subr.bf16.mxu0 0
    %4857 = vmatpush1.bf16.msra.mxu0 0
    %4858 = vmatprep.subr.bf16.mxu0 0
    %4859 = vmatpush1.bf16.msra.mxu0 0
    %4860 = vmatprep.subr.bf16.mxu0 0
    %4861 = vmatpush1.bf16.msra.mxu0 0
    %4862 = vmatprep.subr.bf16.mxu0 0
    %4863 = vmatpush1.bf16.msra.mxu0 0
    %4864 = vmatprep.subr.bf16.mxu0 0
    %4865 = vmatpush1.bf16.msra.mxu0 0
    %4866 = vmatprep.subr.bf16.mxu0 0
    %4867 = vmatpush1.bf16.msra.mxu0 0
    %4868 = vmatprep.subr.bf16.mxu0 0
    %4869 = vmatpush1.bf16.msra.mxu0 0
    %4870 = vmatprep.subr.bf16.mxu0 0
    %4871 = vmatpush1.bf16.msra.mxu0 0
    %4872 = vmatprep.subr.bf16.mxu0 0
    %4873 = vmatpush1.bf16.msra.mxu0 0
    %4874 = vmatprep.subr.bf16.mxu0 0
    %4875 = vmatpush1.bf16.msra.mxu0 0
    %4876 = vmatprep.subr.bf16.mxu0 0
    %4877 = vmatpush1.bf16.msra.mxu0 0
    %4878 = vmatprep.subr.bf16.mxu0 0
    %4879 = vmatpush1.bf16.msra.mxu0 0
    %4880 = vmatprep.subr.bf16.mxu0 0
    %4881 = vmatpush1.bf16.msra.mxu0 0
    %4882 = vmatprep.subr.bf16.mxu0 0
    %4883 = vmatpush1.bf16.msra.mxu0 0
    %4884 = vmatprep.mubr.bf16.mxu0 0
    %4885 = vmatmul.mubr.bf16.gmra.mrb[0].mxu0 %v4850
    %v4886 = vpop.f32.mrb[0].mxu0
    %v4887 = vadd.f32 %v4835, %v4886
    %v4888 = vpop.f32.mrb[0].mxu0
    %v4889 = vpop.f32.mrb[0].mxu0
    %v4890 = vadd.f32 %v4835, %v4889
    %v4891 = vpop.f32.mrb[0].mxu0
    %4892 = vdwg.mxu0
    %v4893 = vmul.f32 %v4887, 0.5
    %v4894 = vmul.f32 %v4890, 0.5
    %v4895 = vmul.f32 %v4887, 0.70710677
    %v4896 = vmul.f32 %v4890, 0.70710677
    %v4897 = verf.f32.pop %v4895
    %v4898 = verf.f32.pop %v4896
    %v4899 = vadd.f32 %v4897, 1.0
    %v4900 = vadd.f32 %v4898, 1.0
    %v4901 = vmul.f32 %v4893, %v4899
    %v4902 = vmul.f32 %v4894, %v4900
    %v4903 = vpack.c.bf16 %v4902, %v4901
    %s4904 = scalar_lea.vmem %s11, 64
    %v4905 = vld [vmem:[%s4904] sm:$0xf]
    %v4906 = vld [vmem:[%s4904 + $0x4] sm:$0xf]
    %v4907 = vld [vmem:[%s4904 + $0x8] sm:$0xf]
    %v4908 = vld [vmem:[%s4904 + $0xc] sm:$0xf]
    %v4909 = vld [vmem:[%s4904 + $0x10] sm:$0xf]
    %v4910 = vld [vmem:[%s4904 + $0x14] sm:$0xf]
    %v4911 = vld [vmem:[%s4904 + $0x18] sm:$0xf]
    %v4912 = vld [vmem:[%s4904 + $0x1c] sm:$0xf]
    %v4913 = vld [vmem:[%s4904 + $0x20] sm:$0xf]
    %v4914 = vld [vmem:[%s4904 + $0x24] sm:$0xf]
    %v4915 = vld [vmem:[%s4904 + $0x28] sm:$0xf]
    %v4916 = vld [vmem:[%s4904 + $0x2c] sm:$0xf]
    %v4917 = vld [vmem:[%s4904 + $0x30] sm:$0xf]
    %v4918 = vld [vmem:[%s4904 + $0x34] sm:$0xf]
    %v4919 = vld [vmem:[%s4904 + $0x38] sm:$0xf]
    %v4920 = vld [vmem:[%s4904 + $0x3c] sm:$0xf]
    %s4921 = scalar_lea.vmem %s12, 1
    %v4922 = vld [vmem:[%s4921] sm:$0x1]
    %v4924 = vlaneseq
    %v4925 = vshrl.u32 %v4924, 7
    %v4926 = vsub.s32 0, %v4925
    %v4927 = vrot.slane %v4922, %v4926
    %v4945 = vunpack.c.l.b16 %v4905
    %v4946 = vunpack.c.l.b16 %v4906
    %v4947 = vunpack.c.l.b16 %v4907
    %v4948 = vunpack.c.l.b16 %v4908
    %v4949 = vunpack.c.l.b16 %v4909
    %v4950 = vunpack.c.l.b16 %v4910
    %v4951 = vunpack.c.l.b16 %v4911
    %v4952 = vunpack.c.l.b16 %v4912
    %v4953 = vunpack.c.l.b16 %v4913
    %v4954 = vunpack.c.l.b16 %v4914
    %v4955 = vunpack.c.l.b16 %v4915
    %v4956 = vunpack.c.l.b16 %v4916
    %v4957 = vunpack.c.l.b16 %v4917
    %v4958 = vunpack.c.l.b16 %v4918
    %v4959 = vunpack.c.l.b16 %v4919
    %v4960 = vunpack.c.l.b16 %v4920
    %v4961 = vpack.c.b16 %v4946, %v4945
    %v4962 = vpack.c.b16 %v4948, %v4947
    %v4963 = vpack.c.b16 %v4950, %v4949
    %v4964 = vpack.c.b16 %v4952, %v4951
    %v4965 = vpack.c.b16 %v4954, %v4953
    %v4966 = vpack.c.b16 %v4956, %v4955
    %v4967 = vpack.c.b16 %v4958, %v4957
    %v4968 = vpack.c.b16 %v4960, %v4959
    %4977 = vmatprep.subr.bf16.mxu0 0
    %4978 = vmatpush1.bf16.msra.mxu0 %v4961
    %4979 = vmatprep.subr.bf16.mxu0 0
    %4980 = vmatpush1.bf16.msra.mxu0 %v4962
    %4981 = vmatprep.subr.bf16.mxu0 0
    %4982 = vmatpush1.bf16.msra.mxu0 %v4963
    %4983 = vmatprep.subr.bf16.mxu0 0
    %4984 = vmatpush1.bf16.msra.mxu0 %v4964
    %4985 = vmatprep.subr.bf16.mxu0 0
    %4986 = vmatpush1.bf16.msra.mxu0 %v4965
    %4987 = vmatprep.subr.bf16.mxu0 0
    %4988 = vmatpush1.bf16.msra.mxu0 %v4966
    %4989 = vmatprep.subr.bf16.mxu0 0
    %4990 = vmatpush1.bf16.msra.mxu0 %v4967
    %4991 = vmatprep.subr.bf16.mxu0 0
    %4992 = vmatpush1.bf16.msra.mxu0 %v4968
    %4993 = vmatprep.subr.bf16.mxu0 0
    %4994 = vmatpush1.bf16.msra.mxu0 0
    %4995 = vmatprep.subr.bf16.mxu0 0
    %4996 = vmatpush1.bf16.msra.mxu0 0
    %4997 = vmatprep.subr.bf16.mxu0 0
    %4998 = vmatpush1.bf16.msra.mxu0 0
    %4999 = vmatprep.subr.bf16.mxu0 0
    %5000 = vmatpush1.bf16.msra.mxu0 0
    %5001 = vmatprep.subr.bf16.mxu0 0
    %5002 = vmatpush1.bf16.msra.mxu0 0
    %5003 = vmatprep.subr.bf16.mxu0 0
    %5004 = vmatpush1.bf16.msra.mxu0 0
    %5005 = vmatprep.subr.bf16.mxu0 0
    %5006 = vmatpush1.bf16.msra.mxu0 0
    %5007 = vmatprep.subr.bf16.mxu0 0
    %5008 = vmatpush1.bf16.msra.mxu0 0
    %5009 = vmatprep.mubr.bf16.mxu0 0
    %5010 = vmatmul.mubr.bf16.gmra.mrb[0].mxu0 %v4903
    %v5011 = vpop.f32.mrb[0].mxu0
    %v5012 = vadd.f32 %v4927, %v5011
    %v5013 = vpop.f32.mrb[0].mxu0
    %v5014 = vpop.f32.mrb[0].mxu0
    %v5015 = vadd.f32 %v4927, %v5014
    %v5016 = vpop.f32.mrb[0].mxu0
    %5017 = vdwg.mxu0
    %v5018 = vadd.f32 %v4775, %v5012
    %v5019 = vadd.f32 %v4776, %v5015
    %v5020 = vld [vmem:[%s13] sm:$0x1]
    %v5021 = vld [vmem:[%s14] sm:$0x1]
    %v5024 = vrot.slane %v5019, 7
    %vm5027 = vcmask 261127
    %v5028 = vsel %vm5027, %v5018, 0.0
    %5029 = vadd.xlane.f32.xlu0 %v5028
    %v5030 = vpop.xlane.xlu0 %5029
    %vm5031 = vcmask 253952
    %v5032 = vsel %vm5031, %v5024, 0.0
    %5033 = vadd.xlane.f32.xlu0 %v5032
    %v5034 = vpop.xlane.xlu0 %5033
    %v5035 = vmul.f32 %v5030, %v71
    %v5036 = vmul.f32 %v5034, %v71
    %v5039 = vrot.slane %v5036, 1
    %v5042 = vsub.f32 %v5018, %v5035
    %v5043 = vsub.f32 %v5019, %v5039
    %v5044 = vmul.f32 %v5042, %v5042
    %v5045 = vmul.f32 %v5043, %v5043
    %v5048 = vrot.slane %v5045, 7
    %v5051 = vsel %vm5027, %v5044, 0.0
    %5052 = vadd.xlane.f32.xlu0 %v5051
    %v5053 = vpop.xlane.xlu0 %5052
    %v5054 = vsel %vm5031, %v5048, 0.0
    %5055 = vadd.xlane.f32.xlu0 %v5054
    %v5056 = vpop.xlane.xlu0 %5055
    %v5057 = vmul.f32 %v5053, %v71
    %v5058 = vmul.f32 %v5056, %v71
    %v5059 = vadd.f32 %v5057, 1e-05
    %v5060 = vadd.f32 %v5058, 1e-05
    %v5061 = vrsqrt.pop %v5059
    %v5062 = vrsqrt.pop %v5060
    %v5065 = vrot.slane %v5062, 1
    %v5068 = vmul.f32 %v5042, %v5061
    %v5069 = vmul.f32 %v5043, %v5065
    %v5071 = vlaneseq
    %v5072 = vshrl.u32 %v5071, 7
    %v5073 = vsub.s32 0, %v5072
    %v5074 = vrot.slane %v5020, %v5073
    %v5076 = vmul.f32 %v5068, %v5074
    %v5077 = vmul.f32 %v5069, %v5074
    %v5079 = vlaneseq
    %v5080 = vshrl.u32 %v5079, 7
    %v5081 = vsub.s32 0, %v5080
    %v5082 = vrot.slane %v5021, %v5081
    %v5084 = vadd.f32 %v5076, %v5082
    %v5085 = vadd.f32 %v5077, %v5082
    %v5086 = vpack.c.bf16 %v5084, %v5084
    %v5087 = vpack.c.bf16 %v5085, %v5085
    %v5088 = vld [vmem:[%s15] sm:$0xf]
    %v5089 = vld [vmem:[%s15 + $0x4] sm:$0xf]
    %v5090 = vld [vmem:[%s15 + $0x8] sm:$0xf]
    %v5091 = vld [vmem:[%s15 + $0xc] sm:$0xf]
    %v5094 = vunpack.c.l.b16 %v5086
    %v5095 = vunpack.c.l.b16 %v5087
    %v5096 = vrot.slane %v5094, 7
    %v5097 = vrot.slane %v5095, 6
    %vm5098 = vcmask 1041409
    %v5099 = vsel %vm5098, %v5097, %v5096
    %v5100 = vpack.c.b16 %v5099, %v5099
    %v5105 = vunpack.c.l.b16 %v5088
    %v5106 = vunpack.c.l.b16 %v5089
    %v5107 = vunpack.c.l.b16 %v5090
    %v5108 = vunpack.c.l.b16 %v5091
    %v5109 = vpack.c.b16 %v5106, %v5105
    %v5110 = vpack.c.b16 %v5108, %v5107
    %v5114 = vsel %vm64, %v5100, 0
    %5116 = vmatprep.subr.bf16.mxu0 0
    %5117 = vmatpush1.bf16.msra.mxu0 %v5109
    %5118 = vmatprep.subr.bf16.mxu0 0
    %5119 = vmatpush1.bf16.msra.mxu0 %v5110
    %5120 = vmatprep.subr.bf16.mxu0 0
    %5121 = vmatpush1.bf16.msra.mxu0 0
    %5122 = vmatprep.subr.bf16.mxu0 0
    %5123 = vmatpush1.bf16.msra.mxu0 0
    %5124 = vmatprep.subr.bf16.mxu0 0
    %5125 = vmatpush1.bf16.msra.mxu0 0
    %5126 = vmatprep.subr.bf16.mxu0 0
    %5127 = vmatpush1.bf16.msra.mxu0 0
    %5128 = vmatprep.subr.bf16.mxu0 0
    %5129 = vmatpush1.bf16.msra.mxu0 0
    %5130 = vmatprep.subr.bf16.mxu0 0
    %5131 = vmatpush1.bf16.msra.mxu0 0
    %5132 = vmatprep.subr.bf16.mxu0 0
    %5133 = vmatpush1.bf16.msra.mxu0 0
    %5134 = vmatprep.subr.bf16.mxu0 0
    %5135 = vmatpush1.bf16.msra.mxu0 0
    %5136 = vmatprep.subr.bf16.mxu0 0
    %5137 = vmatpush1.bf16.msra.mxu0 0
    %5138 = vmatprep.subr.bf16.mxu0 0
    %5139 = vmatpush1.bf16.msra.mxu0 0
    %5140 = vmatprep.subr.bf16.mxu0 0
    %5141 = vmatpush1.bf16.msra.mxu0 0
    %5142 = vmatprep.subr.bf16.mxu0 0
    %5143 = vmatpush1.bf16.msra.mxu0 0
    %5144 = vmatprep.subr.bf16.mxu0 0
    %5145 = vmatpush1.bf16.msra.mxu0 0
    %5146 = vmatprep.subr.bf16.mxu0 0
    %5147 = vmatpush1.bf16.msra.mxu0 0
    %5148 = vmatprep.mubr.bf16.mxu0 0
    %5149 = vmatmul.mubr.bf16.gmra.mrb[0].mxu0 %v5114
    %v5150 = vpop.f32.mrb[0].mxu0
    %v5151 = vadd.f32 0.0, %v5150
    %v5152 = vpop.f32.mrb[0].mxu0
    %v5153 = vpop.f32.mrb[0].mxu0
    %v5154 = vpop.f32.mrb[0].mxu0
    %5155 = vdwg.mxu0
    %5156 = vst [vmem:[#allocation2] sm:$0x3] %v5151
    // Predicated region
    $region66: #{tpu_custom_call.1} parent=1 // pred_check
      _
    $region67: #{tpu_custom_call.1} parent=1 // pred_check_branch
      %5158 = sbr.rel (0) target = $region69
    $region68: #{tpu_custom_call.1} parent=1 // pred_region
      %s5160 = ssub.s32 32, 32
      %5161 = vsyncadd [#allocation3], %s5160
      %s5163 = sshll.u32 [#allocation2], 4
      %s5164 = int_to_ptr.vmem [resolvable:$true] %s5163
      %5166 = dma.vmem_to_hbm [thread:$0]  %s5164, 32, %s16, [#allocation3]
    $region69: #{tpu_custom_call.1} parent=1 // pred_fallthru
      _
    // Predicated region
    $region70: #{tpu_custom_call.1} parent=1 // pred_check
      _
    $region71: #{tpu_custom_call.1} parent=1 // pred_check_branch
      %5168 = sbr.rel (0) target = $region73
    $region72: #{tpu_custom_call.1} parent=1 // pred_region
      %5169 = dma.done [#allocation3], 32
    $region73: #{tpu_custom_call.1} parent=1 // pred_fallthru
      _
    %5170 = vsyncpa [#allocation3], 1

</llo_original>
